<compile_context>
chip_gen: v5e
topology: v5e:2x2
jax: 0.10.0
libtpu: 0.0.40
codegen_flags: <defaults>
</compile_context>

<pallas_src>
import math
import functools

import jax
import jax.numpy as jnp
from jax.experimental import pallas as pl
from jax.experimental.pallas import tpu as pltpu


# ----------------------------------------------------------------------------
# Kernels
# ----------------------------------------------------------------------------
def _linear_kernel(x_ref, w_ref, b_ref, o_ref):
    # out = x @ W + b   (bf16 MXU inputs, f32 accumulation / epilogue)
    o_ref[...] = (jnp.dot(x_ref[...], w_ref[...],
                          preferred_element_type=jnp.float32)
                  + b_ref[...]).astype(o_ref.dtype)


def _ffn_kernel(x_ref, w1_ref, b1_ref, w2_ref, b2_ref, g_ref, beta_ref, o_ref):
    # LayerNorm(x + (ReLU(x@W1+b1) @ W2 + b2)); pf-dim intermediate stays on-chip.
    x = x_ref[...]                                              # (tm, D) bf16
    h = jnp.dot(x, w1_ref[...], preferred_element_type=jnp.float32) + b1_ref[...]
    h = jnp.maximum(h, 0.0)
    y = jnp.dot(h.astype(jnp.bfloat16), w2_ref[...],
                preferred_element_type=jnp.float32) + b2_ref[...]
    z = x.astype(jnp.float32) + y
    mean = jnp.mean(z, axis=-1, keepdims=True)
    var = jnp.mean((z - mean) ** 2, axis=-1, keepdims=True)
    out = (z - mean) * jax.lax.rsqrt(var + 1e-5) * g_ref[...] + beta_ref[...]
    o_ref[...] = out.astype(o_ref.dtype)


def _attn_core(q, k, v, valid, wo, bo, res_f32, g, b, n_heads, exact_softmax):
    """All-heads attention + output projection + residual + LayerNorm.

    q: (Lq, D) f32 (already scaled by 1/sqrt(Dh) via the Q projection weights)
    k, v: (Lk, D) f32;  valid: bool, broadcastable to (Lq, Lk) (hoisted out of the
    head loop);  wo: (D, D) bf16;  bo/g/b: (1, D) f32;  res_f32: (Lq, D) f32.
    Returns (out (Lq, D) f32, [per-head attn (Lq, Lk) f32]).
    """
    Lq, D = res_f32.shape
    dh = D // n_heads
    neg = jnp.float32(-1e10)
    ctx_parts = []
    attns = []
    for h in range(n_heads):
        lo, hi = h * dh, (h + 1) * dh
        q_h = q[:, lo:hi].astype(jnp.bfloat16)
        k_h = k[:, lo:hi].astype(jnp.bfloat16)
        v_h = v[:, lo:hi].astype(jnp.bfloat16)
        # energy = q_h @ k_h^T (contract head dim, no explicit transpose)
        e = jax.lax.dot_general(q_h, k_h, (((1,), (1,)), ((), ())),
                                preferred_element_type=jnp.float32)
        e = jnp.where(valid, e, neg)
        m = jnp.max(e, axis=-1, keepdims=True)
        p = jnp.exp(e - m)
        s = jnp.sum(p, axis=-1, keepdims=True)
        if exact_softmax:
            a = p / s
        else:
            a = p * pl.reciprocal(s, approx=True)
        attns.append(a)
        ctx_parts.append(jnp.dot(a.astype(jnp.bfloat16), v_h,
                                 preferred_element_type=jnp.float32))
    # Single full-K output projection instead of H short-contraction matmuls.
    ctx = jnp.concatenate(ctx_parts, axis=-1).astype(jnp.bfloat16)   # (Lq, D)
    out = jnp.dot(ctx, wo, preferred_element_type=jnp.float32) + bo
    z = res_f32 + out
    mean = jnp.mean(z, axis=-1, keepdims=True)
    var = jnp.mean((z - mean) ** 2, axis=-1, keepdims=True)
    y = (z - mean) * jax.lax.rsqrt(var + 1e-5) * g + b
    return y, attns


def _self_attn_kernel(x_ref, pad_ref, wqkv_ref, bqkv_ref, wo_ref, bo_ref,
                      g_ref, b_ref, o_ref, *, n_heads, hid_dim):
    D = hid_dim
    x = x_ref[0]                                                 # (Lq, D) bf16
    Lq = x.shape[0]
    # Fused QKV projection (Q columns carry the 1/sqrt(Dh) scale).
    qkv = jnp.dot(x, wqkv_ref[...], preferred_element_type=jnp.float32) + bqkv_ref[...]
    q = qkv[:, 0:D]
    k = qkv[:, D:2 * D]
    v = qkv[:, 2 * D:3 * D]
    # Causal mask generated in-kernel; target padding mask broadcast over query rows.
    row = jax.lax.broadcasted_iota(jnp.int32, (Lq, Lq), 0)
    col = jax.lax.broadcasted_iota(jnp.int32, (Lq, Lq), 1)
    valid = jnp.logical_and(row >= col, pad_ref[0] > 0.0)        # (Lq, Lq) bool
    y, _ = _attn_core(q, k, v, valid, wo_ref[...], bo_ref[...],
                      x.astype(jnp.float32), g_ref[...], b_ref[...],
                      n_heads, exact_softmax=False)
    o_ref[0] = y.astype(o_ref.dtype)


def _cross_attn_body(x_ref, enc_ref, pad_ref, wq_ref, bq_ref, wkv_ref, bkv_ref,
                     wo_ref, bo_ref, g_ref, b_ref, n_heads, hid_dim,
                     exact_softmax):
    D = hid_dim
    x = x_ref[0]                                                 # (Lq, D) bf16
    enc = enc_ref[0]                                             # (Ls, D) bf16
    # Fused Q (pre-scaled) and KV projections.
    q = jnp.dot(x, wq_ref[...], preferred_element_type=jnp.float32) + bq_ref[...]
    kv = jnp.dot(enc, wkv_ref[...], preferred_element_type=jnp.float32) + bkv_ref[...]
    k = kv[:, 0:D]
    v = kv[:, D:2 * D]
    valid = pad_ref[0] > 0.0                                     # (1, Ls) bool
    return _attn_core(q, k, v, valid, wo_ref[...], bo_ref[...],
                      x.astype(jnp.float32), g_ref[...], b_ref[...],
                      n_heads, exact_softmax)


def _cross_attn_kernel(x_ref, enc_ref, pad_ref, wq_ref, bq_ref, wkv_ref,
                       bkv_ref, wo_ref, bo_ref, g_ref, b_ref, o_ref, *,
                       n_heads, hid_dim):
    y, _ = _cross_attn_body(x_ref, enc_ref, pad_ref, wq_ref, bq_ref, wkv_ref,
                            bkv_ref, wo_ref, bo_ref, g_ref, b_ref,
                            n_heads, hid_dim, exact_softmax=False)
    o_ref[0] = y.astype(o_ref.dtype)


def _cross_attn_kernel_with_attn(x_ref, enc_ref, pad_ref, wq_ref, bq_ref,
                                 wkv_ref, bkv_ref, wo_ref, bo_ref, g_ref,
                                 b_ref, o_ref, a_ref, *, n_heads, hid_dim):
    # Exact softmax for the returned attention weights.
    y, attns = _cross_attn_body(x_ref, enc_ref, pad_ref, wq_ref, bq_ref,
                                wkv_ref, bkv_ref, wo_ref, bo_ref, g_ref,
                                b_ref, n_heads, hid_dim, exact_softmax=True)
    o_ref[0] = y.astype(o_ref.dtype)
    for h in range(n_heads):
        a_ref[0, h] = attns[h]


# ----------------------------------------------------------------------------
# Pallas wrappers
# ----------------------------------------------------------------------------
def pallas_linear(x2d, w, b, *, tm=512, tn=1024, out_dtype=jnp.float32):
    """Tiled y = x @ W + b. bf16 inputs/weights, f32 accumulation."""
    M, K = x2d.shape
    N = w.shape[1]
    tm = M if M <= tm else tm
    tn = N if N <= tn else tn
    grid = (pl.cdiv(M, tm), pl.cdiv(N, tn))
    return pl.pallas_call(
        _linear_kernel,
        grid=grid,
        out_shape=jax.ShapeDtypeStruct((M, N), out_dtype),
        in_specs=[
            pl.BlockSpec((tm, K), lambda i, j: (i, 0)),
            pl.BlockSpec((K, tn), lambda i, j: (0, j)),
            pl.BlockSpec((1, tn), lambda i, j: (0, j)),
        ],
        out_specs=pl.BlockSpec((tm, tn), lambda i, j: (i, j)),
        compiler_params=pltpu.CompilerParams(
            dimension_semantics=("parallel", "parallel")),
    )(x2d, w, b)


def pallas_ffn(x2d, w1, b1, w2, b2, gamma, beta, *, tm=512):
    M, D = x2d.shape
    P = w1.shape[1]
    tm = M if M <= tm else tm
    return pl.pallas_call(
        _ffn_kernel,
        grid=(pl.cdiv(M, tm),),
        out_shape=jax.ShapeDtypeStruct((M, D), jnp.bfloat16),
        in_specs=[
            pl.BlockSpec((tm, D), lambda i: (i, 0)),
            pl.BlockSpec((D, P), lambda i: (0, 0)),
            pl.BlockSpec((1, P), lambda i: (0, 0)),
            pl.BlockSpec((P, D), lambda i: (0, 0)),
            pl.BlockSpec((1, D), lambda i: (0, 0)),
            pl.BlockSpec((1, D), lambda i: (0, 0)),
            pl.BlockSpec((1, D), lambda i: (0, 0)),
        ],
        out_specs=pl.BlockSpec((tm, D), lambda i: (i, 0)),
        compiler_params=pltpu.CompilerParams(dimension_semantics=("parallel",)),
    )(x2d, w1, b1, w2, b2, gamma, beta)


def pallas_self_attention(x, trg_pad, wqkv, bqkv, wo, bo, gamma, beta, n_heads):
    B, Lq, D = x.shape
    kernel = functools.partial(_self_attn_kernel, n_heads=n_heads, hid_dim=D)
    return pl.pallas_call(
        kernel,
        grid=(B,),
        out_shape=jax.ShapeDtypeStruct((B, Lq, D), jnp.bfloat16),
        in_specs=[
            pl.BlockSpec((1, Lq, D), lambda bi: (bi, 0, 0)),
            pl.BlockSpec((1, 1, Lq), lambda bi: (bi, 0, 0)),
            pl.BlockSpec((D, 3 * D), lambda bi: (0, 0)),
            pl.BlockSpec((1, 3 * D), lambda bi: (0, 0)),
            pl.BlockSpec((D, D), lambda bi: (0, 0)),
            pl.BlockSpec((1, D), lambda bi: (0, 0)),
            pl.BlockSpec((1, D), lambda bi: (0, 0)),
            pl.BlockSpec((1, D), lambda bi: (0, 0)),
        ],
        out_specs=pl.BlockSpec((1, Lq, D), lambda bi: (bi, 0, 0)),
        compiler_params=pltpu.CompilerParams(dimension_semantics=("parallel",)),
    )(x, trg_pad, wqkv, bqkv, wo, bo, gamma, beta)


def pallas_cross_attention(x, enc, src_pad, wq, bq, wkv, bkv, wo, bo, gamma,
                           beta, n_heads, return_attn):
    B, Lq, D = x.shape
    Ls = enc.shape[1]
    in_specs = [
        pl.BlockSpec((1, Lq, D), lambda bi: (bi, 0, 0)),
        pl.BlockSpec((1, Ls, D), lambda bi: (bi, 0, 0)),
        pl.BlockSpec((1, 1, Ls), lambda bi: (bi, 0, 0)),
        pl.BlockSpec((D, D), lambda bi: (0, 0)),
        pl.BlockSpec((1, D), lambda bi: (0, 0)),
        pl.BlockSpec((D, 2 * D), lambda bi: (0, 0)),
        pl.BlockSpec((1, 2 * D), lambda bi: (0, 0)),
        pl.BlockSpec((D, D), lambda bi: (0, 0)),
        pl.BlockSpec((1, D), lambda bi: (0, 0)),
        pl.BlockSpec((1, D), lambda bi: (0, 0)),
        pl.BlockSpec((1, D), lambda bi: (0, 0)),
    ]
    cp = pltpu.CompilerParams(dimension_semantics=("parallel",))
    args = (x, enc, src_pad, wq, bq, wkv, bkv, wo, bo, gamma, beta)
    if return_attn:
        kernel = functools.partial(_cross_attn_kernel_with_attn,
                                   n_heads=n_heads, hid_dim=D)
        out, attn = pl.pallas_call(
            kernel,
            grid=(B,),
            out_shape=(jax.ShapeDtypeStruct((B, Lq, D), jnp.bfloat16),
                       jax.ShapeDtypeStruct((B, n_heads, Lq, Ls), jnp.float32)),
            in_specs=in_specs,
            out_specs=(pl.BlockSpec((1, Lq, D), lambda bi: (bi, 0, 0)),
                       pl.BlockSpec((1, n_heads, Lq, Ls),
                                    lambda bi: (bi, 0, 0, 0))),
            compiler_params=cp,
        )(*args)
        return out, attn
    kernel = functools.partial(_cross_attn_kernel, n_heads=n_heads, hid_dim=D)
    out = pl.pallas_call(
        kernel,
        grid=(B,),
        out_shape=jax.ShapeDtypeStruct((B, Lq, D), jnp.bfloat16),
        in_specs=in_specs,
        out_specs=pl.BlockSpec((1, Lq, D), lambda bi: (bi, 0, 0)),
        compiler_params=cp,
    )(*args)
    return out, None


# ----------------------------------------------------------------------------
# Decoder forward (JAX glue around Pallas kernels)
# ----------------------------------------------------------------------------
def decoder_forward(params, trg_tokens, enc_src, trg_pad_mask, src_pad_mask,
                    n_heads):
    """trg_pad_mask: (B, Lt) 1.0 for valid target tokens; src_pad_mask: (B, Ls).

    The standard masks (trg_mask = pad & causal, src_mask = pad) are reconstructed
    in-kernel, so no dense (B, Lq, Lk) mask is ever DMA'd.
    """
    B, Lt = trg_tokens.shape
    D = params['tok_emb'].shape[1]
    Ls = enc_src.shape[1]
    scale_emb = math.sqrt(D)

    # Embedding lookup is glue (gather); dropout == identity (eval mode).
    pos = jnp.arange(Lt)
    x = params['tok_emb'][trg_tokens] * scale_emb + params['pos_emb'][pos][None]
    x = x.astype(jnp.bfloat16)
    enc = enc_src.astype(jnp.bfloat16)
    trg_pad = trg_pad_mask.reshape(B, 1, Lt).astype(jnp.float32)
    src_pad = src_pad_mask.reshape(B, 1, Ls).astype(jnp.float32)

    n_layers = len(params['layers'])
    attention = None
    for li, p in enumerate(params['layers']):
        last = (li == n_layers - 1)

        # ---- self attention (fused QKV, Q pre-scaled) + residual + LN -------
        x = pallas_self_attention(x, trg_pad, p['sa_wqkv'], p['sa_bqkv'],
                                  p['sa_wo'], p['sa_bo'],
                                  p['ln_sa_g'], p['ln_sa_b'], n_heads)

        # ---- encoder attention (fused Q + KV projections) + residual + LN ---
        x, attn = pallas_cross_attention(x, enc, src_pad, p['ea_wq'],
                                         p['ea_bq'], p['ea_wkv'], p['ea_bkv'],
                                         p['ea_wo'], p['ea_bo'],
                                         p['ln_ea_g'], p['ln_ea_b'], n_heads,
                                         return_attn=last)
        if last:
            attention = attn

        # ---- fused position-wise FF + residual + LN -------------------------
        x = pallas_ffn(x.reshape(-1, D), p['ff_w1'], p['ff_b1'], p['ff_w2'],
                       p['ff_b2'], p['ln_ff_g'], p['ln_ff_b']).reshape(B, Lt, D)

    out = pallas_linear(x.reshape(-1, D), params['fc_out_w'],
                        params['fc_out_b'],
                        out_dtype=jnp.float32).reshape(B, Lt, -1)
    return out, attention


# ----------------------------------------------------------------------------
# Deterministic parameter init (bf16 weights, fused QKV / KV, Q pre-scaled)
# ----------------------------------------------------------------------------
def init_params(key, output_dim, hid_dim, n_layers, n_heads, pf_dim, max_length):
    dh = hid_dim // n_heads
    inv_scale = 1.0 / math.sqrt(dh)
    keys = iter(jax.random.split(key, 4 + n_layers * 16))

    def lin(in_d, out_d):
        w = jax.random.normal(next(keys), (in_d, out_d), jnp.float32) * 0.02
        b = jnp.zeros((1, out_d), jnp.float32)
        return w, b

    bf = lambda w: w.astype(jnp.bfloat16)

    params = {
        'tok_emb': jax.random.normal(next(keys), (output_dim, hid_dim),
                                     jnp.float32) * 0.02,
        'pos_emb': jax.random.normal(next(keys), (max_length, hid_dim),
                                     jnp.float32) * 0.02,
        'layers': [],
    }
    for _ in range(n_layers):
        layer = {}
        # self-attention: fused QKV (Q columns carry the 1/sqrt(Dh) scale)
        wq, bq = lin(hid_dim, hid_dim)
        wk, bk = lin(hid_dim, hid_dim)
        wv, bv = lin(hid_dim, hid_dim)
        layer['sa_wqkv'] = bf(jnp.concatenate([wq * inv_scale, wk, wv], axis=1))
        layer['sa_bqkv'] = jnp.concatenate([bq * inv_scale, bk, bv], axis=1)
        wo, bo = lin(hid_dim, hid_dim)
        layer['sa_wo'], layer['sa_bo'] = bf(wo), bo
        # encoder-attention: pre-scaled Q, fused KV
        wq, bq = lin(hid_dim, hid_dim)
        layer['ea_wq'], layer['ea_bq'] = bf(wq * inv_scale), bq * inv_scale
        wk, bk = lin(hid_dim, hid_dim)
        wv, bv = lin(hid_dim, hid_dim)
        layer['ea_wkv'] = bf(jnp.concatenate([wk, wv], axis=1))
        layer['ea_bkv'] = jnp.concatenate([bk, bv], axis=1)
        wo, bo = lin(hid_dim, hid_dim)
        layer['ea_wo'], layer['ea_bo'] = bf(wo), bo
        # feed-forward
        w1, b1 = lin(hid_dim, pf_dim)
        w2, b2 = lin(pf_dim, hid_dim)
        layer['ff_w1'], layer['ff_b1'] = bf(w1), b1
        layer['ff_w2'], layer['ff_b2'] = bf(w2), b2
        for ln in ('ln_sa', 'ln_ea', 'ln_ff'):
            layer[f'{ln}_g'] = jnp.ones((1, hid_dim), jnp.float32)
            layer[f'{ln}_b'] = jnp.zeros((1, hid_dim), jnp.float32)
        params['layers'].append(layer)
    w, b = lin(hid_dim, output_dim)
    params['fc_out_w'], params['fc_out_b'] = bf(w), b
    return params


# ----------------------------------------------------------------------------
# Demo
# ----------------------------------------------------------------------------
if __name__ == "__main__":
    B, Lt, Ls = 2, 8, 8
    output_dim, hid_dim, n_layers, n_heads, pf_dim = 50, 32, 2, 4, 64
    max_length = 100

    root = jax.random.PRNGKey(0)
    k_params, k_trg, k_enc = jax.random.split(root, 3)

    params = init_params(k_params, output_dim, hid_dim, n_layers, n_heads,
                         pf_dim, max_length)

    trg_tokens = jax.random.randint(k_trg, (B, Lt), 0, output_dim, dtype=jnp.int32)
    enc_src = jax.random.normal(k_enc, (B, Ls, hid_dim), jnp.float32)

    # Padding masks only; the causal part of trg_mask is generated in-kernel.
    trg_pad_mask = jnp.ones((B, Lt), jnp.float32)
    src_pad_mask = jnp.ones((B, Ls), jnp.float32)

    fwd = jax.jit(functools.partial(decoder_forward, n_heads=n_heads))
    out, attention = fwd(params, trg_tokens, enc_src, trg_pad_mask, src_pad_mask)
    jax.block_until_ready((out, attention))

    assert out.shape == (B, Lt, output_dim)
    assert out.dtype == jnp.float32
    assert attention.shape == (B, n_heads, Lt, Ls)
    print("KERNEL_OK")
</pallas_src>

<mosaic_0001>
module attributes {stable_mosaic.version = 11 : i64} {
  func.func @_self_attn_kernel(%arg0: i32, %arg1: memref<1x8x32xbf16, #tpu.memory_space<vmem>>, %arg2: memref<1x1x8xf32, #tpu.memory_space<vmem>>, %arg3: memref<32x96xbf16, #tpu.memory_space<vmem>>, %arg4: memref<1x96xf32, #tpu.memory_space<vmem>>, %arg5: memref<32x32xbf16, #tpu.memory_space<vmem>>, %arg6: memref<1x32xf32, #tpu.memory_space<vmem>>, %arg7: memref<1x32xf32, #tpu.memory_space<vmem>>, %arg8: memref<1x32xf32, #tpu.memory_space<vmem>>, %arg9: memref<1x8x32xbf16, #tpu.memory_space<vmem>>) attributes {dimension_semantics = [#tpu.dimension_semantics<parallel>], iteration_bounds = array<i64: 2>, scalar_prefetch = 0 : i64, scratch_operands = 0 : i64, tpu.core_type = #tpu.core_type<tc>, window_params = [{transform_indices = @transform_0, window_bounds = array<i64: 1, 8, 32>}, {transform_indices = @transform_1, window_bounds = array<i64: 1, 1, 8>}, {pipeline_mode = #tpu.pipeline_mode<synchronous>, transform_indices = @transform_2, window_bounds = array<i64: 32, 96>}, {pipeline_mode = #tpu.pipeline_mode<synchronous>, transform_indices = @transform_3, window_bounds = array<i64: 1, 96>}, {pipeline_mode = #tpu.pipeline_mode<synchronous>, transform_indices = @transform_4, window_bounds = array<i64: 32, 32>}, {pipeline_mode = #tpu.pipeline_mode<synchronous>, transform_indices = @transform_5, window_bounds = array<i64: 1, 32>}, {pipeline_mode = #tpu.pipeline_mode<synchronous>, transform_indices = @transform_6, window_bounds = array<i64: 1, 32>}, {pipeline_mode = #tpu.pipeline_mode<synchronous>, transform_indices = @transform_7, window_bounds = array<i64: 1, 32>}, {transform_indices = @transform_8, window_bounds = array<i64: 1, 8, 32>}]} {
    %c0 = arith.constant 0 : index
    %c0_0 = arith.constant 0 : index
    %c0_1 = arith.constant 0 : index
    %0 = vector.load %arg1[%c0, %c0_0, %c0_1] : memref<1x8x32xbf16, #tpu.memory_space<vmem>>, vector<1x8x32xbf16>
    %1 = vector.shape_cast %0 : vector<1x8x32xbf16> to vector<8x32xbf16>
    %c0_2 = arith.constant 0 : index
    %c0_3 = arith.constant 0 : index
    %2 = vector.load %arg3[%c0_2, %c0_3] : memref<32x96xbf16, #tpu.memory_space<vmem>>, vector<32x96xbf16>
    %cst = arith.constant dense<0.000000e+00> : vector<8x96xf32>
    %3 = tpu.matmul %1, %2, %cst {dimension_numbers = #tpu.dot_dimension_numbers<[1], [0], [0], [1], [0, 0, 1, 1], [], []>} : vector<8x32xbf16>, vector<32x96xbf16>, vector<8x96xf32> -> vector<8x96xf32>
    %c0_4 = arith.constant 0 : index
    %c0_5 = arith.constant 0 : index
    %4 = vector.load %arg4[%c0_4, %c0_5] : memref<1x96xf32, #tpu.memory_space<vmem>>, vector<1x96xf32>
    %5 = vector.broadcast %4 : vector<1x96xf32> to vector<8x96xf32>
    %6 = arith.addf %3, %5 : vector<8x96xf32>
    %7 = vector.extract_strided_slice %6 {offsets = [0, 0], sizes = [8, 32], strides = [1, 1]} : vector<8x96xf32> to vector<8x32xf32>
    %8 = vector.extract_strided_slice %6 {offsets = [0, 32], sizes = [8, 32], strides = [1, 1]} : vector<8x96xf32> to vector<8x32xf32>
    %9 = vector.extract_strided_slice %6 {offsets = [0, 64], sizes = [8, 32], strides = [1, 1]} : vector<8x96xf32> to vector<8x32xf32>
    %10 = tpu.iota {dimensions = array<i32: 0>} : vector<8x8xi32>
    %11 = tpu.iota {dimensions = array<i32: 1>} : vector<8x8xi32>
    %12 = arith.cmpi sge, %10, %11 : vector<8x8xi32>
    %c0_6 = arith.constant 0 : index
    %c0_7 = arith.constant 0 : index
    %c0_8 = arith.constant 0 : index
    %13 = vector.load %arg2[%c0_6, %c0_7, %c0_8] : memref<1x1x8xf32, #tpu.memory_space<vmem>>, vector<1x1x8xf32>
    %14 = vector.shape_cast %13 : vector<1x1x8xf32> to vector<1x8xf32>
    %cst_9 = arith.constant 0.000000e+00 : f32
    %15 = vector.broadcast %cst_9 : f32 to vector<1x8xf32>
    %16 = arith.cmpf ogt, %14, %15 : vector<1x8xf32>
    %17 = vector.broadcast %16 : vector<1x8xi1> to vector<8x8xi1>
    %18 = arith.andi %12, %17 : vector<8x8xi1>
    %c0_10 = arith.constant 0 : index
    %c0_11 = arith.constant 0 : index
    %19 = vector.load %arg5[%c0_10, %c0_11] : memref<32x32xbf16, #tpu.memory_space<vmem>>, vector<32x32xbf16>
    %c0_12 = arith.constant 0 : index
    %c0_13 = arith.constant 0 : index
    %20 = vector.load %arg6[%c0_12, %c0_13] : memref<1x32xf32, #tpu.memory_space<vmem>>, vector<1x32xf32>
    %21 = arith.extf %1 : vector<8x32xbf16> to vector<8x32xf32>
    %c0_14 = arith.constant 0 : index
    %c0_15 = arith.constant 0 : index
    %22 = vector.load %arg7[%c0_14, %c0_15] : memref<1x32xf32, #tpu.memory_space<vmem>>, vector<1x32xf32>
    %c0_16 = arith.constant 0 : index
    %c0_17 = arith.constant 0 : index
    %23 = vector.load %arg8[%c0_16, %c0_17] : memref<1x32xf32, #tpu.memory_space<vmem>>, vector<1x32xf32>
    %24 = vector.extract_strided_slice %7 {offsets = [0, 0], sizes = [8, 8], strides = [1, 1]} : vector<8x32xf32> to vector<8x8xf32>
    %25 = arith.truncf %24 : vector<8x8xf32> to vector<8x8xbf16>
    %26 = vector.extract_strided_slice %8 {offsets = [0, 0], sizes = [8, 8], strides = [1, 1]} : vector<8x32xf32> to vector<8x8xf32>
    %27 = arith.truncf %26 : vector<8x8xf32> to vector<8x8xbf16>
    %28 = vector.extract_strided_slice %9 {offsets = [0, 0], sizes = [8, 8], strides = [1, 1]} : vector<8x32xf32> to vector<8x8xf32>
    %29 = arith.truncf %28 : vector<8x8xf32> to vector<8x8xbf16>
    %cst_18 = arith.constant dense<0.000000e+00> : vector<8x8xf32>
    %30 = tpu.matmul %25, %27, %cst_18 {dimension_numbers = #tpu.dot_dimension_numbers<[1], [1], [0], [0], [0, 0, 1, 0], [], []>} : vector<8x8xbf16>, vector<8x8xbf16>, vector<8x8xf32> -> vector<8x8xf32>
    %cst_19 = arith.constant -1.000000e+10 : f32
    %31 = vector.broadcast %cst_19 : f32 to vector<8x8xf32>
    %32 = arith.select %18, %30, %31 : vector<8x8xi1>, vector<8x8xf32>
    %cst_20 = arith.constant dense<0xFF800000> : vector<8xf32>
    %33 = vector.multi_reduction <maximumf>, %32, %cst_20 [1] : vector<8x8xf32> to vector<8xf32>
    %34 = vector.shape_cast %33 : vector<8xf32> to vector<8x1xf32>
    %35 = vector.broadcast %34 : vector<8x1xf32> to vector<8x8xf32>
    %36 = arith.subf %32, %35 : vector<8x8xf32>
    %37 = math.exp %36 : vector<8x8xf32>
    %cst_21 = arith.constant dense<0.000000e+00> : vector<8xf32>
    %38 = vector.multi_reduction <add>, %37, %cst_21 [1] : vector<8x8xf32> to vector<8xf32>
    %39 = vector.shape_cast %38 : vector<8xf32> to vector<8x1xf32>
    %40 = tpu.reciprocal %39 {approx = true} : vector<8x1xf32> -> vector<8x1xf32>
    %41 = vector.broadcast %40 : vector<8x1xf32> to vector<8x8xf32>
    %42 = arith.mulf %37, %41 : vector<8x8xf32>
    %43 = arith.truncf %42 : vector<8x8xf32> to vector<8x8xbf16>
    %cst_22 = arith.constant dense<0.000000e+00> : vector<8x8xf32>
    %44 = tpu.matmul %43, %29, %cst_22 {dimension_numbers = #tpu.dot_dimension_numbers<[1], [0], [0], [1], [0, 0, 1, 1], [], []>} : vector<8x8xbf16>, vector<8x8xbf16>, vector<8x8xf32> -> vector<8x8xf32>
    %45 = vector.extract_strided_slice %7 {offsets = [0, 8], sizes = [8, 8], strides = [1, 1]} : vector<8x32xf32> to vector<8x8xf32>
    %46 = arith.truncf %45 : vector<8x8xf32> to vector<8x8xbf16>
    %47 = vector.extract_strided_slice %8 {offsets = [0, 8], sizes = [8, 8], strides = [1, 1]} : vector<8x32xf32> to vector<8x8xf32>
    %48 = arith.truncf %47 : vector<8x8xf32> to vector<8x8xbf16>
    %49 = vector.extract_strided_slice %9 {offsets = [0, 8], sizes = [8, 8], strides = [1, 1]} : vector<8x32xf32> to vector<8x8xf32>
    %50 = arith.truncf %49 : vector<8x8xf32> to vector<8x8xbf16>
    %cst_23 = arith.constant dense<0.000000e+00> : vector<8x8xf32>
    %51 = tpu.matmul %46, %48, %cst_23 {dimension_numbers = #tpu.dot_dimension_numbers<[1], [1], [0], [0], [0, 0, 1, 0], [], []>} : vector<8x8xbf16>, vector<8x8xbf16>, vector<8x8xf32> -> vector<8x8xf32>
    %cst_24 = arith.constant -1.000000e+10 : f32
    %52 = vector.broadcast %cst_24 : f32 to vector<8x8xf32>
    %53 = arith.select %18, %51, %52 : vector<8x8xi1>, vector<8x8xf32>
    %cst_25 = arith.constant dense<0xFF800000> : vector<8xf32>
    %54 = vector.multi_reduction <maximumf>, %53, %cst_25 [1] : vector<8x8xf32> to vector<8xf32>
    %55 = vector.shape_cast %54 : vector<8xf32> to vector<8x1xf32>
    %56 = vector.broadcast %55 : vector<8x1xf32> to vector<8x8xf32>
    %57 = arith.subf %53, %56 : vector<8x8xf32>
    %58 = math.exp %57 : vector<8x8xf32>
    %cst_26 = arith.constant dense<0.000000e+00> : vector<8xf32>
    %59 = vector.multi_reduction <add>, %58, %cst_26 [1] : vector<8x8xf32> to vector<8xf32>
    %60 = vector.shape_cast %59 : vector<8xf32> to vector<8x1xf32>
    %61 = tpu.reciprocal %60 {approx = true} : vector<8x1xf32> -> vector<8x1xf32>
    %62 = vector.broadcast %61 : vector<8x1xf32> to vector<8x8xf32>
    %63 = arith.mulf %58, %62 : vector<8x8xf32>
    %64 = arith.truncf %63 : vector<8x8xf32> to vector<8x8xbf16>
    %cst_27 = arith.constant dense<0.000000e+00> : vector<8x8xf32>
    %65 = tpu.matmul %64, %50, %cst_27 {dimension_numbers = #tpu.dot_dimension_numbers<[1], [0], [0], [1], [0, 0, 1, 1], [], []>} : vector<8x8xbf16>, vector<8x8xbf16>, vector<8x8xf32> -> vector<8x8xf32>
    %66 = vector.extract_strided_slice %7 {offsets = [0, 16], sizes = [8, 8], strides = [1, 1]} : vector<8x32xf32> to vector<8x8xf32>
    %67 = arith.truncf %66 : vector<8x8xf32> to vector<8x8xbf16>
    %68 = vector.extract_strided_slice %8 {offsets = [0, 16], sizes = [8, 8], strides = [1, 1]} : vector<8x32xf32> to vector<8x8xf32>
    %69 = arith.truncf %68 : vector<8x8xf32> to vector<8x8xbf16>
    %70 = vector.extract_strided_slice %9 {offsets = [0, 16], sizes = [8, 8], strides = [1, 1]} : vector<8x32xf32> to vector<8x8xf32>
    %71 = arith.truncf %70 : vector<8x8xf32> to vector<8x8xbf16>
    %cst_28 = arith.constant dense<0.000000e+00> : vector<8x8xf32>
    %72 = tpu.matmul %67, %69, %cst_28 {dimension_numbers = #tpu.dot_dimension_numbers<[1], [1], [0], [0], [0, 0, 1, 0], [], []>} : vector<8x8xbf16>, vector<8x8xbf16>, vector<8x8xf32> -> vector<8x8xf32>
    %cst_29 = arith.constant -1.000000e+10 : f32
    %73 = vector.broadcast %cst_29 : f32 to vector<8x8xf32>
    %74 = arith.select %18, %72, %73 : vector<8x8xi1>, vector<8x8xf32>
    %cst_30 = arith.constant dense<0xFF800000> : vector<8xf32>
    %75 = vector.multi_reduction <maximumf>, %74, %cst_30 [1] : vector<8x8xf32> to vector<8xf32>
    %76 = vector.shape_cast %75 : vector<8xf32> to vector<8x1xf32>
    %77 = vector.broadcast %76 : vector<8x1xf32> to vector<8x8xf32>
    %78 = arith.subf %74, %77 : vector<8x8xf32>
    %79 = math.exp %78 : vector<8x8xf32>
    %cst_31 = arith.constant dense<0.000000e+00> : vector<8xf32>
    %80 = vector.multi_reduction <add>, %79, %cst_31 [1] : vector<8x8xf32> to vector<8xf32>
    %81 = vector.shape_cast %80 : vector<8xf32> to vector<8x1xf32>
    %82 = tpu.reciprocal %81 {approx = true} : vector<8x1xf32> -> vector<8x1xf32>
    %83 = vector.broadcast %82 : vector<8x1xf32> to vector<8x8xf32>
    %84 = arith.mulf %79, %83 : vector<8x8xf32>
    %85 = arith.truncf %84 : vector<8x8xf32> to vector<8x8xbf16>
    %cst_32 = arith.constant dense<0.000000e+00> : vector<8x8xf32>
    %86 = tpu.matmul %85, %71, %cst_32 {dimension_numbers = #tpu.dot_dimension_numbers<[1], [0], [0], [1], [0, 0, 1, 1], [], []>} : vector<8x8xbf16>, vector<8x8xbf16>, vector<8x8xf32> -> vector<8x8xf32>
    %87 = vector.extract_strided_slice %7 {offsets = [0, 24], sizes = [8, 8], strides = [1, 1]} : vector<8x32xf32> to vector<8x8xf32>
    %88 = arith.truncf %87 : vector<8x8xf32> to vector<8x8xbf16>
    %89 = vector.extract_strided_slice %8 {offsets = [0, 24], sizes = [8, 8], strides = [1, 1]} : vector<8x32xf32> to vector<8x8xf32>
    %90 = arith.truncf %89 : vector<8x8xf32> to vector<8x8xbf16>
    %91 = vector.extract_strided_slice %9 {offsets = [0, 24], sizes = [8, 8], strides = [1, 1]} : vector<8x32xf32> to vector<8x8xf32>
    %92 = arith.truncf %91 : vector<8x8xf32> to vector<8x8xbf16>
    %cst_33 = arith.constant dense<0.000000e+00> : vector<8x8xf32>
    %93 = tpu.matmul %88, %90, %cst_33 {dimension_numbers = #tpu.dot_dimension_numbers<[1], [1], [0], [0], [0, 0, 1, 0], [], []>} : vector<8x8xbf16>, vector<8x8xbf16>, vector<8x8xf32> -> vector<8x8xf32>
    %cst_34 = arith.constant -1.000000e+10 : f32
    %94 = vector.broadcast %cst_34 : f32 to vector<8x8xf32>
    %95 = arith.select %18, %93, %94 : vector<8x8xi1>, vector<8x8xf32>
    %cst_35 = arith.constant dense<0xFF800000> : vector<8xf32>
    %96 = vector.multi_reduction <maximumf>, %95, %cst_35 [1] : vector<8x8xf32> to vector<8xf32>
    %97 = vector.shape_cast %96 : vector<8xf32> to vector<8x1xf32>
    %98 = vector.broadcast %97 : vector<8x1xf32> to vector<8x8xf32>
    %99 = arith.subf %95, %98 : vector<8x8xf32>
    %100 = math.exp %99 : vector<8x8xf32>
    %cst_36 = arith.constant dense<0.000000e+00> : vector<8xf32>
    %101 = vector.multi_reduction <add>, %100, %cst_36 [1] : vector<8x8xf32> to vector<8xf32>
    %102 = vector.shape_cast %101 : vector<8xf32> to vector<8x1xf32>
    %103 = tpu.reciprocal %102 {approx = true} : vector<8x1xf32> -> vector<8x1xf32>
    %104 = vector.broadcast %103 : vector<8x1xf32> to vector<8x8xf32>
    %105 = arith.mulf %100, %104 : vector<8x8xf32>
    %106 = arith.truncf %105 : vector<8x8xf32> to vector<8x8xbf16>
    %cst_37 = arith.constant dense<0.000000e+00> : vector<8x8xf32>
    %107 = tpu.matmul %106, %92, %cst_37 {dimension_numbers = #tpu.dot_dimension_numbers<[1], [0], [0], [1], [0, 0, 1, 1], [], []>} : vector<8x8xbf16>, vector<8x8xbf16>, vector<8x8xf32> -> vector<8x8xf32>
    %108 = tpu.concatenate %44, %65, %86, %107 in 1 : vector<8x8xf32>, vector<8x8xf32>, vector<8x8xf32>, vector<8x8xf32> -> vector<8x32xf32>
    %109 = arith.truncf %108 : vector<8x32xf32> to vector<8x32xbf16>
    %cst_38 = arith.constant dense<0.000000e+00> : vector<8x32xf32>
    %110 = tpu.matmul %109, %19, %cst_38 {dimension_numbers = #tpu.dot_dimension_numbers<[1], [0], [0], [1], [0, 0, 1, 1], [], []>} : vector<8x32xbf16>, vector<32x32xbf16>, vector<8x32xf32> -> vector<8x32xf32>
    %111 = vector.broadcast %20 : vector<1x32xf32> to vector<8x32xf32>
    %112 = arith.addf %110, %111 : vector<8x32xf32>
    %113 = arith.addf %21, %112 : vector<8x32xf32>
    %cst_39 = arith.constant dense<0.000000e+00> : vector<8xf32>
    %114 = vector.multi_reduction <add>, %113, %cst_39 [1] : vector<8x32xf32> to vector<8xf32>
    %115 = vector.shape_cast %114 : vector<8xf32> to vector<8x1xf32>
    %cst_40 = arith.constant 3.200000e+01 : f32
    %116 = vector.broadcast %cst_40 : f32 to vector<8x1xf32>
    %117 = arith.divf %115, %116 : vector<8x1xf32>
    %118 = vector.broadcast %117 : vector<8x1xf32> to vector<8x32xf32>
    %119 = arith.subf %113, %118 : vector<8x32xf32>
    %120 = arith.mulf %119, %119 : vector<8x32xf32>
    %cst_41 = arith.constant dense<0.000000e+00> : vector<8xf32>
    %121 = vector.multi_reduction <add>, %120, %cst_41 [1] : vector<8x32xf32> to vector<8xf32>
    %122 = vector.shape_cast %121 : vector<8xf32> to vector<8x1xf32>
    %cst_42 = arith.constant 3.200000e+01 : f32
    %123 = vector.broadcast %cst_42 : f32 to vector<8x1xf32>
    %124 = arith.divf %122, %123 : vector<8x1xf32>
    %125 = vector.broadcast %117 : vector<8x1xf32> to vector<8x32xf32>
    %126 = arith.subf %113, %125 : vector<8x32xf32>
    %cst_43 = arith.constant 9.99999974E-6 : f32
    %127 = vector.broadcast %cst_43 : f32 to vector<8x1xf32>
    %128 = arith.addf %124, %127 : vector<8x1xf32>
    %129 = math.rsqrt %128 : vector<8x1xf32>
    %130 = vector.broadcast %129 : vector<8x1xf32> to vector<8x32xf32>
    %131 = arith.mulf %126, %130 : vector<8x32xf32>
    %132 = vector.broadcast %22 : vector<1x32xf32> to vector<8x32xf32>
    %133 = arith.mulf %131, %132 : vector<8x32xf32>
    %134 = vector.broadcast %23 : vector<1x32xf32> to vector<8x32xf32>
    %135 = arith.addf %133, %134 : vector<8x32xf32>
    %136 = arith.truncf %135 : vector<8x32xf32> to vector<8x32xbf16>
    %c0_44 = arith.constant 0 : index
    %c0_45 = arith.constant 0 : index
    %c0_46 = arith.constant 0 : index
    %137 = vector.load %arg9[%c0_44, %c0_45, %c0_46] : memref<1x8x32xbf16, #tpu.memory_space<vmem>>, vector<1x8x32xbf16>
    %138 = vector.shape_cast %137 : vector<1x8x32xbf16> to vector<8x32xbf16>
    %139 = vector.shape_cast %136 : vector<8x32xbf16> to vector<1x8x32xbf16>
    tpu.vector_store %arg9[%c0_44, %c0_45, %c0_46], %139 {strides = array<i32>} : memref<1x8x32xbf16, #tpu.memory_space<vmem>>, vector<1x8x32xbf16>,
    return
  }
  func.func @transform_0(%arg0: i32) -> (i32, i32, i32) {
    %c0_i32 = arith.constant 0 : i32
    %c0_i32_0 = arith.constant 0 : i32
    %c0_i32_1 = arith.constant 0 : i32
    return %arg0, %c0_i32, %c0_i32_0 : i32, i32, i32
  }
  func.func @transform_1(%arg0: i32) -> (i32, i32, i32) {
    %c0_i32 = arith.constant 0 : i32
    %c0_i32_0 = arith.constant 0 : i32
    %c0_i32_1 = arith.constant 0 : i32
    return %arg0, %c0_i32, %c0_i32_0 : i32, i32, i32
  }
  func.func @transform_2(%arg0: i32) -> (i32, i32) {
    %c0_i32 = arith.constant 0 : i32
    %c0_i32_0 = arith.constant 0 : i32
    %c0_i32_1 = arith.constant 0 : i32
    return %c0_i32, %c0_i32_0 : i32, i32
  }
  func.func @transform_3(%arg0: i32) -> (i32, i32) {
    %c0_i32 = arith.constant 0 : i32
    %c0_i32_0 = arith.constant 0 : i32
    %c0_i32_1 = arith.constant 0 : i32
    return %c0_i32, %c0_i32_0 : i32, i32
  }
  func.func @transform_4(%arg0: i32) -> (i32, i32) {
    %c0_i32 = arith.constant 0 : i32
    %c0_i32_0 = arith.constant 0 : i32
    %c0_i32_1 = arith.constant 0 : i32
    return %c0_i32, %c0_i32_0 : i32, i32
  }
  func.func @transform_5(%arg0: i32) -> (i32, i32) {
    %c0_i32 = arith.constant 0 : i32
    %c0_i32_0 = arith.constant 0 : i32
    %c0_i32_1 = arith.constant 0 : i32
    return %c0_i32, %c0_i32_0 : i32, i32
  }
  func.func @transform_6(%arg0: i32) -> (i32, i32) {
    %c0_i32 = arith.constant 0 : i32
    %c0_i32_0 = arith.constant 0 : i32
    %c0_i32_1 = arith.constant 0 : i32
    return %c0_i32, %c0_i32_0 : i32, i32
  }
  func.func @transform_7(%arg0: i32) -> (i32, i32) {
    %c0_i32 = arith.constant 0 : i32
    %c0_i32_0 = arith.constant 0 : i32
    %c0_i32_1 = arith.constant 0 : i32
    return %c0_i32, %c0_i32_0 : i32, i32
  }
  func.func @transform_8(%arg0: i32) -> (i32, i32, i32) {
    %c0_i32 = arith.constant 0 : i32
    %c0_i32_0 = arith.constant 0 : i32
    %c0_i32_1 = arith.constant 0 : i32
    return %arg0, %c0_i32, %c0_i32_0 : i32, i32, i32
  }
}

module attributes {stable_mosaic.version = 11 : i64} {
  func.func @_ffn_kernel(%arg0: i32, %arg1: memref<16x32xbf16, #tpu.memory_space<vmem>>, %arg2: memref<32x64xbf16, #tpu.memory_space<vmem>>, %arg3: memref<1x64xf32, #tpu.memory_space<vmem>>, %arg4: memref<64x32xbf16, #tpu.memory_space<vmem>>, %arg5: memref<1x32xf32, #tpu.memory_space<vmem>>, %arg6: memref<1x32xf32, #tpu.memory_space<vmem>>, %arg7: memref<1x32xf32, #tpu.memory_space<vmem>>, %arg8: memref<16x32xbf16, #tpu.memory_space<vmem>>) attributes {dimension_semantics = [#tpu.dimension_semantics<parallel>], iteration_bounds = array<i64: 1>, scalar_prefetch = 0 : i64, scratch_operands = 0 : i64, tpu.core_type = #tpu.core_type<tc>, window_params = [{transform_indices = @transform_0, window_bounds = array<i64: 16, 32>}, {pipeline_mode = #tpu.pipeline_mode<synchronous>, transform_indices = @transform_1, window_bounds = array<i64: 32, 64>}, {pipeline_mode = #tpu.pipeline_mode<synchronous>, transform_indices = @transform_2, window_bounds = array<i64: 1, 64>}, {pipeline_mode = #tpu.pipeline_mode<synchronous>, transform_indices = @transform_3, window_bounds = array<i64: 64, 32>}, {pipeline_mode = #tpu.pipeline_mode<synchronous>, transform_indices = @transform_4, window_bounds = array<i64: 1, 32>}, {pipeline_mode = #tpu.pipeline_mode<synchronous>, transform_indices = @transform_5, window_bounds = array<i64: 1, 32>}, {pipeline_mode = #tpu.pipeline_mode<synchronous>, transform_indices = @transform_6, window_bounds = array<i64: 1, 32>}, {transform_indices = @transform_7, window_bounds = array<i64: 16, 32>}]} {
    %c0 = arith.constant 0 : index
    %c0_0 = arith.constant 0 : index
    %0 = vector.load %arg1[%c0, %c0_0] : memref<16x32xbf16, #tpu.memory_space<vmem>>, vector<16x32xbf16>
    %c0_1 = arith.constant 0 : index
    %c0_2 = arith.constant 0 : index
    %1 = vector.load %arg2[%c0_1, %c0_2] : memref<32x64xbf16, #tpu.memory_space<vmem>>, vector<32x64xbf16>
    %cst = arith.constant dense<0.000000e+00> : vector<16x64xf32>
    %2 = tpu.matmul %0, %1, %cst {dimension_numbers = #tpu.dot_dimension_numbers<[1], [0], [0], [1], [0, 0, 1, 1], [], []>} : vector<16x32xbf16>, vector<32x64xbf16>, vector<16x64xf32> -> vector<16x64xf32>
    %c0_3 = arith.constant 0 : index
    %c0_4 = arith.constant 0 : index
    %3 = vector.load %arg3[%c0_3, %c0_4] : memref<1x64xf32, #tpu.memory_space<vmem>>, vector<1x64xf32>
    %4 = vector.broadcast %3 : vector<1x64xf32> to vector<16x64xf32>
    %5 = arith.addf %2, %4 : vector<16x64xf32>
    %cst_5 = arith.constant 0.000000e+00 : f32
    %6 = vector.broadcast %cst_5 : f32 to vector<16x64xf32>
    %7 = arith.maximumf %5, %6 : vector<16x64xf32>
    %8 = arith.truncf %7 : vector<16x64xf32> to vector<16x64xbf16>
    %c0_6 = arith.constant 0 : index
    %c0_7 = arith.constant 0 : index
    %9 = vector.load %arg4[%c0_6, %c0_7] : memref<64x32xbf16, #tpu.memory_space<vmem>>, vector<64x32xbf16>
    %cst_8 = arith.constant dense<0.000000e+00> : vector<16x32xf32>
    %10 = tpu.matmul %8, %9, %cst_8 {dimension_numbers = #tpu.dot_dimension_numbers<[1], [0], [0], [1], [0, 0, 1, 1], [], []>} : vector<16x64xbf16>, vector<64x32xbf16>, vector<16x32xf32> -> vector<16x32xf32>
    %c0_9 = arith.constant 0 : index
    %c0_10 = arith.constant 0 : index
    %11 = vector.load %arg5[%c0_9, %c0_10] : memref<1x32xf32, #tpu.memory_space<vmem>>, vector<1x32xf32>
    %12 = vector.broadcast %11 : vector<1x32xf32> to vector<16x32xf32>
    %13 = arith.addf %10, %12 : vector<16x32xf32>
    %14 = arith.extf %0 : vector<16x32xbf16> to vector<16x32xf32>
    %15 = arith.addf %14, %13 : vector<16x32xf32>
    %cst_11 = arith.constant dense<0.000000e+00> : vector<16xf32>
    %16 = vector.multi_reduction <add>, %15, %cst_11 [1] : vector<16x32xf32> to vector<16xf32>
    %17 = vector.shape_cast %16 : vector<16xf32> to vector<16x1xf32>
    %cst_12 = arith.constant 3.200000e+01 : f32
    %18 = vector.broadcast %cst_12 : f32 to vector<16x1xf32>
    %19 = arith.divf %17, %18 : vector<16x1xf32>
    %20 = vector.broadcast %19 : vector<16x1xf32> to vector<16x32xf32>
    %21 = arith.subf %15, %20 : vector<16x32xf32>
    %22 = arith.mulf %21, %21 : vector<16x32xf32>
    %cst_13 = arith.constant dense<0.000000e+00> : vector<16xf32>
    %23 = vector.multi_reduction <add>, %22, %cst_13 [1] : vector<16x32xf32> to vector<16xf32>
    %24 = vector.shape_cast %23 : vector<16xf32> to vector<16x1xf32>
    %cst_14 = arith.constant 3.200000e+01 : f32
    %25 = vector.broadcast %cst_14 : f32 to vector<16x1xf32>
    %26 = arith.divf %24, %25 : vector<16x1xf32>
    %27 = vector.broadcast %19 : vector<16x1xf32> to vector<16x32xf32>
    %28 = arith.subf %15, %27 : vector<16x32xf32>
    %cst_15 = arith.constant 9.99999974E-6 : f32
    %29 = vector.broadcast %cst_15 : f32 to vector<16x1xf32>
    %30 = arith.addf %26, %29 : vector<16x1xf32>
    %31 = math.rsqrt %30 : vector<16x1xf32>
    %32 = vector.broadcast %31 : vector<16x1xf32> to vector<16x32xf32>
    %33 = arith.mulf %28, %32 : vector<16x32xf32>
    %c0_16 = arith.constant 0 : index
    %c0_17 = arith.constant 0 : index
    %34 = vector.load %arg6[%c0_16, %c0_17] : memref<1x32xf32, #tpu.memory_space<vmem>>, vector<1x32xf32>
    %35 = vector.broadcast %34 : vector<1x32xf32> to vector<16x32xf32>
    %36 = arith.mulf %33, %35 : vector<16x32xf32>
    %c0_18 = arith.constant 0 : index
    %c0_19 = arith.constant 0 : index
    %37 = vector.load %arg7[%c0_18, %c0_19] : memref<1x32xf32, #tpu.memory_space<vmem>>, vector<1x32xf32>
    %38 = vector.broadcast %37 : vector<1x32xf32> to vector<16x32xf32>
    %39 = arith.addf %36, %38 : vector<16x32xf32>
    %40 = arith.truncf %39 : vector<16x32xf32> to vector<16x32xbf16>
    %c0_20 = arith.constant 0 : index
    %c0_21 = arith.constant 0 : index
    %41 = vector.load %arg8[%c0_20, %c0_21] : memref<16x32xbf16, #tpu.memory_space<vmem>>, vector<16x32xbf16>
    tpu.vector_store %arg8[%c0_20, %c0_21], %40 {strides = array<i32>} : memref<16x32xbf16, #tpu.memory_space<vmem>>, vector<16x32xbf16>,
    return
  }
  func.func @transform_0(%arg0: i32) -> (i32, i32) {
    %c0_i32 = arith.constant 0 : i32
    %c0_i32_0 = arith.constant 0 : i32
    return %arg0, %c0_i32 : i32, i32
  }
  func.func @transform_1(%arg0: i32) -> (i32, i32) {
    %c0_i32 = arith.constant 0 : i32
    %c0_i32_0 = arith.constant 0 : i32
    %c0_i32_1 = arith.constant 0 : i32
    return %c0_i32, %c0_i32_0 : i32, i32
  }
  func.func @transform_2(%arg0: i32) -> (i32, i32) {
    %c0_i32 = arith.constant 0 : i32
    %c0_i32_0 = arith.constant 0 : i32
    %c0_i32_1 = arith.constant 0 : i32
    return %c0_i32, %c0_i32_0 : i32, i32
  }
  func.func @transform_3(%arg0: i32) -> (i32, i32) {
    %c0_i32 = arith.constant 0 : i32
    %c0_i32_0 = arith.constant 0 : i32
    %c0_i32_1 = arith.constant 0 : i32
    return %c0_i32, %c0_i32_0 : i32, i32
  }
  func.func @transform_4(%arg0: i32) -> (i32, i32) {
    %c0_i32 = arith.constant 0 : i32
    %c0_i32_0 = arith.constant 0 : i32
    %c0_i32_1 = arith.constant 0 : i32
    return %c0_i32, %c0_i32_0 : i32, i32
  }
  func.func @transform_5(%arg0: i32) -> (i32, i32) {
    %c0_i32 = arith.constant 0 : i32
    %c0_i32_0 = arith.constant 0 : i32
    %c0_i32_1 = arith.constant 0 : i32
    return %c0_i32, %c0_i32_0 : i32, i32
  }
  func.func @transform_6(%arg0: i32) -> (i32, i32) {
    %c0_i32 = arith.constant 0 : i32
    %c0_i32_0 = arith.constant 0 : i32
    %c0_i32_1 = arith.constant 0 : i32
    return %c0_i32, %c0_i32_0 : i32, i32
  }
  func.func @transform_7(%arg0: i32) -> (i32, i32) {
    %c0_i32 = arith.constant 0 : i32
    %c0_i32_0 = arith.constant 0 : i32
    return %arg0, %c0_i32 : i32, i32
  }
}

module attributes {stable_mosaic.version = 11 : i64} {
  func.func @_cross_attn_kernel(%arg0: i32, %arg1: memref<1x8x32xbf16, #tpu.memory_space<vmem>>, %arg2: memref<1x8x32xbf16, #tpu.memory_space<vmem>>, %arg3: memref<1x1x8xf32, #tpu.memory_space<vmem>>, %arg4: memref<32x32xbf16, #tpu.memory_space<vmem>>, %arg5: memref<1x32xf32, #tpu.memory_space<vmem>>, %arg6: memref<32x64xbf16, #tpu.memory_space<vmem>>, %arg7: memref<1x64xf32, #tpu.memory_space<vmem>>, %arg8: memref<32x32xbf16, #tpu.memory_space<vmem>>, %arg9: memref<1x32xf32, #tpu.memory_space<vmem>>, %arg10: memref<1x32xf32, #tpu.memory_space<vmem>>, %arg11: memref<1x32xf32, #tpu.memory_space<vmem>>, %arg12: memref<1x8x32xbf16, #tpu.memory_space<vmem>>) attributes {dimension_semantics = [#tpu.dimension_semantics<parallel>], iteration_bounds = array<i64: 2>, scalar_prefetch = 0 : i64, scratch_operands = 0 : i64, tpu.core_type = #tpu.core_type<tc>, window_params = [{transform_indices = @transform_0, window_bounds = array<i64: 1, 8, 32>}, {transform_indices = @transform_1, window_bounds = array<i64: 1, 8, 32>}, {transform_indices = @transform_2, window_bounds = array<i64: 1, 1, 8>}, {pipeline_mode = #tpu.pipeline_mode<synchronous>, transform_indices = @transform_3, window_bounds = array<i64: 32, 32>}, {pipeline_mode = #tpu.pipeline_mode<synchronous>, transform_indices = @transform_4, window_bounds = array<i64: 1, 32>}, {pipeline_mode = #tpu.pipeline_mode<synchronous>, transform_indices = @transform_5, window_bounds = array<i64: 32, 64>}, {pipeline_mode = #tpu.pipeline_mode<synchronous>, transform_indices = @transform_6, window_bounds = array<i64: 1, 64>}, {pipeline_mode = #tpu.pipeline_mode<synchronous>, transform_indices = @transform_7, window_bounds = array<i64: 32, 32>}, {pipeline_mode = #tpu.pipeline_mode<synchronous>, transform_indices = @transform_8, window_bounds = array<i64: 1, 32>}, {pipeline_mode = #tpu.pipeline_mode<synchronous>, transform_indices = @transform_9, window_bounds = array<i64: 1, 32>}, {pipeline_mode = #tpu.pipeline_mode<synchronous>, transform_indices = @transform_10, window_bounds = array<i64: 1, 32>}, {transform_indices = @transform_11, window_bounds = array<i64: 1, 8, 32>}]} {
    %c0 = arith.constant 0 : index
    %c0_0 = arith.constant 0 : index
    %c0_1 = arith.constant 0 : index
    %0 = vector.load %arg1[%c0, %c0_0, %c0_1] : memref<1x8x32xbf16, #tpu.memory_space<vmem>>, vector<1x8x32xbf16>
    %1 = vector.shape_cast %0 : vector<1x8x32xbf16> to vector<8x32xbf16>
    %c0_2 = arith.constant 0 : index
    %c0_3 = arith.constant 0 : index
    %c0_4 = arith.constant 0 : index
    %2 = vector.load %arg2[%c0_2, %c0_3, %c0_4] : memref<1x8x32xbf16, #tpu.memory_space<vmem>>, vector<1x8x32xbf16>
    %3 = vector.shape_cast %2 : vector<1x8x32xbf16> to vector<8x32xbf16>
    %c0_5 = arith.constant 0 : index
    %c0_6 = arith.constant 0 : index
    %4 = vector.load %arg4[%c0_5, %c0_6] : memref<32x32xbf16, #tpu.memory_space<vmem>>, vector<32x32xbf16>
    %cst = arith.constant dense<0.000000e+00> : vector<8x32xf32>
    %5 = tpu.matmul %1, %4, %cst {dimension_numbers = #tpu.dot_dimension_numbers<[1], [0], [0], [1], [0, 0, 1, 1], [], []>} : vector<8x32xbf16>, vector<32x32xbf16>, vector<8x32xf32> -> vector<8x32xf32>
    %c0_7 = arith.constant 0 : index
    %c0_8 = arith.constant 0 : index
    %6 = vector.load %arg5[%c0_7, %c0_8] : memref<1x32xf32, #tpu.memory_space<vmem>>, vector<1x32xf32>
    %7 = vector.broadcast %6 : vector<1x32xf32> to vector<8x32xf32>
    %8 = arith.addf %5, %7 : vector<8x32xf32>
    %c0_9 = arith.constant 0 : index
    %c0_10 = arith.constant 0 : index
    %9 = vector.load %arg6[%c0_9, %c0_10] : memref<32x64xbf16, #tpu.memory_space<vmem>>, vector<32x64xbf16>
    %cst_11 = arith.constant dense<0.000000e+00> : vector<8x64xf32>
    %10 = tpu.matmul %3, %9, %cst_11 {dimension_numbers = #tpu.dot_dimension_numbers<[1], [0], [0], [1], [0, 0, 1, 1], [], []>} : vector<8x32xbf16>, vector<32x64xbf16>, vector<8x64xf32> -> vector<8x64xf32>
    %c0_12 = arith.constant 0 : index
    %c0_13 = arith.constant 0 : index
    %11 = vector.load %arg7[%c0_12, %c0_13] : memref<1x64xf32, #tpu.memory_space<vmem>>, vector<1x64xf32>
    %12 = vector.broadcast %11 : vector<1x64xf32> to vector<8x64xf32>
    %13 = arith.addf %10, %12 : vector<8x64xf32>
    %14 = vector.extract_strided_slice %13 {offsets = [0, 0], sizes = [8, 32], strides = [1, 1]} : vector<8x64xf32> to vector<8x32xf32>
    %15 = vector.extract_strided_slice %13 {offsets = [0, 32], sizes = [8, 32], strides = [1, 1]} : vector<8x64xf32> to vector<8x32xf32>
    %c0_14 = arith.constant 0 : index
    %c0_15 = arith.constant 0 : index
    %c0_16 = arith.constant 0 : index
    %16 = vector.load %arg3[%c0_14, %c0_15, %c0_16] : memref<1x1x8xf32, #tpu.memory_space<vmem>>, vector<1x1x8xf32>
    %17 = vector.shape_cast %16 : vector<1x1x8xf32> to vector<1x8xf32>
    %cst_17 = arith.constant 0.000000e+00 : f32
    %18 = vector.broadcast %cst_17 : f32 to vector<1x8xf32>
    %19 = arith.cmpf ogt, %17, %18 : vector<1x8xf32>
    %c0_18 = arith.constant 0 : index
    %c0_19 = arith.constant 0 : index
    %20 = vector.load %arg8[%c0_18, %c0_19] : memref<32x32xbf16, #tpu.memory_space<vmem>>, vector<32x32xbf16>
    %c0_20 = arith.constant 0 : index
    %c0_21 = arith.constant 0 : index
    %21 = vector.load %arg9[%c0_20, %c0_21] : memref<1x32xf32, #tpu.memory_space<vmem>>, vector<1x32xf32>
    %22 = arith.extf %1 : vector<8x32xbf16> to vector<8x32xf32>
    %c0_22 = arith.constant 0 : index
    %c0_23 = arith.constant 0 : index
    %23 = vector.load %arg10[%c0_22, %c0_23] : memref<1x32xf32, #tpu.memory_space<vmem>>, vector<1x32xf32>
    %c0_24 = arith.constant 0 : index
    %c0_25 = arith.constant 0 : index
    %24 = vector.load %arg11[%c0_24, %c0_25] : memref<1x32xf32, #tpu.memory_space<vmem>>, vector<1x32xf32>
    %25 = vector.extract_strided_slice %8 {offsets = [0, 0], sizes = [8, 8], strides = [1, 1]} : vector<8x32xf32> to vector<8x8xf32>
    %26 = arith.truncf %25 : vector<8x8xf32> to vector<8x8xbf16>
    %27 = vector.extract_strided_slice %14 {offsets = [0, 0], sizes = [8, 8], strides = [1, 1]} : vector<8x32xf32> to vector<8x8xf32>
    %28 = arith.truncf %27 : vector<8x8xf32> to vector<8x8xbf16>
    %29 = vector.extract_strided_slice %15 {offsets = [0, 0], sizes = [8, 8], strides = [1, 1]} : vector<8x32xf32> to vector<8x8xf32>
    %30 = arith.truncf %29 : vector<8x8xf32> to vector<8x8xbf16>
    %cst_26 = arith.constant dense<0.000000e+00> : vector<8x8xf32>
    %31 = tpu.matmul %26, %28, %cst_26 {dimension_numbers = #tpu.dot_dimension_numbers<[1], [1], [0], [0], [0, 0, 1, 0], [], []>} : vector<8x8xbf16>, vector<8x8xbf16>, vector<8x8xf32> -> vector<8x8xf32>
    %cst_27 = arith.constant -1.000000e+10 : f32
    %32 = vector.shape_cast %19 : vector<1x8xi1> to vector<1x8xi1>
    %33 = vector.broadcast %32 : vector<1x8xi1> to vector<8x8xi1>
    %34 = vector.broadcast %cst_27 : f32 to vector<8x8xf32>
    %35 = arith.select %33, %31, %34 : vector<8x8xi1>, vector<8x8xf32>
    %cst_28 = arith.constant dense<0xFF800000> : vector<8xf32>
    %36 = vector.multi_reduction <maximumf>, %35, %cst_28 [1] : vector<8x8xf32> to vector<8xf32>
    %37 = vector.shape_cast %36 : vector<8xf32> to vector<8x1xf32>
    %38 = vector.broadcast %37 : vector<8x1xf32> to vector<8x8xf32>
    %39 = arith.subf %35, %38 : vector<8x8xf32>
    %40 = math.exp %39 : vector<8x8xf32>
    %cst_29 = arith.constant dense<0.000000e+00> : vector<8xf32>
    %41 = vector.multi_reduction <add>, %40, %cst_29 [1] : vector<8x8xf32> to vector<8xf32>
    %42 = vector.shape_cast %41 : vector<8xf32> to vector<8x1xf32>
    %43 = tpu.reciprocal %42 {approx = true} : vector<8x1xf32> -> vector<8x1xf32>
    %44 = vector.broadcast %43 : vector<8x1xf32> to vector<8x8xf32>
    %45 = arith.mulf %40, %44 : vector<8x8xf32>
    %46 = arith.truncf %45 : vector<8x8xf32> to vector<8x8xbf16>
    %cst_30 = arith.constant dense<0.000000e+00> : vector<8x8xf32>
    %47 = tpu.matmul %46, %30, %cst_30 {dimension_numbers = #tpu.dot_dimension_numbers<[1], [0], [0], [1], [0, 0, 1, 1], [], []>} : vector<8x8xbf16>, vector<8x8xbf16>, vector<8x8xf32> -> vector<8x8xf32>
    %48 = vector.extract_strided_slice %8 {offsets = [0, 8], sizes = [8, 8], strides = [1, 1]} : vector<8x32xf32> to vector<8x8xf32>
    %49 = arith.truncf %48 : vector<8x8xf32> to vector<8x8xbf16>
    %50 = vector.extract_strided_slice %14 {offsets = [0, 8], sizes = [8, 8], strides = [1, 1]} : vector<8x32xf32> to vector<8x8xf32>
    %51 = arith.truncf %50 : vector<8x8xf32> to vector<8x8xbf16>
    %52 = vector.extract_strided_slice %15 {offsets = [0, 8], sizes = [8, 8], strides = [1, 1]} : vector<8x32xf32> to vector<8x8xf32>
    %53 = arith.truncf %52 : vector<8x8xf32> to vector<8x8xbf16>
    %cst_31 = arith.constant dense<0.000000e+00> : vector<8x8xf32>
    %54 = tpu.matmul %49, %51, %cst_31 {dimension_numbers = #tpu.dot_dimension_numbers<[1], [1], [0], [0], [0, 0, 1, 0], [], []>} : vector<8x8xbf16>, vector<8x8xbf16>, vector<8x8xf32> -> vector<8x8xf32>
    %cst_32 = arith.constant -1.000000e+10 : f32
    %55 = vector.shape_cast %19 : vector<1x8xi1> to vector<1x8xi1>
    %56 = vector.broadcast %55 : vector<1x8xi1> to vector<8x8xi1>
    %57 = vector.broadcast %cst_32 : f32 to vector<8x8xf32>
    %58 = arith.select %56, %54, %57 : vector<8x8xi1>, vector<8x8xf32>
    %cst_33 = arith.constant dense<0xFF800000> : vector<8xf32>
    %59 = vector.multi_reduction <maximumf>, %58, %cst_33 [1] : vector<8x8xf32> to vector<8xf32>
    %60 = vector.shape_cast %59 : vector<8xf32> to vector<8x1xf32>
    %61 = vector.broadcast %60 : vector<8x1xf32> to vector<8x8xf32>
    %62 = arith.subf %58, %61 : vector<8x8xf32>
    %63 = math.exp %62 : vector<8x8xf32>
    %cst_34 = arith.constant dense<0.000000e+00> : vector<8xf32>
    %64 = vector.multi_reduction <add>, %63, %cst_34 [1] : vector<8x8xf32> to vector<8xf32>
    %65 = vector.shape_cast %64 : vector<8xf32> to vector<8x1xf32>
    %66 = tpu.reciprocal %65 {approx = true} : vector<8x1xf32> -> vector<8x1xf32>
    %67 = vector.broadcast %66 : vector<8x1xf32> to vector<8x8xf32>
    %68 = arith.mulf %63, %67 : vector<8x8xf32>
    %69 = arith.truncf %68 : vector<8x8xf32> to vector<8x8xbf16>
    %cst_35 = arith.constant dense<0.000000e+00> : vector<8x8xf32>
    %70 = tpu.matmul %69, %53, %cst_35 {dimension_numbers = #tpu.dot_dimension_numbers<[1], [0], [0], [1], [0, 0, 1, 1], [], []>} : vector<8x8xbf16>, vector<8x8xbf16>, vector<8x8xf32> -> vector<8x8xf32>
    %71 = vector.extract_strided_slice %8 {offsets = [0, 16], sizes = [8, 8], strides = [1, 1]} : vector<8x32xf32> to vector<8x8xf32>
    %72 = arith.truncf %71 : vector<8x8xf32> to vector<8x8xbf16>
    %73 = vector.extract_strided_slice %14 {offsets = [0, 16], sizes = [8, 8], strides = [1, 1]} : vector<8x32xf32> to vector<8x8xf32>
    %74 = arith.truncf %73 : vector<8x8xf32> to vector<8x8xbf16>
    %75 = vector.extract_strided_slice %15 {offsets = [0, 16], sizes = [8, 8], strides = [1, 1]} : vector<8x32xf32> to vector<8x8xf32>
    %76 = arith.truncf %75 : vector<8x8xf32> to vector<8x8xbf16>
    %cst_36 = arith.constant dense<0.000000e+00> : vector<8x8xf32>
    %77 = tpu.matmul %72, %74, %cst_36 {dimension_numbers = #tpu.dot_dimension_numbers<[1], [1], [0], [0], [0, 0, 1, 0], [], []>} : vector<8x8xbf16>, vector<8x8xbf16>, vector<8x8xf32> -> vector<8x8xf32>
    %cst_37 = arith.constant -1.000000e+10 : f32
    %78 = vector.shape_cast %19 : vector<1x8xi1> to vector<1x8xi1>
    %79 = vector.broadcast %78 : vector<1x8xi1> to vector<8x8xi1>
    %80 = vector.broadcast %cst_37 : f32 to vector<8x8xf32>
    %81 = arith.select %79, %77, %80 : vector<8x8xi1>, vector<8x8xf32>
    %cst_38 = arith.constant dense<0xFF800000> : vector<8xf32>
    %82 = vector.multi_reduction <maximumf>, %81, %cst_38 [1] : vector<8x8xf32> to vector<8xf32>
    %83 = vector.shape_cast %82 : vector<8xf32> to vector<8x1xf32>
    %84 = vector.broadcast %83 : vector<8x1xf32> to vector<8x8xf32>
    %85 = arith.subf %81, %84 : vector<8x8xf32>
    %86 = math.exp %85 : vector<8x8xf32>
    %cst_39 = arith.constant dense<0.000000e+00> : vector<8xf32>
    %87 = vector.multi_reduction <add>, %86, %cst_39 [1] : vector<8x8xf32> to vector<8xf32>
    %88 = vector.shape_cast %87 : vector<8xf32> to vector<8x1xf32>
    %89 = tpu.reciprocal %88 {approx = true} : vector<8x1xf32> -> vector<8x1xf32>
    %90 = vector.broadcast %89 : vector<8x1xf32> to vector<8x8xf32>
    %91 = arith.mulf %86, %90 : vector<8x8xf32>
    %92 = arith.truncf %91 : vector<8x8xf32> to vector<8x8xbf16>
    %cst_40 = arith.constant dense<0.000000e+00> : vector<8x8xf32>
    %93 = tpu.matmul %92, %76, %cst_40 {dimension_numbers = #tpu.dot_dimension_numbers<[1], [0], [0], [1], [0, 0, 1, 1], [], []>} : vector<8x8xbf16>, vector<8x8xbf16>, vector<8x8xf32> -> vector<8x8xf32>
    %94 = vector.extract_strided_slice %8 {offsets = [0, 24], sizes = [8, 8], strides = [1, 1]} : vector<8x32xf32> to vector<8x8xf32>
    %95 = arith.truncf %94 : vector<8x8xf32> to vector<8x8xbf16>
    %96 = vector.extract_strided_slice %14 {offsets = [0, 24], sizes = [8, 8], strides = [1, 1]} : vector<8x32xf32> to vector<8x8xf32>
    %97 = arith.truncf %96 : vector<8x8xf32> to vector<8x8xbf16>
    %98 = vector.extract_strided_slice %15 {offsets = [0, 24], sizes = [8, 8], strides = [1, 1]} : vector<8x32xf32> to vector<8x8xf32>
    %99 = arith.truncf %98 : vector<8x8xf32> to vector<8x8xbf16>
    %cst_41 = arith.constant dense<0.000000e+00> : vector<8x8xf32>
    %100 = tpu.matmul %95, %97, %cst_41 {dimension_numbers = #tpu.dot_dimension_numbers<[1], [1], [0], [0], [0, 0, 1, 0], [], []>} : vector<8x8xbf16>, vector<8x8xbf16>, vector<8x8xf32> -> vector<8x8xf32>
    %cst_42 = arith.constant -1.000000e+10 : f32
    %101 = vector.shape_cast %19 : vector<1x8xi1> to vector<1x8xi1>
    %102 = vector.broadcast %101 : vector<1x8xi1> to vector<8x8xi1>
    %103 = vector.broadcast %cst_42 : f32 to vector<8x8xf32>
    %104 = arith.select %102, %100, %103 : vector<8x8xi1>, vector<8x8xf32>
    %cst_43 = arith.constant dense<0xFF800000> : vector<8xf32>
    %105 = vector.multi_reduction <maximumf>, %104, %cst_43 [1] : vector<8x8xf32> to vector<8xf32>
    %106 = vector.shape_cast %105 : vector<8xf32> to vector<8x1xf32>
    %107 = vector.broadcast %106 : vector<8x1xf32> to vector<8x8xf32>
    %108 = arith.subf %104, %107 : vector<8x8xf32>
    %109 = math.exp %108 : vector<8x8xf32>
    %cst_44 = arith.constant dense<0.000000e+00> : vector<8xf32>
    %110 = vector.multi_reduction <add>, %109, %cst_44 [1] : vector<8x8xf32> to vector<8xf32>
    %111 = vector.shape_cast %110 : vector<8xf32> to vector<8x1xf32>
    %112 = tpu.reciprocal %111 {approx = true} : vector<8x1xf32> -> vector<8x1xf32>
    %113 = vector.broadcast %112 : vector<8x1xf32> to vector<8x8xf32>
    %114 = arith.mulf %109, %113 : vector<8x8xf32>
    %115 = arith.truncf %114 : vector<8x8xf32> to vector<8x8xbf16>
    %cst_45 = arith.constant dense<0.000000e+00> : vector<8x8xf32>
    %116 = tpu.matmul %115, %99, %cst_45 {dimension_numbers = #tpu.dot_dimension_numbers<[1], [0], [0], [1], [0, 0, 1, 1], [], []>} : vector<8x8xbf16>, vector<8x8xbf16>, vector<8x8xf32> -> vector<8x8xf32>
    %117 = tpu.concatenate %47, %70, %93, %116 in 1 : vector<8x8xf32>, vector<8x8xf32>, vector<8x8xf32>, vector<8x8xf32> -> vector<8x32xf32>
    %118 = arith.truncf %117 : vector<8x32xf32> to vector<8x32xbf16>
    %cst_46 = arith.constant dense<0.000000e+00> : vector<8x32xf32>
    %119 = tpu.matmul %118, %20, %cst_46 {dimension_numbers = #tpu.dot_dimension_numbers<[1], [0], [0], [1], [0, 0, 1, 1], [], []>} : vector<8x32xbf16>, vector<32x32xbf16>, vector<8x32xf32> -> vector<8x32xf32>
    %120 = vector.broadcast %21 : vector<1x32xf32> to vector<8x32xf32>
    %121 = arith.addf %119, %120 : vector<8x32xf32>
    %122 = arith.addf %22, %121 : vector<8x32xf32>
    %cst_47 = arith.constant dense<0.000000e+00> : vector<8xf32>
    %123 = vector.multi_reduction <add>, %122, %cst_47 [1] : vector<8x32xf32> to vector<8xf32>
    %124 = vector.shape_cast %123 : vector<8xf32> to vector<8x1xf32>
    %cst_48 = arith.constant 3.200000e+01 : f32
    %125 = vector.broadcast %cst_48 : f32 to vector<8x1xf32>
    %126 = arith.divf %124, %125 : vector<8x1xf32>
    %127 = vector.broadcast %126 : vector<8x1xf32> to vector<8x32xf32>
    %128 = arith.subf %122, %127 : vector<8x32xf32>
    %129 = arith.mulf %128, %128 : vector<8x32xf32>
    %cst_49 = arith.constant dense<0.000000e+00> : vector<8xf32>
    %130 = vector.multi_reduction <add>, %129, %cst_49 [1] : vector<8x32xf32> to vector<8xf32>
    %131 = vector.shape_cast %130 : vector<8xf32> to vector<8x1xf32>
    %cst_50 = arith.constant 3.200000e+01 : f32
    %132 = vector.broadcast %cst_50 : f32 to vector<8x1xf32>
    %133 = arith.divf %131, %132 : vector<8x1xf32>
    %134 = vector.broadcast %126 : vector<8x1xf32> to vector<8x32xf32>
    %135 = arith.subf %122, %134 : vector<8x32xf32>
    %cst_51 = arith.constant 9.99999974E-6 : f32
    %136 = vector.broadcast %cst_51 : f32 to vector<8x1xf32>
    %137 = arith.addf %133, %136 : vector<8x1xf32>
    %138 = math.rsqrt %137 : vector<8x1xf32>
    %139 = vector.broadcast %138 : vector<8x1xf32> to vector<8x32xf32>
    %140 = arith.mulf %135, %139 : vector<8x32xf32>
    %141 = vector.broadcast %23 : vector<1x32xf32> to vector<8x32xf32>
    %142 = arith.mulf %140, %141 : vector<8x32xf32>
    %143 = vector.broadcast %24 : vector<1x32xf32> to vector<8x32xf32>
    %144 = arith.addf %142, %143 : vector<8x32xf32>
    %145 = arith.truncf %144 : vector<8x32xf32> to vector<8x32xbf16>
    %c0_52 = arith.constant 0 : index
    %c0_53 = arith.constant 0 : index
    %c0_54 = arith.constant 0 : index
    %146 = vector.load %arg12[%c0_52, %c0_53, %c0_54] : memref<1x8x32xbf16, #tpu.memory_space<vmem>>, vector<1x8x32xbf16>
    %147 = vector.shape_cast %146 : vector<1x8x32xbf16> to vector<8x32xbf16>
    %148 = vector.shape_cast %145 : vector<8x32xbf16> to vector<1x8x32xbf16>
    tpu.vector_store %arg12[%c0_52, %c0_53, %c0_54], %148 {strides = array<i32>} : memref<1x8x32xbf16, #tpu.memory_space<vmem>>, vector<1x8x32xbf16>,
    return
  }
  func.func @transform_0(%arg0: i32) -> (i32, i32, i32) {
    %c0_i32 = arith.constant 0 : i32
    %c0_i32_0 = arith.constant 0 : i32
    %c0_i32_1 = arith.constant 0 : i32
    return %arg0, %c0_i32, %c0_i32_0 : i32, i32, i32
  }
  func.func @transform_1(%arg0: i32) -> (i32, i32, i32) {
    %c0_i32 = arith.constant 0 : i32
    %c0_i32_0 = arith.constant 0 : i32
    %c0_i32_1 = arith.constant 0 : i32
    return %arg0, %c0_i32, %c0_i32_0 : i32, i32, i32
  }
  func.func @transform_2(%arg0: i32) -> (i32, i32, i32) {
    %c0_i32 = arith.constant 0 : i32
    %c0_i32_0 = arith.constant 0 : i32
    %c0_i32_1 = arith.constant 0 : i32
    return %arg0, %c0_i32, %c0_i32_0 : i32, i32, i32
  }
  func.func @transform_3(%arg0: i32) -> (i32, i32) {
    %c0_i32 = arith.constant 0 : i32
    %c0_i32_0 = arith.constant 0 : i32
    %c0_i32_1 = arith.constant 0 : i32
    return %c0_i32, %c0_i32_0 : i32, i32
  }
  func.func @transform_4(%arg0: i32) -> (i32, i32) {
    %c0_i32 = arith.constant 0 : i32
    %c0_i32_0 = arith.constant 0 : i32
    %c0_i32_1 = arith.constant 0 : i32
    return %c0_i32, %c0_i32_0 : i32, i32
  }
  func.func @transform_5(%arg0: i32) -> (i32, i32) {
    %c0_i32 = arith.constant 0 : i32
    %c0_i32_0 = arith.constant 0 : i32
    %c0_i32_1 = arith.constant 0 : i32
    return %c0_i32, %c0_i32_0 : i32, i32
  }
  func.func @transform_6(%arg0: i32) -> (i32, i32) {
    %c0_i32 = arith.constant 0 : i32
    %c0_i32_0 = arith.constant 0 : i32
    %c0_i32_1 = arith.constant 0 : i32
    return %c0_i32, %c0_i32_0 : i32, i32
  }
  func.func @transform_7(%arg0: i32) -> (i32, i32) {
    %c0_i32 = arith.constant 0 : i32
    %c0_i32_0 = arith.constant 0 : i32
    %c0_i32_1 = arith.constant 0 : i32
    return %c0_i32, %c0_i32_0 : i32, i32
  }
  func.func @transform_8(%arg0: i32) -> (i32, i32) {
    %c0_i32 = arith.constant 0 : i32
    %c0_i32_0 = arith.constant 0 : i32
    %c0_i32_1 = arith.constant 0 : i32
    return %c0_i32, %c0_i32_0 : i32, i32
  }
  func.func @transform_9(%arg0: i32) -> (i32, i32) {
    %c0_i32 = arith.constant 0 : i32
    %c0_i32_0 = arith.constant 0 : i32
    %c0_i32_1 = arith.constant 0 : i32
    return %c0_i32, %c0_i32_0 : i32, i32
  }
  func.func @transform_10(%arg0: i32) -> (i32, i32) {
    %c0_i32 = arith.constant 0 : i32
    %c0_i32_0 = arith.constant 0 : i32
    %c0_i32_1 = arith.constant 0 : i32
    return %c0_i32, %c0_i32_0 : i32, i32
  }
  func.func @transform_11(%arg0: i32) -> (i32, i32, i32) {
    %c0_i32 = arith.constant 0 : i32
    %c0_i32_0 = arith.constant 0 : i32
    %c0_i32_1 = arith.constant 0 : i32
    return %arg0, %c0_i32, %c0_i32_0 : i32, i32, i32
  }
}

module attributes {stable_mosaic.version = 11 : i64} {
  func.func @_cross_attn_kernel_with_attn(%arg0: i32, %arg1: memref<1x8x32xbf16, #tpu.memory_space<vmem>>, %arg2: memref<1x8x32xbf16, #tpu.memory_space<vmem>>, %arg3: memref<1x1x8xf32, #tpu.memory_space<vmem>>, %arg4: memref<32x32xbf16, #tpu.memory_space<vmem>>, %arg5: memref<1x32xf32, #tpu.memory_space<vmem>>, %arg6: memref<32x64xbf16, #tpu.memory_space<vmem>>, %arg7: memref<1x64xf32, #tpu.memory_space<vmem>>, %arg8: memref<32x32xbf16, #tpu.memory_space<vmem>>, %arg9: memref<1x32xf32, #tpu.memory_space<vmem>>, %arg10: memref<1x32xf32, #tpu.memory_space<vmem>>, %arg11: memref<1x32xf32, #tpu.memory_space<vmem>>, %arg12: memref<1x8x32xbf16, #tpu.memory_space<vmem>>, %arg13: memref<1x4x8x8xf32, #tpu.memory_space<vmem>>) attributes {dimension_semantics = [#tpu.dimension_semantics<parallel>], iteration_bounds = array<i64: 2>, scalar_prefetch = 0 : i64, scratch_operands = 0 : i64, tpu.core_type = #tpu.core_type<tc>, window_params = [{transform_indices = @transform_0, window_bounds = array<i64: 1, 8, 32>}, {transform_indices = @transform_1, window_bounds = array<i64: 1, 8, 32>}, {transform_indices = @transform_2, window_bounds = array<i64: 1, 1, 8>}, {pipeline_mode = #tpu.pipeline_mode<synchronous>, transform_indices = @transform_3, window_bounds = array<i64: 32, 32>}, {pipeline_mode = #tpu.pipeline_mode<synchronous>, transform_indices = @transform_4, window_bounds = array<i64: 1, 32>}, {pipeline_mode = #tpu.pipeline_mode<synchronous>, transform_indices = @transform_5, window_bounds = array<i64: 32, 64>}, {pipeline_mode = #tpu.pipeline_mode<synchronous>, transform_indices = @transform_6, window_bounds = array<i64: 1, 64>}, {pipeline_mode = #tpu.pipeline_mode<synchronous>, transform_indices = @transform_7, window_bounds = array<i64: 32, 32>}, {pipeline_mode = #tpu.pipeline_mode<synchronous>, transform_indices = @transform_8, window_bounds = array<i64: 1, 32>}, {pipeline_mode = #tpu.pipeline_mode<synchronous>, transform_indices = @transform_9, window_bounds = array<i64: 1, 32>}, {pipeline_mode = #tpu.pipeline_mode<synchronous>, transform_indices = @transform_10, window_bounds = array<i64: 1, 32>}, {transform_indices = @transform_11, window_bounds = array<i64: 1, 8, 32>}, {transform_indices = @transform_12, window_bounds = array<i64: 1, 4, 8, 8>}]} {
    %c0 = arith.constant 0 : index
    %c0_0 = arith.constant 0 : index
    %c0_1 = arith.constant 0 : index
    %0 = vector.load %arg1[%c0, %c0_0, %c0_1] : memref<1x8x32xbf16, #tpu.memory_space<vmem>>, vector<1x8x32xbf16>
    %1 = vector.shape_cast %0 : vector<1x8x32xbf16> to vector<8x32xbf16>
    %c0_2 = arith.constant 0 : index
    %c0_3 = arith.constant 0 : index
    %c0_4 = arith.constant 0 : index
    %2 = vector.load %arg2[%c0_2, %c0_3, %c0_4] : memref<1x8x32xbf16, #tpu.memory_space<vmem>>, vector<1x8x32xbf16>
    %3 = vector.shape_cast %2 : vector<1x8x32xbf16> to vector<8x32xbf16>
    %c0_5 = arith.constant 0 : index
    %c0_6 = arith.constant 0 : index
    %4 = vector.load %arg4[%c0_5, %c0_6] : memref<32x32xbf16, #tpu.memory_space<vmem>>, vector<32x32xbf16>
    %cst = arith.constant dense<0.000000e+00> : vector<8x32xf32>
    %5 = tpu.matmul %1, %4, %cst {dimension_numbers = #tpu.dot_dimension_numbers<[1], [0], [0], [1], [0, 0, 1, 1], [], []>} : vector<8x32xbf16>, vector<32x32xbf16>, vector<8x32xf32> -> vector<8x32xf32>
    %c0_7 = arith.constant 0 : index
    %c0_8 = arith.constant 0 : index
    %6 = vector.load %arg5[%c0_7, %c0_8] : memref<1x32xf32, #tpu.memory_space<vmem>>, vector<1x32xf32>
    %7 = vector.broadcast %6 : vector<1x32xf32> to vector<8x32xf32>
    %8 = arith.addf %5, %7 : vector<8x32xf32>
    %c0_9 = arith.constant 0 : index
    %c0_10 = arith.constant 0 : index
    %9 = vector.load %arg6[%c0_9, %c0_10] : memref<32x64xbf16, #tpu.memory_space<vmem>>, vector<32x64xbf16>
    %cst_11 = arith.constant dense<0.000000e+00> : vector<8x64xf32>
    %10 = tpu.matmul %3, %9, %cst_11 {dimension_numbers = #tpu.dot_dimension_numbers<[1], [0], [0], [1], [0, 0, 1, 1], [], []>} : vector<8x32xbf16>, vector<32x64xbf16>, vector<8x64xf32> -> vector<8x64xf32>
    %c0_12 = arith.constant 0 : index
    %c0_13 = arith.constant 0 : index
    %11 = vector.load %arg7[%c0_12, %c0_13] : memref<1x64xf32, #tpu.memory_space<vmem>>, vector<1x64xf32>
    %12 = vector.broadcast %11 : vector<1x64xf32> to vector<8x64xf32>
    %13 = arith.addf %10, %12 : vector<8x64xf32>
    %14 = vector.extract_strided_slice %13 {offsets = [0, 0], sizes = [8, 32], strides = [1, 1]} : vector<8x64xf32> to vector<8x32xf32>
    %15 = vector.extract_strided_slice %13 {offsets = [0, 32], sizes = [8, 32], strides = [1, 1]} : vector<8x64xf32> to vector<8x32xf32>
    %c0_14 = arith.constant 0 : index
    %c0_15 = arith.constant 0 : index
    %c0_16 = arith.constant 0 : index
    %16 = vector.load %arg3[%c0_14, %c0_15, %c0_16] : memref<1x1x8xf32, #tpu.memory_space<vmem>>, vector<1x1x8xf32>
    %17 = vector.shape_cast %16 : vector<1x1x8xf32> to vector<1x8xf32>
    %cst_17 = arith.constant 0.000000e+00 : f32
    %18 = vector.broadcast %cst_17 : f32 to vector<1x8xf32>
    %19 = arith.cmpf ogt, %17, %18 : vector<1x8xf32>
    %c0_18 = arith.constant 0 : index
    %c0_19 = arith.constant 0 : index
    %20 = vector.load %arg8[%c0_18, %c0_19] : memref<32x32xbf16, #tpu.memory_space<vmem>>, vector<32x32xbf16>
    %c0_20 = arith.constant 0 : index
    %c0_21 = arith.constant 0 : index
    %21 = vector.load %arg9[%c0_20, %c0_21] : memref<1x32xf32, #tpu.memory_space<vmem>>, vector<1x32xf32>
    %22 = arith.extf %1 : vector<8x32xbf16> to vector<8x32xf32>
    %c0_22 = arith.constant 0 : index
    %c0_23 = arith.constant 0 : index
    %23 = vector.load %arg10[%c0_22, %c0_23] : memref<1x32xf32, #tpu.memory_space<vmem>>, vector<1x32xf32>
    %c0_24 = arith.constant 0 : index
    %c0_25 = arith.constant 0 : index
    %24 = vector.load %arg11[%c0_24, %c0_25] : memref<1x32xf32, #tpu.memory_space<vmem>>, vector<1x32xf32>
    %25 = vector.extract_strided_slice %8 {offsets = [0, 0], sizes = [8, 8], strides = [1, 1]} : vector<8x32xf32> to vector<8x8xf32>
    %26 = arith.truncf %25 : vector<8x8xf32> to vector<8x8xbf16>
    %27 = vector.extract_strided_slice %14 {offsets = [0, 0], sizes = [8, 8], strides = [1, 1]} : vector<8x32xf32> to vector<8x8xf32>
    %28 = arith.truncf %27 : vector<8x8xf32> to vector<8x8xbf16>
    %29 = vector.extract_strided_slice %15 {offsets = [0, 0], sizes = [8, 8], strides = [1, 1]} : vector<8x32xf32> to vector<8x8xf32>
    %30 = arith.truncf %29 : vector<8x8xf32> to vector<8x8xbf16>
    %cst_26 = arith.constant dense<0.000000e+00> : vector<8x8xf32>
    %31 = tpu.matmul %26, %28, %cst_26 {dimension_numbers = #tpu.dot_dimension_numbers<[1], [1], [0], [0], [0, 0, 1, 0], [], []>} : vector<8x8xbf16>, vector<8x8xbf16>, vector<8x8xf32> -> vector<8x8xf32>
    %cst_27 = arith.constant -1.000000e+10 : f32
    %32 = vector.shape_cast %19 : vector<1x8xi1> to vector<1x8xi1>
    %33 = vector.broadcast %32 : vector<1x8xi1> to vector<8x8xi1>
    %34 = vector.broadcast %cst_27 : f32 to vector<8x8xf32>
    %35 = arith.select %33, %31, %34 : vector<8x8xi1>, vector<8x8xf32>
    %cst_28 = arith.constant dense<0xFF800000> : vector<8xf32>
    %36 = vector.multi_reduction <maximumf>, %35, %cst_28 [1] : vector<8x8xf32> to vector<8xf32>
    %37 = vector.shape_cast %36 : vector<8xf32> to vector<8x1xf32>
    %38 = vector.broadcast %37 : vector<8x1xf32> to vector<8x8xf32>
    %39 = arith.subf %35, %38 : vector<8x8xf32>
    %40 = math.exp %39 : vector<8x8xf32>
    %cst_29 = arith.constant dense<0.000000e+00> : vector<8xf32>
    %41 = vector.multi_reduction <add>, %40, %cst_29 [1] : vector<8x8xf32> to vector<8xf32>
    %42 = vector.shape_cast %41 : vector<8xf32> to vector<8x1xf32>
    %43 = vector.broadcast %42 : vector<8x1xf32> to vector<8x8xf32>
    %44 = arith.divf %40, %43 : vector<8x8xf32>
    %45 = arith.truncf %44 : vector<8x8xf32> to vector<8x8xbf16>
    %cst_30 = arith.constant dense<0.000000e+00> : vector<8x8xf32>
    %46 = tpu.matmul %45, %30, %cst_30 {dimension_numbers = #tpu.dot_dimension_numbers<[1], [0], [0], [1], [0, 0, 1, 1], [], []>} : vector<8x8xbf16>, vector<8x8xbf16>, vector<8x8xf32> -> vector<8x8xf32>
    %47 = vector.extract_strided_slice %8 {offsets = [0, 8], sizes = [8, 8], strides = [1, 1]} : vector<8x32xf32> to vector<8x8xf32>
    %48 = arith.truncf %47 : vector<8x8xf32> to vector<8x8xbf16>
    %49 = vector.extract_strided_slice %14 {offsets = [0, 8], sizes = [8, 8], strides = [1, 1]} : vector<8x32xf32> to vector<8x8xf32>
    %50 = arith.truncf %49 : vector<8x8xf32> to vector<8x8xbf16>
    %51 = vector.extract_strided_slice %15 {offsets = [0, 8], sizes = [8, 8], strides = [1, 1]} : vector<8x32xf32> to vector<8x8xf32>
    %52 = arith.truncf %51 : vector<8x8xf32> to vector<8x8xbf16>
    %cst_31 = arith.constant dense<0.000000e+00> : vector<8x8xf32>
    %53 = tpu.matmul %48, %50, %cst_31 {dimension_numbers = #tpu.dot_dimension_numbers<[1], [1], [0], [0], [0, 0, 1, 0], [], []>} : vector<8x8xbf16>, vector<8x8xbf16>, vector<8x8xf32> -> vector<8x8xf32>
    %cst_32 = arith.constant -1.000000e+10 : f32
    %54 = vector.shape_cast %19 : vector<1x8xi1> to vector<1x8xi1>
    %55 = vector.broadcast %54 : vector<1x8xi1> to vector<8x8xi1>
    %56 = vector.broadcast %cst_32 : f32 to vector<8x8xf32>
    %57 = arith.select %55, %53, %56 : vector<8x8xi1>, vector<8x8xf32>
    %cst_33 = arith.constant dense<0xFF800000> : vector<8xf32>
    %58 = vector.multi_reduction <maximumf>, %57, %cst_33 [1] : vector<8x8xf32> to vector<8xf32>
    %59 = vector.shape_cast %58 : vector<8xf32> to vector<8x1xf32>
    %60 = vector.broadcast %59 : vector<8x1xf32> to vector<8x8xf32>
    %61 = arith.subf %57, %60 : vector<8x8xf32>
    %62 = math.exp %61 : vector<8x8xf32>
    %cst_34 = arith.constant dense<0.000000e+00> : vector<8xf32>
    %63 = vector.multi_reduction <add>, %62, %cst_34 [1] : vector<8x8xf32> to vector<8xf32>
    %64 = vector.shape_cast %63 : vector<8xf32> to vector<8x1xf32>
    %65 = vector.broadcast %64 : vector<8x1xf32> to vector<8x8xf32>
    %66 = arith.divf %62, %65 : vector<8x8xf32>
    %67 = arith.truncf %66 : vector<8x8xf32> to vector<8x8xbf16>
    %cst_35 = arith.constant dense<0.000000e+00> : vector<8x8xf32>
    %68 = tpu.matmul %67, %52, %cst_35 {dimension_numbers = #tpu.dot_dimension_numbers<[1], [0], [0], [1], [0, 0, 1, 1], [], []>} : vector<8x8xbf16>, vector<8x8xbf16>, vector<8x8xf32> -> vector<8x8xf32>
    %69 = vector.extract_strided_slice %8 {offsets = [0, 16], sizes = [8, 8], strides = [1, 1]} : vector<8x32xf32> to vector<8x8xf32>
    %70 = arith.truncf %69 : vector<8x8xf32> to vector<8x8xbf16>
    %71 = vector.extract_strided_slice %14 {offsets = [0, 16], sizes = [8, 8], strides = [1, 1]} : vector<8x32xf32> to vector<8x8xf32>
    %72 = arith.truncf %71 : vector<8x8xf32> to vector<8x8xbf16>
    %73 = vector.extract_strided_slice %15 {offsets = [0, 16], sizes = [8, 8], strides = [1, 1]} : vector<8x32xf32> to vector<8x8xf32>
    %74 = arith.truncf %73 : vector<8x8xf32> to vector<8x8xbf16>
    %cst_36 = arith.constant dense<0.000000e+00> : vector<8x8xf32>
    %75 = tpu.matmul %70, %72, %cst_36 {dimension_numbers = #tpu.dot_dimension_numbers<[1], [1], [0], [0], [0, 0, 1, 0], [], []>} : vector<8x8xbf16>, vector<8x8xbf16>, vector<8x8xf32> -> vector<8x8xf32>
    %cst_37 = arith.constant -1.000000e+10 : f32
    %76 = vector.shape_cast %19 : vector<1x8xi1> to vector<1x8xi1>
    %77 = vector.broadcast %76 : vector<1x8xi1> to vector<8x8xi1>
    %78 = vector.broadcast %cst_37 : f32 to vector<8x8xf32>
    %79 = arith.select %77, %75, %78 : vector<8x8xi1>, vector<8x8xf32>
    %cst_38 = arith.constant dense<0xFF800000> : vector<8xf32>
    %80 = vector.multi_reduction <maximumf>, %79, %cst_38 [1] : vector<8x8xf32> to vector<8xf32>
    %81 = vector.shape_cast %80 : vector<8xf32> to vector<8x1xf32>
    %82 = vector.broadcast %81 : vector<8x1xf32> to vector<8x8xf32>
    %83 = arith.subf %79, %82 : vector<8x8xf32>
    %84 = math.exp %83 : vector<8x8xf32>
    %cst_39 = arith.constant dense<0.000000e+00> : vector<8xf32>
    %85 = vector.multi_reduction <add>, %84, %cst_39 [1] : vector<8x8xf32> to vector<8xf32>
    %86 = vector.shape_cast %85 : vector<8xf32> to vector<8x1xf32>
    %87 = vector.broadcast %86 : vector<8x1xf32> to vector<8x8xf32>
    %88 = arith.divf %84, %87 : vector<8x8xf32>
    %89 = arith.truncf %88 : vector<8x8xf32> to vector<8x8xbf16>
    %cst_40 = arith.constant dense<0.000000e+00> : vector<8x8xf32>
    %90 = tpu.matmul %89, %74, %cst_40 {dimension_numbers = #tpu.dot_dimension_numbers<[1], [0], [0], [1], [0, 0, 1, 1], [], []>} : vector<8x8xbf16>, vector<8x8xbf16>, vector<8x8xf32> -> vector<8x8xf32>
    %91 = vector.extract_strided_slice %8 {offsets = [0, 24], sizes = [8, 8], strides = [1, 1]} : vector<8x32xf32> to vector<8x8xf32>
    %92 = arith.truncf %91 : vector<8x8xf32> to vector<8x8xbf16>
    %93 = vector.extract_strided_slice %14 {offsets = [0, 24], sizes = [8, 8], strides = [1, 1]} : vector<8x32xf32> to vector<8x8xf32>
    %94 = arith.truncf %93 : vector<8x8xf32> to vector<8x8xbf16>
    %95 = vector.extract_strided_slice %15 {offsets = [0, 24], sizes = [8, 8], strides = [1, 1]} : vector<8x32xf32> to vector<8x8xf32>
    %96 = arith.truncf %95 : vector<8x8xf32> to vector<8x8xbf16>
    %cst_41 = arith.constant dense<0.000000e+00> : vector<8x8xf32>
    %97 = tpu.matmul %92, %94, %cst_41 {dimension_numbers = #tpu.dot_dimension_numbers<[1], [1], [0], [0], [0, 0, 1, 0], [], []>} : vector<8x8xbf16>, vector<8x8xbf16>, vector<8x8xf32> -> vector<8x8xf32>
    %cst_42 = arith.constant -1.000000e+10 : f32
    %98 = vector.shape_cast %19 : vector<1x8xi1> to vector<1x8xi1>
    %99 = vector.broadcast %98 : vector<1x8xi1> to vector<8x8xi1>
    %100 = vector.broadcast %cst_42 : f32 to vector<8x8xf32>
    %101 = arith.select %99, %97, %100 : vector<8x8xi1>, vector<8x8xf32>
    %cst_43 = arith.constant dense<0xFF800000> : vector<8xf32>
    %102 = vector.multi_reduction <maximumf>, %101, %cst_43 [1] : vector<8x8xf32> to vector<8xf32>
    %103 = vector.shape_cast %102 : vector<8xf32> to vector<8x1xf32>
    %104 = vector.broadcast %103 : vector<8x1xf32> to vector<8x8xf32>
    %105 = arith.subf %101, %104 : vector<8x8xf32>
    %106 = math.exp %105 : vector<8x8xf32>
    %cst_44 = arith.constant dense<0.000000e+00> : vector<8xf32>
    %107 = vector.multi_reduction <add>, %106, %cst_44 [1] : vector<8x8xf32> to vector<8xf32>
    %108 = vector.shape_cast %107 : vector<8xf32> to vector<8x1xf32>
    %109 = vector.broadcast %108 : vector<8x1xf32> to vector<8x8xf32>
    %110 = arith.divf %106, %109 : vector<8x8xf32>
    %111 = arith.truncf %110 : vector<8x8xf32> to vector<8x8xbf16>
    %cst_45 = arith.constant dense<0.000000e+00> : vector<8x8xf32>
    %112 = tpu.matmul %111, %96, %cst_45 {dimension_numbers = #tpu.dot_dimension_numbers<[1], [0], [0], [1], [0, 0, 1, 1], [], []>} : vector<8x8xbf16>, vector<8x8xbf16>, vector<8x8xf32> -> vector<8x8xf32>
    %113 = tpu.concatenate %46, %68, %90, %112 in 1 : vector<8x8xf32>, vector<8x8xf32>, vector<8x8xf32>, vector<8x8xf32> -> vector<8x32xf32>
    %114 = arith.truncf %113 : vector<8x32xf32> to vector<8x32xbf16>
    %cst_46 = arith.constant dense<0.000000e+00> : vector<8x32xf32>
    %115 = tpu.matmul %114, %20, %cst_46 {dimension_numbers = #tpu.dot_dimension_numbers<[1], [0], [0], [1], [0, 0, 1, 1], [], []>} : vector<8x32xbf16>, vector<32x32xbf16>, vector<8x32xf32> -> vector<8x32xf32>
    %116 = vector.broadcast %21 : vector<1x32xf32> to vector<8x32xf32>
    %117 = arith.addf %115, %116 : vector<8x32xf32>
    %118 = arith.addf %22, %117 : vector<8x32xf32>
    %cst_47 = arith.constant dense<0.000000e+00> : vector<8xf32>
    %119 = vector.multi_reduction <add>, %118, %cst_47 [1] : vector<8x32xf32> to vector<8xf32>
    %120 = vector.shape_cast %119 : vector<8xf32> to vector<8x1xf32>
    %cst_48 = arith.constant 3.200000e+01 : f32
    %121 = vector.broadcast %cst_48 : f32 to vector<8x1xf32>
    %122 = arith.divf %120, %121 : vector<8x1xf32>
    %123 = vector.broadcast %122 : vector<8x1xf32> to vector<8x32xf32>
    %124 = arith.subf %118, %123 : vector<8x32xf32>
    %125 = arith.mulf %124, %124 : vector<8x32xf32>
    %cst_49 = arith.constant dense<0.000000e+00> : vector<8xf32>
    %126 = vector.multi_reduction <add>, %125, %cst_49 [1] : vector<8x32xf32> to vector<8xf32>
    %127 = vector.shape_cast %126 : vector<8xf32> to vector<8x1xf32>
    %cst_50 = arith.constant 3.200000e+01 : f32
    %128 = vector.broadcast %cst_50 : f32 to vector<8x1xf32>
    %129 = arith.divf %127, %128 : vector<8x1xf32>
    %130 = vector.broadcast %122 : vector<8x1xf32> to vector<8x32xf32>
    %131 = arith.subf %118, %130 : vector<8x32xf32>
    %cst_51 = arith.constant 9.99999974E-6 : f32
    %132 = vector.broadcast %cst_51 : f32 to vector<8x1xf32>
    %133 = arith.addf %129, %132 : vector<8x1xf32>
    %134 = math.rsqrt %133 : vector<8x1xf32>
    %135 = vector.broadcast %134 : vector<8x1xf32> to vector<8x32xf32>
    %136 = arith.mulf %131, %135 : vector<8x32xf32>
    %137 = vector.broadcast %23 : vector<1x32xf32> to vector<8x32xf32>
    %138 = arith.mulf %136, %137 : vector<8x32xf32>
    %139 = vector.broadcast %24 : vector<1x32xf32> to vector<8x32xf32>
    %140 = arith.addf %138, %139 : vector<8x32xf32>
    %141 = arith.truncf %140 : vector<8x32xf32> to vector<8x32xbf16>
    %c0_52 = arith.constant 0 : index
    %c0_53 = arith.constant 0 : index
    %c0_54 = arith.constant 0 : index
    %142 = vector.load %arg12[%c0_52, %c0_53, %c0_54] : memref<1x8x32xbf16, #tpu.memory_space<vmem>>, vector<1x8x32xbf16>
    %143 = vector.shape_cast %142 : vector<1x8x32xbf16> to vector<8x32xbf16>
    %144 = vector.shape_cast %141 : vector<8x32xbf16> to vector<1x8x32xbf16>
    tpu.vector_store %arg12[%c0_52, %c0_53, %c0_54], %144 {strides = array<i32>} : memref<1x8x32xbf16, #tpu.memory_space<vmem>>, vector<1x8x32xbf16>,
    %c0_55 = arith.constant 0 : index
    %c0_56 = arith.constant 0 : index
    %c0_57 = arith.constant 0 : index
    %c0_58 = arith.constant 0 : index
    %145 = vector.load %arg13[%c0_55, %c0_56, %c0_57, %c0_58] : memref<1x4x8x8xf32, #tpu.memory_space<vmem>>, vector<1x1x8x8xf32>
    %146 = vector.shape_cast %145 : vector<1x1x8x8xf32> to vector<8x8xf32>
    %147 = vector.shape_cast %44 : vector<8x8xf32> to vector<1x1x8x8xf32>
    tpu.vector_store %arg13[%c0_55, %c0_56, %c0_57, %c0_58], %147 {strides = array<i32>} : memref<1x4x8x8xf32, #tpu.memory_space<vmem>>, vector<1x1x8x8xf32>,
    %c0_59 = arith.constant 0 : index
    %c1 = arith.constant 1 : index
    %c0_60 = arith.constant 0 : index
    %c0_61 = arith.constant 0 : index
    %148 = vector.load %arg13[%c0_59, %c1, %c0_60, %c0_61] : memref<1x4x8x8xf32, #tpu.memory_space<vmem>>, vector<1x1x8x8xf32>
    %149 = vector.shape_cast %148 : vector<1x1x8x8xf32> to vector<8x8xf32>
    %150 = vector.shape_cast %66 : vector<8x8xf32> to vector<1x1x8x8xf32>
    tpu.vector_store %arg13[%c0_59, %c1, %c0_60, %c0_61], %150 {strides = array<i32>} : memref<1x4x8x8xf32, #tpu.memory_space<vmem>>, vector<1x1x8x8xf32>,
    %c0_62 = arith.constant 0 : index
    %c2 = arith.constant 2 : index
    %c0_63 = arith.constant 0 : index
    %c0_64 = arith.constant 0 : index
    %151 = vector.load %arg13[%c0_62, %c2, %c0_63, %c0_64] : memref<1x4x8x8xf32, #tpu.memory_space<vmem>>, vector<1x1x8x8xf32>
    %152 = vector.shape_cast %151 : vector<1x1x8x8xf32> to vector<8x8xf32>
    %153 = vector.shape_cast %88 : vector<8x8xf32> to vector<1x1x8x8xf32>
    tpu.vector_store %arg13[%c0_62, %c2, %c0_63, %c0_64], %153 {strides = array<i32>} : memref<1x4x8x8xf32, #tpu.memory_space<vmem>>, vector<1x1x8x8xf32>,
    %c0_65 = arith.constant 0 : index
    %c3 = arith.constant 3 : index
    %c0_66 = arith.constant 0 : index
    %c0_67 = arith.constant 0 : index
    %154 = vector.load %arg13[%c0_65, %c3, %c0_66, %c0_67] : memref<1x4x8x8xf32, #tpu.memory_space<vmem>>, vector<1x1x8x8xf32>
    %155 = vector.shape_cast %154 : vector<1x1x8x8xf32> to vector<8x8xf32>
    %156 = vector.shape_cast %110 : vector<8x8xf32> to vector<1x1x8x8xf32>
    tpu.vector_store %arg13[%c0_65, %c3, %c0_66, %c0_67], %156 {strides = array<i32>} : memref<1x4x8x8xf32, #tpu.memory_space<vmem>>, vector<1x1x8x8xf32>,
    return
  }
  func.func @transform_0(%arg0: i32) -> (i32, i32, i32) {
    %c0_i32 = arith.constant 0 : i32
    %c0_i32_0 = arith.constant 0 : i32
    %c0_i32_1 = arith.constant 0 : i32
    return %arg0, %c0_i32, %c0_i32_0 : i32, i32, i32
  }
  func.func @transform_1(%arg0: i32) -> (i32, i32, i32) {
    %c0_i32 = arith.constant 0 : i32
    %c0_i32_0 = arith.constant 0 : i32
    %c0_i32_1 = arith.constant 0 : i32
    return %arg0, %c0_i32, %c0_i32_0 : i32, i32, i32
  }
  func.func @transform_2(%arg0: i32) -> (i32, i32, i32) {
    %c0_i32 = arith.constant 0 : i32
    %c0_i32_0 = arith.constant 0 : i32
    %c0_i32_1 = arith.constant 0 : i32
    return %arg0, %c0_i32, %c0_i32_0 : i32, i32, i32
  }
  func.func @transform_3(%arg0: i32) -> (i32, i32) {
    %c0_i32 = arith.constant 0 : i32
    %c0_i32_0 = arith.constant 0 : i32
    %c0_i32_1 = arith.constant 0 : i32
    return %c0_i32, %c0_i32_0 : i32, i32
  }
  func.func @transform_4(%arg0: i32) -> (i32, i32) {
    %c0_i32 = arith.constant 0 : i32
    %c0_i32_0 = arith.constant 0 : i32
    %c0_i32_1 = arith.constant 0 : i32
    return %c0_i32, %c0_i32_0 : i32, i32
  }
  func.func @transform_5(%arg0: i32) -> (i32, i32) {
    %c0_i32 = arith.constant 0 : i32
    %c0_i32_0 = arith.constant 0 : i32
    %c0_i32_1 = arith.constant 0 : i32
    return %c0_i32, %c0_i32_0 : i32, i32
  }
  func.func @transform_6(%arg0: i32) -> (i32, i32) {
    %c0_i32 = arith.constant 0 : i32
    %c0_i32_0 = arith.constant 0 : i32
    %c0_i32_1 = arith.constant 0 : i32
    return %c0_i32, %c0_i32_0 : i32, i32
  }
  func.func @transform_7(%arg0: i32) -> (i32, i32) {
    %c0_i32 = arith.constant 0 : i32
    %c0_i32_0 = arith.constant 0 : i32
    %c0_i32_1 = arith.constant 0 : i32
    return %c0_i32, %c0_i32_0 : i32, i32
  }
  func.func @transform_8(%arg0: i32) -> (i32, i32) {
    %c0_i32 = arith.constant 0 : i32
    %c0_i32_0 = arith.constant 0 : i32
    %c0_i32_1 = arith.constant 0 : i32
    return %c0_i32, %c0_i32_0 : i32, i32
  }
  func.func @transform_9(%arg0: i32) -> (i32, i32) {
    %c0_i32 = arith.constant 0 : i32
    %c0_i32_0 = arith.constant 0 : i32
    %c0_i32_1 = arith.constant 0 : i32
    return %c0_i32, %c0_i32_0 : i32, i32
  }
  func.func @transform_10(%arg0: i32) -> (i32, i32) {
    %c0_i32 = arith.constant 0 : i32
    %c0_i32_0 = arith.constant 0 : i32
    %c0_i32_1 = arith.constant 0 : i32
    return %c0_i32, %c0_i32_0 : i32, i32
  }
  func.func @transform_11(%arg0: i32) -> (i32, i32, i32) {
    %c0_i32 = arith.constant 0 : i32
    %c0_i32_0 = arith.constant 0 : i32
    %c0_i32_1 = arith.constant 0 : i32
    return %arg0, %c0_i32, %c0_i32_0 : i32, i32, i32
  }
  func.func @transform_12(%arg0: i32) -> (i32, i32, i32, i32) {
    %c0_i32 = arith.constant 0 : i32
    %c0_i32_0 = arith.constant 0 : i32
    %c0_i32_1 = arith.constant 0 : i32
    %c0_i32_2 = arith.constant 0 : i32
    return %arg0, %c0_i32, %c0_i32_0, %c0_i32_1 : i32, i32, i32, i32
  }
}

module attributes {stable_mosaic.version = 11 : i64} {
  func.func @_linear_kernel(%arg0: i32, %arg1: i32, %arg2: memref<16x32xbf16, #tpu.memory_space<vmem>>, %arg3: memref<32x50xbf16, #tpu.memory_space<vmem>>, %arg4: memref<1x50xf32, #tpu.memory_space<vmem>>, %arg5: memref<16x50xf32, #tpu.memory_space<vmem>>) attributes {dimension_semantics = [#tpu.dimension_semantics<parallel>, #tpu.dimension_semantics<parallel>], iteration_bounds = array<i64: 1, 1>, scalar_prefetch = 0 : i64, scratch_operands = 0 : i64, tpu.core_type = #tpu.core_type<tc>, window_params = [{transform_indices = @transform_0, window_bounds = array<i64: 16, 32>}, {transform_indices = @transform_1, window_bounds = array<i64: 32, 50>}, {transform_indices = @transform_2, window_bounds = array<i64: 1, 50>}, {transform_indices = @transform_3, window_bounds = array<i64: 16, 50>}]} {
    %c0 = arith.constant 0 : index
    %c0_0 = arith.constant 0 : index
    %0 = vector.load %arg2[%c0, %c0_0] : memref<16x32xbf16, #tpu.memory_space<vmem>>, vector<16x32xbf16>
    %c0_1 = arith.constant 0 : index
    %c0_2 = arith.constant 0 : index
    %1 = vector.load %arg3[%c0_1, %c0_2] : memref<32x50xbf16, #tpu.memory_space<vmem>>, vector<32x50xbf16>
    %cst = arith.constant dense<0.000000e+00> : vector<16x50xf32>
    %2 = tpu.matmul %0, %1, %cst {dimension_numbers = #tpu.dot_dimension_numbers<[1], [0], [0], [1], [0, 0, 1, 1], [], []>} : vector<16x32xbf16>, vector<32x50xbf16>, vector<16x50xf32> -> vector<16x50xf32>
    %c0_3 = arith.constant 0 : index
    %c0_4 = arith.constant 0 : index
    %3 = vector.load %arg4[%c0_3, %c0_4] : memref<1x50xf32, #tpu.memory_space<vmem>>, vector<1x50xf32>
    %4 = vector.broadcast %3 : vector<1x50xf32> to vector<16x50xf32>
    %5 = arith.addf %2, %4 : vector<16x50xf32>
    %c0_5 = arith.constant 0 : index
    %c0_6 = arith.constant 0 : index
    %6 = vector.load %arg5[%c0_5, %c0_6] : memref<16x50xf32, #tpu.memory_space<vmem>>, vector<16x50xf32>
    tpu.vector_store %arg5[%c0_5, %c0_6], %5 {strides = array<i32>} : memref<16x50xf32, #tpu.memory_space<vmem>>, vector<16x50xf32>,
    return
  }
  func.func @transform_0(%arg0: i32, %arg1: i32) -> (i32, i32) {
    %c0_i32 = arith.constant 0 : i32
    %c0_i32_0 = arith.constant 0 : i32
    return %arg0, %c0_i32 : i32, i32
  }
  func.func @transform_1(%arg0: i32, %arg1: i32) -> (i32, i32) {
    %c0_i32 = arith.constant 0 : i32
    %c0_i32_0 = arith.constant 0 : i32
    return %c0_i32, %arg1 : i32, i32
  }
  func.func @transform_2(%arg0: i32, %arg1: i32) -> (i32, i32) {
    %c0_i32 = arith.constant 0 : i32
    %c0_i32_0 = arith.constant 0 : i32
    return %c0_i32, %arg1 : i32, i32
  }
  func.func @transform_3(%arg0: i32, %arg1: i32) -> (i32, i32) {
    %c0_i32 = arith.constant 0 : i32
    return %arg0, %arg1 : i32, i32
  }
}

</mosaic_0001>

<llo_original>
// kernel: decoder_forward.7
$region0: #{decoder_forward.7}
  #allocation0 [shape = 'u32[]', space=smem, size = 0x4, offset = 0x4, fixed_abs, tag = 'smem constant byte address 0x4 - core index']
  #allocation1 [shape = 'u32[72,128]{1,0:T(1,128)}', space=vmem, size = 0x9000, scoped, tag = 'internal scratch']
  %s0 = inlined_call_operand.vmem [shape: bf16[2,8,32], index: 0, kind: input, shape index: {}]
  %s1 = inlined_call_operand.vmem [shape: f32[2,1,8], index: 1, kind: input, shape index: {}]
  %s2 = inlined_call_operand.vmem [shape: bf16[32,96], index: 2, kind: input, shape index: {}]
  %s3 = inlined_call_operand.vmem [shape: f32[1,96], index: 3, kind: input, shape index: {}]
  %s4 = inlined_call_operand.vmem [shape: bf16[32,32], index: 4, kind: input, shape index: {}]
  %s5 = inlined_call_operand.vmem [shape: f32[1,32], index: 5, kind: input, shape index: {}]
  %s6 = inlined_call_operand.vmem [shape: f32[1,32], index: 6, kind: input, shape index: {}]
  %s7 = inlined_call_operand.vmem [shape: f32[1,32], index: 7, kind: input, shape index: {}]
  %s8 = inlined_call_operand.vmem [shape: bf16[2,8,32], index: 8, kind: output, shape index: {}]
  %s9 = sld [smem:[#allocation0]]
  $region65: #{decoder_forward.7} parent=0
    _
  %s11 = ssub.s32 1, %s9
  %s12 = scalar_select 0, %s11, %s9
  loop: start=0, step=1, limit=4
  $region2: #{decoder_forward.7} parent=0 // loop_pre_header
    _
  $region3: #{decoder_forward.7} parent=0 // loop_header
    %s14 = sphi 0, %s18
    %p15 = scmp.ge.s32.totalorder %s14, 4
    %s24 = sphi 0, %s26
    %s27 = sphi 0, %s24
    %s28 = sphi 0, %s27
    %s44 = sphi 0, %s28
    %s50 = sphi 0, %s52
    %s53 = sphi 0, %s50
    %s54 = sphi 0, %s53
    %s70 = sphi 0, %s54
    %s74 = sphi 0, %s74
    %s76 = sphi 0, %s74
    %s77 = sphi 0, %s76
    %s91 = sphi 0, %s77
    %s95 = sphi 0, %s95
    %s97 = sphi 0, %s95
    %s98 = sphi 0, %s97
    %s112 = sphi 0, %s98
    %s116 = sphi 0, %s116
    %s118 = sphi 0, %s116
    %s119 = sphi 0, %s118
    %s133 = sphi 0, %s119
    %s137 = sphi 0, %s137
    %s139 = sphi 0, %s137
    %s140 = sphi 0, %s139
    %s154 = sphi 0, %s140
    %s158 = sphi 0, %s158
    %s160 = sphi 0, %s158
    %s161 = sphi 0, %s160
    %s175 = sphi 0, %s161
    %s179 = sphi 0, %s179
    %s181 = sphi 0, %s179
    %s182 = sphi 0, %s181
    %s196 = sphi 0, %s182
    %s202 = sphi 0, %s204
    %s205 = sphi 0, %s202
    %s206 = sphi 0, %s205
    %s222 = sphi 0, %s206
  $region4: #{decoder_forward.7} parent=0 // loop_header_branch
    %17 = sbr.rel (%p15) target = $region8
  $region5: #{decoder_forward.7} parent=0 // loop_body
    %s19 = ssub.s32 %s14, 1
    %s20 = ssub.s32 %s14, 2
    %s21 = sadd.s32 %s14, 1
    %s22 = ssub.s32 %s14, %s21
    %p23 = scmp.eq.s32.totalorder %s22, 0
    %s25 = sadd.s32 %s24, 1
    %s26 = scalar_select %p23, %s24, %s25
    %p29 = pneg %p23
    %p30 = scmp.eq.s32.totalorder %s14, 1
    %p31 = por %p29, %p30
    %p32 = scmp.ne.s32.totalorder %s24, %s27
    %p33 = scmp.eq.s32.totalorder %s14, 0
    %p34 = por %p32, %p33
    %p35 = scmp.ne.s32.totalorder %s24, %s27
    %p36 = scmp.eq.s32.totalorder %s19, 1
    %p37 = por %p35, %p36
    %p38 = scmp.ne.s32.totalorder %s27, %s28
    %p39 = scmp.eq.s32.totalorder %s19, 0
    %p40 = por %p38, %p39
    %p41 = scmp.ne.s32.totalorder %s27, %s28
    %p42 = scmp.eq.s32.totalorder %s20, 1
    %p43 = por %p41, %p42
    %p45 = scmp.ne.s32.totalorder %s28, %s44
    %p46 = scmp.eq.s32.totalorder %s20, 0
    %p47 = por %p45, %p46
    %s48 = ssub.s32 %s14, %s21
    %p49 = scmp.eq.s32.totalorder %s48, 0
    %s51 = sadd.s32 %s50, 1
    %s52 = scalar_select %p49, %s50, %s51
    %p55 = pneg %p49
    %p56 = scmp.eq.s32.totalorder %s14, 1
    %p57 = por %p55, %p56
    %p58 = scmp.ne.s32.totalorder %s50, %s53
    %p59 = scmp.eq.s32.totalorder %s14, 0
    %p60 = por %p58, %p59
    %p61 = scmp.ne.s32.totalorder %s50, %s53
    %p62 = scmp.eq.s32.totalorder %s19, 1
    %p63 = por %p61, %p62
    %p64 = scmp.ne.s32.totalorder %s53, %s54
    %p65 = scmp.eq.s32.totalorder %s19, 0
    %p66 = por %p64, %p65
    %p67 = scmp.ne.s32.totalorder %s53, %s54
    %p68 = scmp.eq.s32.totalorder %s20, 1
    %p69 = por %p67, %p68
    %p71 = scmp.ne.s32.totalorder %s54, %s70
    %p72 = scmp.eq.s32.totalorder %s20, 0
    %p73 = por %p71, %p72
    %s75 = sadd.s32 %s74, 1
    %p78 = scmp.eq.s32.totalorder %s14, 1
    %p79 = scmp.ne.s32.totalorder %s74, %s76
    %p80 = scmp.eq.s32.totalorder %s14, 0
    %p81 = por %p79, %p80
    %p82 = scmp.ne.s32.totalorder %s74, %s76
    %p83 = scmp.eq.s32.totalorder %s19, 1
    %p84 = por %p82, %p83
    %p85 = scmp.ne.s32.totalorder %s76, %s77
    %p86 = scmp.eq.s32.totalorder %s19, 0
    %p87 = por %p85, %p86
    %p88 = scmp.ne.s32.totalorder %s76, %s77
    %p89 = scmp.eq.s32.totalorder %s20, 1
    %p90 = por %p88, %p89
    %p92 = scmp.ne.s32.totalorder %s77, %s91
    %p93 = scmp.eq.s32.totalorder %s20, 0
    %p94 = por %p92, %p93
    %s96 = sadd.s32 %s95, 1
    %p99 = scmp.eq.s32.totalorder %s14, 1
    %p100 = scmp.ne.s32.totalorder %s95, %s97
    %p101 = scmp.eq.s32.totalorder %s14, 0
    %p102 = por %p100, %p101
    %p103 = scmp.ne.s32.totalorder %s95, %s97
    %p104 = scmp.eq.s32.totalorder %s19, 1
    %p105 = por %p103, %p104
    %p106 = scmp.ne.s32.totalorder %s97, %s98
    %p107 = scmp.eq.s32.totalorder %s19, 0
    %p108 = por %p106, %p107
    %p109 = scmp.ne.s32.totalorder %s97, %s98
    %p110 = scmp.eq.s32.totalorder %s20, 1
    %p111 = por %p109, %p110
    %p113 = scmp.ne.s32.totalorder %s98, %s112
    %p114 = scmp.eq.s32.totalorder %s20, 0
    %p115 = por %p113, %p114
    %s117 = sadd.s32 %s116, 1
    %p120 = scmp.eq.s32.totalorder %s14, 1
    %p121 = scmp.ne.s32.totalorder %s116, %s118
    %p122 = scmp.eq.s32.totalorder %s14, 0
    %p123 = por %p121, %p122
    %p124 = scmp.ne.s32.totalorder %s116, %s118
    %p125 = scmp.eq.s32.totalorder %s19, 1
    %p126 = por %p124, %p125
    %p127 = scmp.ne.s32.totalorder %s118, %s119
    %p128 = scmp.eq.s32.totalorder %s19, 0
    %p129 = por %p127, %p128
    %p130 = scmp.ne.s32.totalorder %s118, %s119
    %p131 = scmp.eq.s32.totalorder %s20, 1
    %p132 = por %p130, %p131
    %p134 = scmp.ne.s32.totalorder %s119, %s133
    %p135 = scmp.eq.s32.totalorder %s20, 0
    %p136 = por %p134, %p135
    %s138 = sadd.s32 %s137, 1
    %p141 = scmp.eq.s32.totalorder %s14, 1
    %p142 = scmp.ne.s32.totalorder %s137, %s139
    %p143 = scmp.eq.s32.totalorder %s14, 0
    %p144 = por %p142, %p143
    %p145 = scmp.ne.s32.totalorder %s137, %s139
    %p146 = scmp.eq.s32.totalorder %s19, 1
    %p147 = por %p145, %p146
    %p148 = scmp.ne.s32.totalorder %s139, %s140
    %p149 = scmp.eq.s32.totalorder %s19, 0
    %p150 = por %p148, %p149
    %p151 = scmp.ne.s32.totalorder %s139, %s140
    %p152 = scmp.eq.s32.totalorder %s20, 1
    %p153 = por %p151, %p152
    %p155 = scmp.ne.s32.totalorder %s140, %s154
    %p156 = scmp.eq.s32.totalorder %s20, 0
    %p157 = por %p155, %p156
    %s159 = sadd.s32 %s158, 1
    %p162 = scmp.eq.s32.totalorder %s14, 1
    %p163 = scmp.ne.s32.totalorder %s158, %s160
    %p164 = scmp.eq.s32.totalorder %s14, 0
    %p165 = por %p163, %p164
    %p166 = scmp.ne.s32.totalorder %s158, %s160
    %p167 = scmp.eq.s32.totalorder %s19, 1
    %p168 = por %p166, %p167
    %p169 = scmp.ne.s32.totalorder %s160, %s161
    %p170 = scmp.eq.s32.totalorder %s19, 0
    %p171 = por %p169, %p170
    %p172 = scmp.ne.s32.totalorder %s160, %s161
    %p173 = scmp.eq.s32.totalorder %s20, 1
    %p174 = por %p172, %p173
    %p176 = scmp.ne.s32.totalorder %s161, %s175
    %p177 = scmp.eq.s32.totalorder %s20, 0
    %p178 = por %p176, %p177
    %s180 = sadd.s32 %s179, 1
    %p183 = scmp.eq.s32.totalorder %s14, 1
    %p184 = scmp.ne.s32.totalorder %s179, %s181
    %p185 = scmp.eq.s32.totalorder %s14, 0
    %p186 = por %p184, %p185
    %p187 = scmp.ne.s32.totalorder %s179, %s181
    %p188 = scmp.eq.s32.totalorder %s19, 1
    %p189 = por %p187, %p188
    %p190 = scmp.ne.s32.totalorder %s181, %s182
    %p191 = scmp.eq.s32.totalorder %s19, 0
    %p192 = por %p190, %p191
    %p193 = scmp.ne.s32.totalorder %s181, %s182
    %p194 = scmp.eq.s32.totalorder %s20, 1
    %p195 = por %p193, %p194
    %p197 = scmp.ne.s32.totalorder %s182, %s196
    %p198 = scmp.eq.s32.totalorder %s20, 0
    %p199 = por %p197, %p198
    %s200 = ssub.s32 %s14, %s21
    %p201 = scmp.eq.s32.totalorder %s200, 0
    %s203 = sadd.s32 %s202, 1
    %s204 = scalar_select %p201, %s202, %s203
    %p207 = pneg %p201
    %p208 = scmp.eq.s32.totalorder %s14, 1
    %p209 = por %p207, %p208
    %p210 = scmp.ne.s32.totalorder %s202, %s205
    %p211 = scmp.eq.s32.totalorder %s14, 0
    %p212 = por %p210, %p211
    %p213 = scmp.ne.s32.totalorder %s202, %s205
    %p214 = scmp.eq.s32.totalorder %s19, 1
    %p215 = por %p213, %p214
    %p216 = scmp.ne.s32.totalorder %s205, %s206
    %p217 = scmp.eq.s32.totalorder %s19, 0
    %p218 = por %p216, %p217
    %p219 = scmp.ne.s32.totalorder %s205, %s206
    %p220 = scmp.eq.s32.totalorder %s20, 1
    %p221 = por %p219, %p220
    %p223 = scmp.ne.s32.totalorder %s206, %s222
    %p224 = scmp.eq.s32.totalorder %s20, 0
    %p225 = por %p223, %p224
    %p226 = scmp.le.s32.totalorder 1, %s14
    %p227 = scmp.lt.s32.totalorder %s14, 3
    %p228 = pnand %p226, %p227
    %p229 = pneg %p228
    // Predicated region
    $region9: #{decoder_forward.7} parent=5 // pred_check
      _
    $region10: #{decoder_forward.7} parent=5 // pred_check_branch
      %231 = sbr.rel (%p228) target = $region12
    $region11: #{decoder_forward.7} parent=5 // pred_region
      %s232 = ssub.s32 %s14, 1
      // Predicated region
      $region13: #{decoder_forward.7} parent=11 // pred_check
        %p233 = pneg %p87
      $region14: #{decoder_forward.7} parent=11 // pred_check_branch
        %235 = sbr.rel (%p233) target = $region16
      $region15: #{decoder_forward.7} parent=11 // pred_region
        _
      $region16: #{decoder_forward.7} parent=11 // pred_fallthru
        _
      // Predicated region
      $region17: #{decoder_forward.7} parent=11 // pred_check
        %p236 = pneg %p108
      $region18: #{decoder_forward.7} parent=11 // pred_check_branch
        %238 = sbr.rel (%p236) target = $region20
      $region19: #{decoder_forward.7} parent=11 // pred_region
        _
      $region20: #{decoder_forward.7} parent=11 // pred_fallthru
        _
      // Predicated region
      $region21: #{decoder_forward.7} parent=11 // pred_check
        %p239 = pneg %p129
      $region22: #{decoder_forward.7} parent=11 // pred_check_branch
        %241 = sbr.rel (%p239) target = $region24
      $region23: #{decoder_forward.7} parent=11 // pred_region
        _
      $region24: #{decoder_forward.7} parent=11 // pred_fallthru
        _
      // Predicated region
      $region25: #{decoder_forward.7} parent=11 // pred_check
        %p242 = pneg %p150
      $region26: #{decoder_forward.7} parent=11 // pred_check_branch
        %244 = sbr.rel (%p242) target = $region28
      $region27: #{decoder_forward.7} parent=11 // pred_region
        _
      $region28: #{decoder_forward.7} parent=11 // pred_fallthru
        _
      // Predicated region
      $region29: #{decoder_forward.7} parent=11 // pred_check
        %p245 = pneg %p171
      $region30: #{decoder_forward.7} parent=11 // pred_check_branch
        %247 = sbr.rel (%p245) target = $region32
      $region31: #{decoder_forward.7} parent=11 // pred_region
        _
      $region32: #{decoder_forward.7} parent=11 // pred_fallthru
        _
      // Predicated region
      $region33: #{decoder_forward.7} parent=11 // pred_check
        %p248 = pneg %p192
      $region34: #{decoder_forward.7} parent=11 // pred_check_branch
        %250 = sbr.rel (%p248) target = $region36
      $region35: #{decoder_forward.7} parent=11 // pred_region
        _
      $region36: #{decoder_forward.7} parent=11 // pred_fallthru
        _
    $region12: #{decoder_forward.7} parent=5 // pred_fallthru
      _
    %p251 = scmp.lt.s32.totalorder %s14, 2
    // Predicated region
    $region37: #{decoder_forward.7} parent=5 // pred_check
      %p252 = pneg %p251
    $region38: #{decoder_forward.7} parent=5 // pred_check_branch
      %254 = sbr.rel (%p252) target = $region40
    $region39: #{decoder_forward.7} parent=5 // pred_region
      // Predicated region
      $region41: #{decoder_forward.7} parent=39 // pred_check
        %p255 = pneg %p34
      $region42: #{decoder_forward.7} parent=39 // pred_check_branch
        %257 = sbr.rel (%p255) target = $region44
      $region43: #{decoder_forward.7} parent=39 // pred_region
        %p258 = scmp.lt.s32.totalorder %s14, 1
        %s259 = scalar_select %p258, %s14, 1
        %s260 = smul.addr %s259, 4
        %s261 = scalar_lea.vmem %s0, %s260
      $region44: #{decoder_forward.7} parent=39 // pred_fallthru
        _
      // Predicated region
      $region45: #{decoder_forward.7} parent=39 // pred_check
        %p262 = pneg %p60
      $region46: #{decoder_forward.7} parent=39 // pred_check_branch
        %264 = sbr.rel (%p262) target = $region48
      $region47: #{decoder_forward.7} parent=39 // pred_region
        %p265 = scmp.lt.s32.totalorder %s14, 1
        %s266 = scalar_select %p265, %s14, 1
        %s267 = scalar_lea.vmem %s1, %s266
      $region48: #{decoder_forward.7} parent=39 // pred_fallthru
        _
    $region40: #{decoder_forward.7} parent=5 // pred_fallthru
      _
    %p268 = scmp.le.s32.totalorder 1, %s14
    %p269 = scmp.lt.s32.totalorder %s14, 3
    %p270 = pnand %p268, %p269
    %p271 = pneg %p270
    // Predicated region
    $region49: #{decoder_forward.7} parent=5 // pred_check
      _
    $region50: #{decoder_forward.7} parent=5 // pred_check_branch
      %273 = sbr.rel (%p270) target = $region52
    $region51: #{decoder_forward.7} parent=5 // pred_region
      %s274 = ssub.s32 %s14, 1
      %p275 = scmp.lt.s32.totalorder %s19, 1
      %s276 = scalar_select %p275, %s19, 1
      %s277 = smul.addr %s276, 4
      %s278 = scalar_lea.vmem %s0, %s277
      %p279 = pneg %p40
      %p280 = pneg %p37
      %p281 = scmp.lt.s32.totalorder %s19, 1
      %s282 = scalar_select %p281, %s19, 1
      %s283 = scalar_lea.vmem %s1, %s282
      %p284 = pneg %p66
      %p285 = pneg %p63
      %p286 = pneg %p87
      %p287 = pneg %p84
      %p288 = pneg %p108
      %p289 = pneg %p105
      %p290 = pneg %p129
      %p291 = pneg %p126
      %p292 = pneg %p150
      %p293 = pneg %p147
      %p294 = pneg %p171
      %p295 = pneg %p168
      %p296 = pneg %p192
      %p297 = pneg %p189
      %p298 = pneg %p218
      %p299 = pneg %p215
      %p300 = scmp.lt.s32.totalorder %s19, 1
      %s301 = scalar_select %p300, %s19, 1
      %s302 = smul.addr %s301, 4
      %s303 = scalar_lea.vmem %s8, %s302
      %p304 = scmp.lt.s32.totalorder %s19, 1
      %s305 = scalar_select %p304, %s19, 1
      %s306 = smul.addr %s305, 4
      %s307 = scalar_lea.vmem %s0, %s306
      %p308 = scmp.lt.s32.totalorder %s19, 1
      %s309 = scalar_select %p308, %s19, 1
      %s310 = scalar_lea.vmem %s1, %s309
      %p311 = scmp.lt.s32.totalorder %s19, 1
      %s312 = scalar_select %p311, %s19, 1
      %s313 = smul.addr %s312, 4
      %s314 = scalar_lea.vmem %s8, %s313
      %v316 = vld [vmem:[%s307] sm:$0xf]
      %v317 = vld [vmem:[%s2] sm:$0xf]
      %v318 = vld [vmem:[%s2 + $0x4] sm:$0xf]
      %v319 = vld [vmem:[%s2 + $0x8] sm:$0xf]
      %v320 = vld [vmem:[%s2 + $0xc] sm:$0xf]
      %v321 = vld [vmem:[%s3] sm:$0x1]
      %v323 = vperm.slane %v321, 0
      %v329 = vunpack.c.l.b16 %v317
      %v330 = vunpack.c.l.b16 %v318
      %v331 = vunpack.c.l.b16 %v319
      %v332 = vunpack.c.l.b16 %v320
      %v333 = vpack.c.b16 %v330, %v329
      %v334 = vpack.c.b16 %v332, %v331
      %vm337 = vcmask 261120
      %v339 = vsel %vm337, %v316, 0
      %341 = vmatpush.bf16.msra.mxu0 0
      %342 = vmatpush.bf16.msra.mxu0 0
      %343 = vmatpush.bf16.msra.mxu0 0
      %344 = vmatpush.bf16.msra.mxu0 0
      %345 = vmatpush.bf16.msra.mxu0 0
      %346 = vmatpush.bf16.msra.mxu0 0
      %347 = vmatpush.bf16.msra.mxu0 %v334
      %348 = vmatpush.bf16.msra.mxu0 %v333
      %349 = vmatmul.bf16.gmra.mxu0 %v339
      %v350 = vpop.f32.mrf.mxu0
      %v351 = vadd.f32 %v323, %v350
      %v352 = vpop.f32.mrf.mxu0
      %353 = vdwg.mxu0
      %v354 = vlaneseq
      %v355 = vshrl.u32 %v354, 7
      %v356 = vlaneseq
      %v357 = vand.u32 %v356, 127
      %vm358 = vcmp.ge.s32.totalorder %v355, %v357
      %v359 = vld [vmem:[%s310] sm:$0x1]
      %vm360 = vcmp.gt.f32.partialorder %v359, 0.0
      %v361 = vsel %vm360, 1, 0
      %v362 = vperm.slane %v361, 0
      %vm363 = vcmp.eq.s32.totalorder %v362, 1
      %vm364 = vmand %vm358, %vm363
      %v365 = vld [vmem:[%s4] sm:$0xf]
      %v366 = vld [vmem:[%s4 + $0x4] sm:$0xf]
      %v367 = vld [vmem:[%s4 + $0x8] sm:$0xf]
      %v368 = vld [vmem:[%s4 + $0xc] sm:$0xf]
      %v369 = vld [vmem:[%s5] sm:$0x1]
      %v370 = vunpack.c.l.bf16 %v316
      %v371 = vld [vmem:[%s6] sm:$0x1]
      %v372 = vld [vmem:[%s7] sm:$0x1]
      %v373 = vpack.c.bf16 %v351, %v351
      %375 = vrot.lane.b32.xlu0 %v373, 96
      %v376 = vpop.permute.xlu0 %375
      %vm377 = vcmask 64512
      %v379 = vsel %vm377, %v373, 0
      %v382 = vsel %vm377, %v376, 0
      %384 = vmatpush.bf16.xpose.msra.mxu0 0
      %385 = vmatpush.bf16.xpose.msra.mxu0 0
      %386 = vmatpush.bf16.xpose.msra.mxu0 0
      %387 = vmatpush.bf16.xpose.msra.mxu0 0
      %388 = vmatpush.bf16.xpose.msra.mxu0 0
      %389 = vmatpush.bf16.xpose.msra.mxu0 0
      %390 = vmatpush.bf16.xpose.msra.mxu0 0
      %391 = vmatpush.bf16.xpose.msra.mxu0 %v382
      %392 = vmatmul.bf16.gmra.mxu0 %v379
      %v393 = vpop.f32.mrf.mxu0
      %v394 = vadd.f32 0.0, %v393
      %v395 = vpop.f32.mrf.mxu0
      %396 = vdwg.mxu0
      %v397 = vsel %vm364, %v394, -1e+10
      %v398 = vsel %vm377, %v397, -inf
      %399 = vmax.xlane.f32.xlu0 %v398
      %v400 = vpop.xlane.xlu0 %399
      %v401 = vsub.f32 %v397, %v400
      %v402 = vmul.f32 %v401, 1.442695
      %v403 = vpow.pop %v402
      %v404 = vsel %vm377, %v403, 0.0
      %405 = vadd.xlane.f32.xlu0 %v404
      %v406 = vpop.xlane.xlu0 %405
      %v407 = vrcp.pop %v406
      %v408 = vmul.f32 %v403, %v407
      %v409 = vpack.c.bf16 %v408, %v408
      %410 = vrot.lane.b32.xlu0 %v373, 64
      %v411 = vpop.permute.xlu0 %410
      %v413 = vsel %vm377, %v409, 0
      %vm415 = vcmask 1043456
      %v417 = vsel %vm415, %v411, 0
      %419 = vmatpush.bf16.msra.mxu0 0
      %420 = vmatpush.bf16.msra.mxu0 0
      %421 = vmatpush.bf16.msra.mxu0 0
      %422 = vmatpush.bf16.msra.mxu0 0
      %423 = vmatpush.bf16.msra.mxu0 0
      %424 = vmatpush.bf16.msra.mxu0 0
      %425 = vmatpush.bf16.msra.mxu0 0
      %426 = vmatpush.bf16.msra.mxu0 %v417
      %427 = vmatmul.bf16.gmra.mxu0 %v413
      %v428 = vpop.f32.mrf.mxu0
      %v429 = vadd.f32 0.0, %v428
      %v430 = vpop.f32.mrf.mxu0
      %431 = vdwg.mxu0
      %432 = vrot.lane.b32.xlu0 %v373, 120
      %v433 = vpop.permute.xlu0 %432
      %434 = vrot.lane.b32.xlu0 %v373, 88
      %v435 = vpop.permute.xlu0 %434
      %v437 = vsel %vm377, %v433, 0
      %v440 = vsel %vm377, %v435, 0
      %442 = vmatpush.bf16.xpose.msra.mxu0 0
      %443 = vmatpush.bf16.xpose.msra.mxu0 0
      %444 = vmatpush.bf16.xpose.msra.mxu0 0
      %445 = vmatpush.bf16.xpose.msra.mxu0 0
      %446 = vmatpush.bf16.xpose.msra.mxu0 0
      %447 = vmatpush.bf16.xpose.msra.mxu0 0
      %448 = vmatpush.bf16.xpose.msra.mxu0 0
      %449 = vmatpush.bf16.xpose.msra.mxu0 %v440
      %450 = vmatmul.bf16.gmra.mxu0 %v437
      %v451 = vpop.f32.mrf.mxu0
      %v452 = vadd.f32 0.0, %v451
      %v453 = vpop.f32.mrf.mxu0
      %454 = vdwg.mxu0
      %v455 = vsel %vm364, %v452, -1e+10
      %v456 = vsel %vm377, %v455, -inf
      %457 = vmax.xlane.f32.xlu0 %v456
      %v458 = vpop.xlane.xlu0 %457
      %v459 = vsub.f32 %v455, %v458
      %v460 = vmul.f32 %v459, 1.442695
      %v461 = vpow.pop %v460
      %v462 = vsel %vm377, %v461, 0.0
      %463 = vadd.xlane.f32.xlu0 %v462
      %v464 = vpop.xlane.xlu0 %463
      %v465 = vrcp.pop %v464
      %v466 = vmul.f32 %v461, %v465
      %v467 = vpack.c.bf16 %v466, %v466
      %468 = vrot.lane.b32.xlu0 %v373, 56
      %v469 = vpop.permute.xlu0 %468
      %v471 = vsel %vm377, %v467, 0
      %v474 = vsel %vm415, %v469, 0
      %476 = vmatpush.bf16.msra.mxu0 0
      %477 = vmatpush.bf16.msra.mxu0 0
      %478 = vmatpush.bf16.msra.mxu0 0
      %479 = vmatpush.bf16.msra.mxu0 0
      %480 = vmatpush.bf16.msra.mxu0 0
      %481 = vmatpush.bf16.msra.mxu0 0
      %482 = vmatpush.bf16.msra.mxu0 0
      %483 = vmatpush.bf16.msra.mxu0 %v474
      %484 = vmatmul.bf16.gmra.mxu0 %v471
      %v485 = vpop.f32.mrf.mxu0
      %v486 = vadd.f32 0.0, %v485
      %v487 = vpop.f32.mrf.mxu0
      %488 = vdwg.mxu0
      %489 = vrot.lane.b32.xlu0 %v373, 112
      %v490 = vpop.permute.xlu0 %489
      %491 = vrot.lane.b32.xlu0 %v373, 80
      %v492 = vpop.permute.xlu0 %491
      %v494 = vsel %vm377, %v490, 0
      %v497 = vsel %vm377, %v492, 0
      %499 = vmatpush.bf16.xpose.msra.mxu0 0
      %500 = vmatpush.bf16.xpose.msra.mxu0 0
      %501 = vmatpush.bf16.xpose.msra.mxu0 0
      %502 = vmatpush.bf16.xpose.msra.mxu0 0
      %503 = vmatpush.bf16.xpose.msra.mxu0 0
      %504 = vmatpush.bf16.xpose.msra.mxu0 0
      %505 = vmatpush.bf16.xpose.msra.mxu0 0
      %506 = vmatpush.bf16.xpose.msra.mxu0 %v497
      %507 = vmatmul.bf16.gmra.mxu0 %v494
      %v508 = vpop.f32.mrf.mxu0
      %v509 = vadd.f32 0.0, %v508
      %v510 = vpop.f32.mrf.mxu0
      %511 = vdwg.mxu0
      %v512 = vsel %vm364, %v509, -1e+10
      %v513 = vsel %vm377, %v512, -inf
      %514 = vmax.xlane.f32.xlu0 %v513
      %v515 = vpop.xlane.xlu0 %514
      %v516 = vsub.f32 %v512, %v515
      %v517 = vmul.f32 %v516, 1.442695
      %v518 = vpow.pop %v517
      %v519 = vsel %vm377, %v518, 0.0
      %520 = vadd.xlane.f32.xlu0 %v519
      %v521 = vpop.xlane.xlu0 %520
      %v522 = vrcp.pop %v521
      %v523 = vmul.f32 %v518, %v522
      %v524 = vpack.c.bf16 %v523, %v523
      %525 = vrot.lane.b32.xlu0 %v373, 48
      %v526 = vpop.permute.xlu0 %525
      %v528 = vsel %vm377, %v524, 0
      %v531 = vsel %vm415, %v526, 0
      %533 = vmatpush.bf16.msra.mxu0 0
      %534 = vmatpush.bf16.msra.mxu0 0
      %535 = vmatpush.bf16.msra.mxu0 0
      %536 = vmatpush.bf16.msra.mxu0 0
      %537 = vmatpush.bf16.msra.mxu0 0
      %538 = vmatpush.bf16.msra.mxu0 0
      %539 = vmatpush.bf16.msra.mxu0 0
      %540 = vmatpush.bf16.msra.mxu0 %v531
      %541 = vmatmul.bf16.gmra.mxu0 %v528
      %v542 = vpop.f32.mrf.mxu0
      %v543 = vadd.f32 0.0, %v542
      %v544 = vpop.f32.mrf.mxu0
      %545 = vdwg.mxu0
      %546 = vrot.lane.b32.xlu0 %v373, 104
      %v547 = vpop.permute.xlu0 %546
      %548 = vrot.lane.b32.xlu0 %v373, 72
      %v549 = vpop.permute.xlu0 %548
      %v551 = vsel %vm377, %v547, 0
      %v554 = vsel %vm377, %v549, 0
      %556 = vmatpush.bf16.xpose.msra.mxu0 0
      %557 = vmatpush.bf16.xpose.msra.mxu0 0
      %558 = vmatpush.bf16.xpose.msra.mxu0 0
      %559 = vmatpush.bf16.xpose.msra.mxu0 0
      %560 = vmatpush.bf16.xpose.msra.mxu0 0
      %561 = vmatpush.bf16.xpose.msra.mxu0 0
      %562 = vmatpush.bf16.xpose.msra.mxu0 0
      %563 = vmatpush.bf16.xpose.msra.mxu0 %v554
      %564 = vmatmul.bf16.gmra.mxu0 %v551
      %v565 = vpop.f32.mrf.mxu0
      %v566 = vadd.f32 0.0, %v565
      %v567 = vpop.f32.mrf.mxu0
      %568 = vdwg.mxu0
      %v569 = vsel %vm364, %v566, -1e+10
      %v570 = vsel %vm377, %v569, -inf
      %571 = vmax.xlane.f32.xlu0 %v570
      %v572 = vpop.xlane.xlu0 %571
      %v573 = vsub.f32 %v569, %v572
      %v574 = vmul.f32 %v573, 1.442695
      %v575 = vpow.pop %v574
      %v576 = vsel %vm377, %v575, 0.0
      %577 = vadd.xlane.f32.xlu0 %v576
      %v578 = vpop.xlane.xlu0 %577
      %v579 = vrcp.pop %v578
      %v580 = vmul.f32 %v575, %v579
      %v581 = vpack.c.bf16 %v580, %v580
      %582 = vrot.lane.b32.xlu0 %v373, 40
      %v583 = vpop.permute.xlu0 %582
      %v585 = vsel %vm377, %v581, 0
      %v588 = vsel %vm415, %v583, 0
      %590 = vmatpush.bf16.msra.mxu0 0
      %591 = vmatpush.bf16.msra.mxu0 0
      %592 = vmatpush.bf16.msra.mxu0 0
      %593 = vmatpush.bf16.msra.mxu0 0
      %594 = vmatpush.bf16.msra.mxu0 0
      %595 = vmatpush.bf16.msra.mxu0 0
      %596 = vmatpush.bf16.msra.mxu0 0
      %597 = vmatpush.bf16.msra.mxu0 %v588
      %598 = vmatmul.bf16.gmra.mxu0 %v585
      %v599 = vpop.f32.mrf.mxu0
      %v600 = vadd.f32 0.0, %v599
      %v601 = vpop.f32.mrf.mxu0
      %602 = vdwg.mxu0
      %604 = vrot.lane.b32.xlu0 %v486, 8
      %v605 = vpop.permute.xlu0 %604
      %608 = vrot.lane.b32.xlu0 %v543, 16
      %v609 = vpop.permute.xlu0 %608
      %612 = vrot.lane.b32.xlu0 %v600, 24
      %v613 = vpop.permute.xlu0 %612
      %v615 = vsel %vm377, %v429, %v605
      %vm616 = vcmask 130048
      %v617 = vsel %vm616, %v615, %v609
      %vm618 = vcmask 195584
      %v619 = vsel %vm618, %v617, %v613
      %v620 = vpack.c.bf16 %v619, %v619
      %v622 = vperm.slane %v369, 0
      %v628 = vunpack.c.l.b16 %v365
      %v629 = vunpack.c.l.b16 %v366
      %v630 = vunpack.c.l.b16 %v367
      %v631 = vunpack.c.l.b16 %v368
      %v632 = vpack.c.b16 %v629, %v628
      %v633 = vpack.c.b16 %v631, %v630
      %v637 = vsel %vm337, %v620, 0
      %639 = vmatpush.bf16.msra.mxu0 0
      %640 = vmatpush.bf16.msra.mxu0 0
      %641 = vmatpush.bf16.msra.mxu0 0
      %642 = vmatpush.bf16.msra.mxu0 0
      %643 = vmatpush.bf16.msra.mxu0 0
      %644 = vmatpush.bf16.msra.mxu0 0
      %645 = vmatpush.bf16.msra.mxu0 %v633
      %646 = vmatpush.bf16.msra.mxu0 %v632
      %647 = vmatmul.bf16.gmra.mxu0 %v637
      %v648 = vpop.f32.mrf.mxu0
      %v649 = vadd.f32 %v622, %v648
      %v650 = vpop.f32.mrf.mxu0
      %651 = vdwg.mxu0
      %v652 = vadd.f32 %v370, %v649
      %v653 = vsel %vm337, %v652, 0.0
      %654 = vadd.xlane.f32.xlu0 %v653
      %v655 = vpop.xlane.xlu0 %654
      %v656 = vrcp.pop 32.0
      %v657 = vmul.f32 32.0, %v656
      %v658 = vsub.f32 1.0, %v657
      %v659 = vmul.f32 %v656, %v658
      %v660 = vadd.f32 %v656, %v659
      %vm661 = vweird.f32 %v656
      %v662 = vsel %vm661, %v656, %v660
      %v663 = vmul.f32 %v655, %v662
      %v664 = vsub.f32 %v652, %v663
      %v665 = vmul.f32 %v664, %v664
      %v666 = vsel %vm337, %v665, 0.0
      %667 = vadd.xlane.f32.xlu0 %v666
      %v668 = vpop.xlane.xlu0 %667
      %v669 = vmul.f32 %v668, %v662
      %v670 = vadd.f32 %v669, 1e-05
      %v671 = vrsqrt.pop %v670
      %v672 = vmul.f32 %v671, %v670
      %v673 = vmul.f32 %v672, %v671
      %v674 = vmul.f32 0.5, %v673
      %v675 = vsub.f32 1.5, %v674
      %v676 = vmul.f32 %v671, %v675
      %vm677 = vweird.f32 %v670
      %vm678 = vweird.f32 %v671
      %vm679 = vmor %vm677, %vm678
      %v680 = vsel %vm679, %v671, %v676
      %v681 = vmul.f32 %v664, %v680
      %v683 = vperm.slane %v371, 0
      %v685 = vmul.f32 %v681, %v683
      %v687 = vperm.slane %v372, 0
      %v689 = vadd.f32 %v685, %v687
      %v690 = vpack.c.bf16 %v689, %v689
      %vm691 = vcmask 257024
      %692 = vst.msk [vmem:[%s314] sm:$0xf] %vm691, %v690
      %p693 = scmp.lt.s32.totalorder %s19, 1
      %s694 = scalar_select %p693, %s19, 1
      %s695 = smul.addr %s694, 4
      %s696 = scalar_lea.vmem %s8, %s695
      // Predicated region
      $region53: #{decoder_forward.7} parent=51 // pred_check
        %p697 = pneg %p215
      $region54: #{decoder_forward.7} parent=51 // pred_check_branch
        %699 = sbr.rel (%p697) target = $region56
      $region55: #{decoder_forward.7} parent=51 // pred_region
        _
      $region56: #{decoder_forward.7} parent=51 // pred_fallthru
        _
    $region52: #{decoder_forward.7} parent=5 // pred_fallthru
      _
    %p700 = scmp.le.s32.totalorder 2, %s14
    // Predicated region
    $region57: #{decoder_forward.7} parent=5 // pred_check
      %p701 = pneg %p700
    $region58: #{decoder_forward.7} parent=5 // pred_check_branch
      %703 = sbr.rel (%p701) target = $region60
    $region59: #{decoder_forward.7} parent=5 // pred_region
      %s704 = ssub.s32 %s14, 2
      // Predicated region
      $region61: #{decoder_forward.7} parent=59 // pred_check
        %p705 = pneg %p221
      $region62: #{decoder_forward.7} parent=59 // pred_check_branch
        %707 = sbr.rel (%p705) target = $region64
      $region63: #{decoder_forward.7} parent=59 // pred_region
        %p708 = scmp.lt.s32.totalorder %s20, 1
        %s709 = scalar_select %p708, %s20, 1
        %s710 = smul.addr %s709, 4
        %s711 = scalar_lea.vmem %s8, %s710
      $region64: #{decoder_forward.7} parent=59 // pred_fallthru
        _
    $region60: #{decoder_forward.7} parent=5 // pred_fallthru
      _
  $region6: #{decoder_forward.7} parent=0 // loop_footer
    %s18 = sadd.s32 1, %s14
  $region7: #{decoder_forward.7} parent=0 // loop_footer_branch
    %13 = sbr.rel target = $region3
  $region8: #{decoder_forward.7} parent=0 // loop_exit
    _

// kernel: decoder_forward.8
$region0: #{decoder_forward.8}
  #allocation0 [shape = 'u32[]', space=smem, size = 0x4, offset = 0x4, fixed_abs, tag = 'smem constant byte address 0x4 - core index']
  #allocation1 [shape = 'u32[72,128]{1,0:T(1,128)}', space=vmem, size = 0x9000, scoped, tag = 'internal scratch']
  %s0 = inlined_call_operand.vmem [shape: bf16[2,8,32], index: 0, kind: input, shape index: {}]
  %s1 = inlined_call_operand.vmem [shape: bf16[2,8,32], index: 1, kind: input, shape index: {}]
  %s2 = inlined_call_operand.vmem [shape: f32[2,1,8], index: 2, kind: input, shape index: {}]
  %s3 = inlined_call_operand.vmem [shape: bf16[32,32], index: 3, kind: input, shape index: {}]
  %s4 = inlined_call_operand.vmem [shape: f32[1,32], index: 4, kind: input, shape index: {}]
  %s5 = inlined_call_operand.vmem [shape: bf16[32,64], index: 5, kind: input, shape index: {}]
  %s6 = inlined_call_operand.vmem [shape: f32[1,64], index: 6, kind: input, shape index: {}]
  %s7 = inlined_call_operand.vmem [shape: bf16[32,32], index: 7, kind: input, shape index: {}]
  %s8 = inlined_call_operand.vmem [shape: f32[1,32], index: 8, kind: input, shape index: {}]
  %s9 = inlined_call_operand.vmem [shape: f32[1,32], index: 9, kind: input, shape index: {}]
  %s10 = inlined_call_operand.vmem [shape: f32[1,32], index: 10, kind: input, shape index: {}]
  %s11 = inlined_call_operand.vmem [shape: bf16[2,8,32], index: 11, kind: output, shape index: {}]
  %s12 = sld [smem:[#allocation0]]
  $region77: #{decoder_forward.8} parent=0
    _
  %s14 = ssub.s32 1, %s12
  %s15 = scalar_select 0, %s14, %s12
  loop: start=0, step=1, limit=4
  $region2: #{decoder_forward.8} parent=0 // loop_pre_header
    _
  $region3: #{decoder_forward.8} parent=0 // loop_header
    %s17 = sphi 0, %s21
    %p18 = scmp.ge.s32.totalorder %s17, 4
    %s27 = sphi 0, %s29
    %s30 = sphi 0, %s27
    %s31 = sphi 0, %s30
    %s47 = sphi 0, %s31
    %s53 = sphi 0, %s55
    %s56 = sphi 0, %s53
    %s57 = sphi 0, %s56
    %s73 = sphi 0, %s57
    %s79 = sphi 0, %s81
    %s82 = sphi 0, %s79
    %s83 = sphi 0, %s82
    %s99 = sphi 0, %s83
    %s103 = sphi 0, %s103
    %s105 = sphi 0, %s103
    %s106 = sphi 0, %s105
    %s120 = sphi 0, %s106
    %s124 = sphi 0, %s124
    %s126 = sphi 0, %s124
    %s127 = sphi 0, %s126
    %s141 = sphi 0, %s127
    %s145 = sphi 0, %s145
    %s147 = sphi 0, %s145
    %s148 = sphi 0, %s147
    %s162 = sphi 0, %s148
    %s166 = sphi 0, %s166
    %s168 = sphi 0, %s166
    %s169 = sphi 0, %s168
    %s183 = sphi 0, %s169
    %s187 = sphi 0, %s187
    %s189 = sphi 0, %s187
    %s190 = sphi 0, %s189
    %s204 = sphi 0, %s190
    %s208 = sphi 0, %s208
    %s210 = sphi 0, %s208
    %s211 = sphi 0, %s210
    %s225 = sphi 0, %s211
    %s229 = sphi 0, %s229
    %s231 = sphi 0, %s229
    %s232 = sphi 0, %s231
    %s246 = sphi 0, %s232
    %s250 = sphi 0, %s250
    %s252 = sphi 0, %s250
    %s253 = sphi 0, %s252
    %s267 = sphi 0, %s253
    %s273 = sphi 0, %s275
    %s276 = sphi 0, %s273
    %s277 = sphi 0, %s276
    %s293 = sphi 0, %s277
  $region4: #{decoder_forward.8} parent=0 // loop_header_branch
    %20 = sbr.rel (%p18) target = $region8
  $region5: #{decoder_forward.8} parent=0 // loop_body
    %s22 = ssub.s32 %s17, 1
    %s23 = ssub.s32 %s17, 2
    %s24 = sadd.s32 %s17, 1
    %s25 = ssub.s32 %s17, %s24
    %p26 = scmp.eq.s32.totalorder %s25, 0
    %s28 = sadd.s32 %s27, 1
    %s29 = scalar_select %p26, %s27, %s28
    %p32 = pneg %p26
    %p33 = scmp.eq.s32.totalorder %s17, 1
    %p34 = por %p32, %p33
    %p35 = scmp.ne.s32.totalorder %s27, %s30
    %p36 = scmp.eq.s32.totalorder %s17, 0
    %p37 = por %p35, %p36
    %p38 = scmp.ne.s32.totalorder %s27, %s30
    %p39 = scmp.eq.s32.totalorder %s22, 1
    %p40 = por %p38, %p39
    %p41 = scmp.ne.s32.totalorder %s30, %s31
    %p42 = scmp.eq.s32.totalorder %s22, 0
    %p43 = por %p41, %p42
    %p44 = scmp.ne.s32.totalorder %s30, %s31
    %p45 = scmp.eq.s32.totalorder %s23, 1
    %p46 = por %p44, %p45
    %p48 = scmp.ne.s32.totalorder %s31, %s47
    %p49 = scmp.eq.s32.totalorder %s23, 0
    %p50 = por %p48, %p49
    %s51 = ssub.s32 %s17, %s24
    %p52 = scmp.eq.s32.totalorder %s51, 0
    %s54 = sadd.s32 %s53, 1
    %s55 = scalar_select %p52, %s53, %s54
    %p58 = pneg %p52
    %p59 = scmp.eq.s32.totalorder %s17, 1
    %p60 = por %p58, %p59
    %p61 = scmp.ne.s32.totalorder %s53, %s56
    %p62 = scmp.eq.s32.totalorder %s17, 0
    %p63 = por %p61, %p62
    %p64 = scmp.ne.s32.totalorder %s53, %s56
    %p65 = scmp.eq.s32.totalorder %s22, 1
    %p66 = por %p64, %p65
    %p67 = scmp.ne.s32.totalorder %s56, %s57
    %p68 = scmp.eq.s32.totalorder %s22, 0
    %p69 = por %p67, %p68
    %p70 = scmp.ne.s32.totalorder %s56, %s57
    %p71 = scmp.eq.s32.totalorder %s23, 1
    %p72 = por %p70, %p71
    %p74 = scmp.ne.s32.totalorder %s57, %s73
    %p75 = scmp.eq.s32.totalorder %s23, 0
    %p76 = por %p74, %p75
    %s77 = ssub.s32 %s17, %s24
    %p78 = scmp.eq.s32.totalorder %s77, 0
    %s80 = sadd.s32 %s79, 1
    %s81 = scalar_select %p78, %s79, %s80
    %p84 = pneg %p78
    %p85 = scmp.eq.s32.totalorder %s17, 1
    %p86 = por %p84, %p85
    %p87 = scmp.ne.s32.totalorder %s79, %s82
    %p88 = scmp.eq.s32.totalorder %s17, 0
    %p89 = por %p87, %p88
    %p90 = scmp.ne.s32.totalorder %s79, %s82
    %p91 = scmp.eq.s32.totalorder %s22, 1
    %p92 = por %p90, %p91
    %p93 = scmp.ne.s32.totalorder %s82, %s83
    %p94 = scmp.eq.s32.totalorder %s22, 0
    %p95 = por %p93, %p94
    %p96 = scmp.ne.s32.totalorder %s82, %s83
    %p97 = scmp.eq.s32.totalorder %s23, 1
    %p98 = por %p96, %p97
    %p100 = scmp.ne.s32.totalorder %s83, %s99
    %p101 = scmp.eq.s32.totalorder %s23, 0
    %p102 = por %p100, %p101
    %s104 = sadd.s32 %s103, 1
    %p107 = scmp.eq.s32.totalorder %s17, 1
    %p108 = scmp.ne.s32.totalorder %s103, %s105
    %p109 = scmp.eq.s32.totalorder %s17, 0
    %p110 = por %p108, %p109
    %p111 = scmp.ne.s32.totalorder %s103, %s105
    %p112 = scmp.eq.s32.totalorder %s22, 1
    %p113 = por %p111, %p112
    %p114 = scmp.ne.s32.totalorder %s105, %s106
    %p115 = scmp.eq.s32.totalorder %s22, 0
    %p116 = por %p114, %p115
    %p117 = scmp.ne.s32.totalorder %s105, %s106
    %p118 = scmp.eq.s32.totalorder %s23, 1
    %p119 = por %p117, %p118
    %p121 = scmp.ne.s32.totalorder %s106, %s120
    %p122 = scmp.eq.s32.totalorder %s23, 0
    %p123 = por %p121, %p122
    %s125 = sadd.s32 %s124, 1
    %p128 = scmp.eq.s32.totalorder %s17, 1
    %p129 = scmp.ne.s32.totalorder %s124, %s126
    %p130 = scmp.eq.s32.totalorder %s17, 0
    %p131 = por %p129, %p130
    %p132 = scmp.ne.s32.totalorder %s124, %s126
    %p133 = scmp.eq.s32.totalorder %s22, 1
    %p134 = por %p132, %p133
    %p135 = scmp.ne.s32.totalorder %s126, %s127
    %p136 = scmp.eq.s32.totalorder %s22, 0
    %p137 = por %p135, %p136
    %p138 = scmp.ne.s32.totalorder %s126, %s127
    %p139 = scmp.eq.s32.totalorder %s23, 1
    %p140 = por %p138, %p139
    %p142 = scmp.ne.s32.totalorder %s127, %s141
    %p143 = scmp.eq.s32.totalorder %s23, 0
    %p144 = por %p142, %p143
    %s146 = sadd.s32 %s145, 1
    %p149 = scmp.eq.s32.totalorder %s17, 1
    %p150 = scmp.ne.s32.totalorder %s145, %s147
    %p151 = scmp.eq.s32.totalorder %s17, 0
    %p152 = por %p150, %p151
    %p153 = scmp.ne.s32.totalorder %s145, %s147
    %p154 = scmp.eq.s32.totalorder %s22, 1
    %p155 = por %p153, %p154
    %p156 = scmp.ne.s32.totalorder %s147, %s148
    %p157 = scmp.eq.s32.totalorder %s22, 0
    %p158 = por %p156, %p157
    %p159 = scmp.ne.s32.totalorder %s147, %s148
    %p160 = scmp.eq.s32.totalorder %s23, 1
    %p161 = por %p159, %p160
    %p163 = scmp.ne.s32.totalorder %s148, %s162
    %p164 = scmp.eq.s32.totalorder %s23, 0
    %p165 = por %p163, %p164
    %s167 = sadd.s32 %s166, 1
    %p170 = scmp.eq.s32.totalorder %s17, 1
    %p171 = scmp.ne.s32.totalorder %s166, %s168
    %p172 = scmp.eq.s32.totalorder %s17, 0
    %p173 = por %p171, %p172
    %p174 = scmp.ne.s32.totalorder %s166, %s168
    %p175 = scmp.eq.s32.totalorder %s22, 1
    %p176 = por %p174, %p175
    %p177 = scmp.ne.s32.totalorder %s168, %s169
    %p178 = scmp.eq.s32.totalorder %s22, 0
    %p179 = por %p177, %p178
    %p180 = scmp.ne.s32.totalorder %s168, %s169
    %p181 = scmp.eq.s32.totalorder %s23, 1
    %p182 = por %p180, %p181
    %p184 = scmp.ne.s32.totalorder %s169, %s183
    %p185 = scmp.eq.s32.totalorder %s23, 0
    %p186 = por %p184, %p185
    %s188 = sadd.s32 %s187, 1
    %p191 = scmp.eq.s32.totalorder %s17, 1
    %p192 = scmp.ne.s32.totalorder %s187, %s189
    %p193 = scmp.eq.s32.totalorder %s17, 0
    %p194 = por %p192, %p193
    %p195 = scmp.ne.s32.totalorder %s187, %s189
    %p196 = scmp.eq.s32.totalorder %s22, 1
    %p197 = por %p195, %p196
    %p198 = scmp.ne.s32.totalorder %s189, %s190
    %p199 = scmp.eq.s32.totalorder %s22, 0
    %p200 = por %p198, %p199
    %p201 = scmp.ne.s32.totalorder %s189, %s190
    %p202 = scmp.eq.s32.totalorder %s23, 1
    %p203 = por %p201, %p202
    %p205 = scmp.ne.s32.totalorder %s190, %s204
    %p206 = scmp.eq.s32.totalorder %s23, 0
    %p207 = por %p205, %p206
    %s209 = sadd.s32 %s208, 1
    %p212 = scmp.eq.s32.totalorder %s17, 1
    %p213 = scmp.ne.s32.totalorder %s208, %s210
    %p214 = scmp.eq.s32.totalorder %s17, 0
    %p215 = por %p213, %p214
    %p216 = scmp.ne.s32.totalorder %s208, %s210
    %p217 = scmp.eq.s32.totalorder %s22, 1
    %p218 = por %p216, %p217
    %p219 = scmp.ne.s32.totalorder %s210, %s211
    %p220 = scmp.eq.s32.totalorder %s22, 0
    %p221 = por %p219, %p220
    %p222 = scmp.ne.s32.totalorder %s210, %s211
    %p223 = scmp.eq.s32.totalorder %s23, 1
    %p224 = por %p222, %p223
    %p226 = scmp.ne.s32.totalorder %s211, %s225
    %p227 = scmp.eq.s32.totalorder %s23, 0
    %p228 = por %p226, %p227
    %s230 = sadd.s32 %s229, 1
    %p233 = scmp.eq.s32.totalorder %s17, 1
    %p234 = scmp.ne.s32.totalorder %s229, %s231
    %p235 = scmp.eq.s32.totalorder %s17, 0
    %p236 = por %p234, %p235
    %p237 = scmp.ne.s32.totalorder %s229, %s231
    %p238 = scmp.eq.s32.totalorder %s22, 1
    %p239 = por %p237, %p238
    %p240 = scmp.ne.s32.totalorder %s231, %s232
    %p241 = scmp.eq.s32.totalorder %s22, 0
    %p242 = por %p240, %p241
    %p243 = scmp.ne.s32.totalorder %s231, %s232
    %p244 = scmp.eq.s32.totalorder %s23, 1
    %p245 = por %p243, %p244
    %p247 = scmp.ne.s32.totalorder %s232, %s246
    %p248 = scmp.eq.s32.totalorder %s23, 0
    %p249 = por %p247, %p248
    %s251 = sadd.s32 %s250, 1
    %p254 = scmp.eq.s32.totalorder %s17, 1
    %p255 = scmp.ne.s32.totalorder %s250, %s252
    %p256 = scmp.eq.s32.totalorder %s17, 0
    %p257 = por %p255, %p256
    %p258 = scmp.ne.s32.totalorder %s250, %s252
    %p259 = scmp.eq.s32.totalorder %s22, 1
    %p260 = por %p258, %p259
    %p261 = scmp.ne.s32.totalorder %s252, %s253
    %p262 = scmp.eq.s32.totalorder %s22, 0
    %p263 = por %p261, %p262
    %p264 = scmp.ne.s32.totalorder %s252, %s253
    %p265 = scmp.eq.s32.totalorder %s23, 1
    %p266 = por %p264, %p265
    %p268 = scmp.ne.s32.totalorder %s253, %s267
    %p269 = scmp.eq.s32.totalorder %s23, 0
    %p270 = por %p268, %p269
    %s271 = ssub.s32 %s17, %s24
    %p272 = scmp.eq.s32.totalorder %s271, 0
    %s274 = sadd.s32 %s273, 1
    %s275 = scalar_select %p272, %s273, %s274
    %p278 = pneg %p272
    %p279 = scmp.eq.s32.totalorder %s17, 1
    %p280 = por %p278, %p279
    %p281 = scmp.ne.s32.totalorder %s273, %s276
    %p282 = scmp.eq.s32.totalorder %s17, 0
    %p283 = por %p281, %p282
    %p284 = scmp.ne.s32.totalorder %s273, %s276
    %p285 = scmp.eq.s32.totalorder %s22, 1
    %p286 = por %p284, %p285
    %p287 = scmp.ne.s32.totalorder %s276, %s277
    %p288 = scmp.eq.s32.totalorder %s22, 0
    %p289 = por %p287, %p288
    %p290 = scmp.ne.s32.totalorder %s276, %s277
    %p291 = scmp.eq.s32.totalorder %s23, 1
    %p292 = por %p290, %p291
    %p294 = scmp.ne.s32.totalorder %s277, %s293
    %p295 = scmp.eq.s32.totalorder %s23, 0
    %p296 = por %p294, %p295
    %p297 = scmp.le.s32.totalorder 1, %s17
    %p298 = scmp.lt.s32.totalorder %s17, 3
    %p299 = pnand %p297, %p298
    %p300 = pneg %p299
    // Predicated region
    $region9: #{decoder_forward.8} parent=5 // pred_check
      _
    $region10: #{decoder_forward.8} parent=5 // pred_check_branch
      %302 = sbr.rel (%p299) target = $region12
    $region11: #{decoder_forward.8} parent=5 // pred_region
      %s303 = ssub.s32 %s17, 1
      // Predicated region
      $region13: #{decoder_forward.8} parent=11 // pred_check
        %p304 = pneg %p116
      $region14: #{decoder_forward.8} parent=11 // pred_check_branch
        %306 = sbr.rel (%p304) target = $region16
      $region15: #{decoder_forward.8} parent=11 // pred_region
        _
      $region16: #{decoder_forward.8} parent=11 // pred_fallthru
        _
      // Predicated region
      $region17: #{decoder_forward.8} parent=11 // pred_check
        %p307 = pneg %p137
      $region18: #{decoder_forward.8} parent=11 // pred_check_branch
        %309 = sbr.rel (%p307) target = $region20
      $region19: #{decoder_forward.8} parent=11 // pred_region
        _
      $region20: #{decoder_forward.8} parent=11 // pred_fallthru
        _
      // Predicated region
      $region21: #{decoder_forward.8} parent=11 // pred_check
        %p310 = pneg %p158
      $region22: #{decoder_forward.8} parent=11 // pred_check_branch
        %312 = sbr.rel (%p310) target = $region24
      $region23: #{decoder_forward.8} parent=11 // pred_region
        _
      $region24: #{decoder_forward.8} parent=11 // pred_fallthru
        _
      // Predicated region
      $region25: #{decoder_forward.8} parent=11 // pred_check
        %p313 = pneg %p179
      $region26: #{decoder_forward.8} parent=11 // pred_check_branch
        %315 = sbr.rel (%p313) target = $region28
      $region27: #{decoder_forward.8} parent=11 // pred_region
        _
      $region28: #{decoder_forward.8} parent=11 // pred_fallthru
        _
      // Predicated region
      $region29: #{decoder_forward.8} parent=11 // pred_check
        %p316 = pneg %p200
      $region30: #{decoder_forward.8} parent=11 // pred_check_branch
        %318 = sbr.rel (%p316) target = $region32
      $region31: #{decoder_forward.8} parent=11 // pred_region
        _
      $region32: #{decoder_forward.8} parent=11 // pred_fallthru
        _
      // Predicated region
      $region33: #{decoder_forward.8} parent=11 // pred_check
        %p319 = pneg %p221
      $region34: #{decoder_forward.8} parent=11 // pred_check_branch
        %321 = sbr.rel (%p319) target = $region36
      $region35: #{decoder_forward.8} parent=11 // pred_region
        _
      $region36: #{decoder_forward.8} parent=11 // pred_fallthru
        _
      // Predicated region
      $region37: #{decoder_forward.8} parent=11 // pred_check
        %p322 = pneg %p242
      $region38: #{decoder_forward.8} parent=11 // pred_check_branch
        %324 = sbr.rel (%p322) target = $region40
      $region39: #{decoder_forward.8} parent=11 // pred_region
        _
      $region40: #{decoder_forward.8} parent=11 // pred_fallthru
        _
      // Predicated region
      $region41: #{decoder_forward.8} parent=11 // pred_check
        %p325 = pneg %p263
      $region42: #{decoder_forward.8} parent=11 // pred_check_branch
        %327 = sbr.rel (%p325) target = $region44
      $region43: #{decoder_forward.8} parent=11 // pred_region
        _
      $region44: #{decoder_forward.8} parent=11 // pred_fallthru
        _
    $region12: #{decoder_forward.8} parent=5 // pred_fallthru
      _
    %p328 = scmp.lt.s32.totalorder %s17, 2
    // Predicated region
    $region45: #{decoder_forward.8} parent=5 // pred_check
      %p329 = pneg %p328
    $region46: #{decoder_forward.8} parent=5 // pred_check_branch
      %331 = sbr.rel (%p329) target = $region48
    $region47: #{decoder_forward.8} parent=5 // pred_region
      // Predicated region
      $region49: #{decoder_forward.8} parent=47 // pred_check
        %p332 = pneg %p37
      $region50: #{decoder_forward.8} parent=47 // pred_check_branch
        %334 = sbr.rel (%p332) target = $region52
      $region51: #{decoder_forward.8} parent=47 // pred_region
        %p335 = scmp.lt.s32.totalorder %s17, 1
        %s336 = scalar_select %p335, %s17, 1
        %s337 = smul.addr %s336, 4
        %s338 = scalar_lea.vmem %s0, %s337
      $region52: #{decoder_forward.8} parent=47 // pred_fallthru
        _
      // Predicated region
      $region53: #{decoder_forward.8} parent=47 // pred_check
        %p339 = pneg %p63
      $region54: #{decoder_forward.8} parent=47 // pred_check_branch
        %341 = sbr.rel (%p339) target = $region56
      $region55: #{decoder_forward.8} parent=47 // pred_region
        %p342 = scmp.lt.s32.totalorder %s17, 1
        %s343 = scalar_select %p342, %s17, 1
        %s344 = smul.addr %s343, 4
        %s345 = scalar_lea.vmem %s1, %s344
      $region56: #{decoder_forward.8} parent=47 // pred_fallthru
        _
      // Predicated region
      $region57: #{decoder_forward.8} parent=47 // pred_check
        %p346 = pneg %p89
      $region58: #{decoder_forward.8} parent=47 // pred_check_branch
        %348 = sbr.rel (%p346) target = $region60
      $region59: #{decoder_forward.8} parent=47 // pred_region
        %p349 = scmp.lt.s32.totalorder %s17, 1
        %s350 = scalar_select %p349, %s17, 1
        %s351 = scalar_lea.vmem %s2, %s350
      $region60: #{decoder_forward.8} parent=47 // pred_fallthru
        _
    $region48: #{decoder_forward.8} parent=5 // pred_fallthru
      _
    %p352 = scmp.le.s32.totalorder 1, %s17
    %p353 = scmp.lt.s32.totalorder %s17, 3
    %p354 = pnand %p352, %p353
    %p355 = pneg %p354
    // Predicated region
    $region61: #{decoder_forward.8} parent=5 // pred_check
      _
    $region62: #{decoder_forward.8} parent=5 // pred_check_branch
      %357 = sbr.rel (%p354) target = $region64
    $region63: #{decoder_forward.8} parent=5 // pred_region
      %s358 = ssub.s32 %s17, 1
      %p359 = scmp.lt.s32.totalorder %s22, 1
      %s360 = scalar_select %p359, %s22, 1
      %s361 = smul.addr %s360, 4
      %s362 = scalar_lea.vmem %s0, %s361
      %p363 = pneg %p43
      %p364 = pneg %p40
      %p365 = scmp.lt.s32.totalorder %s22, 1
      %s366 = scalar_select %p365, %s22, 1
      %s367 = smul.addr %s366, 4
      %s368 = scalar_lea.vmem %s1, %s367
      %p369 = pneg %p69
      %p370 = pneg %p66
      %p371 = scmp.lt.s32.totalorder %s22, 1
      %s372 = scalar_select %p371, %s22, 1
      %s373 = scalar_lea.vmem %s2, %s372
      %p374 = pneg %p95
      %p375 = pneg %p92
      %p376 = pneg %p116
      %p377 = pneg %p113
      %p378 = pneg %p137
      %p379 = pneg %p134
      %p380 = pneg %p158
      %p381 = pneg %p155
      %p382 = pneg %p179
      %p383 = pneg %p176
      %p384 = pneg %p200
      %p385 = pneg %p197
      %p386 = pneg %p221
      %p387 = pneg %p218
      %p388 = pneg %p242
      %p389 = pneg %p239
      %p390 = pneg %p263
      %p391 = pneg %p260
      %p392 = pneg %p289
      %p393 = pneg %p286
      %p394 = scmp.lt.s32.totalorder %s22, 1
      %s395 = scalar_select %p394, %s22, 1
      %s396 = smul.addr %s395, 4
      %s397 = scalar_lea.vmem %s11, %s396
      %p398 = scmp.lt.s32.totalorder %s22, 1
      %s399 = scalar_select %p398, %s22, 1
      %s400 = smul.addr %s399, 4
      %s401 = scalar_lea.vmem %s0, %s400
      %p402 = scmp.lt.s32.totalorder %s22, 1
      %s403 = scalar_select %p402, %s22, 1
      %s404 = smul.addr %s403, 4
      %s405 = scalar_lea.vmem %s1, %s404
      %p406 = scmp.lt.s32.totalorder %s22, 1
      %s407 = scalar_select %p406, %s22, 1
      %s408 = scalar_lea.vmem %s2, %s407
      %p409 = scmp.lt.s32.totalorder %s22, 1
      %s410 = scalar_select %p409, %s22, 1
      %s411 = smul.addr %s410, 4
      %s412 = scalar_lea.vmem %s11, %s411
      %v414 = vld [vmem:[%s401] sm:$0xf]
      %v415 = vld [vmem:[%s405] sm:$0xf]
      %v416 = vld [vmem:[%s3] sm:$0xf]
      %v417 = vld [vmem:[%s3 + $0x4] sm:$0xf]
      %v418 = vld [vmem:[%s3 + $0x8] sm:$0xf]
      %v419 = vld [vmem:[%s3 + $0xc] sm:$0xf]
      %v420 = vld [vmem:[%s4] sm:$0x1]
      %v422 = vperm.slane %v420, 0
      %v428 = vunpack.c.l.b16 %v416
      %v429 = vunpack.c.l.b16 %v417
      %v430 = vunpack.c.l.b16 %v418
      %v431 = vunpack.c.l.b16 %v419
      %v432 = vpack.c.b16 %v429, %v428
      %v433 = vpack.c.b16 %v431, %v430
      %vm436 = vcmask 261120
      %v438 = vsel %vm436, %v414, 0
      %440 = vmatpush.bf16.msra.mxu0 0
      %441 = vmatpush.bf16.msra.mxu0 0
      %442 = vmatpush.bf16.msra.mxu0 0
      %443 = vmatpush.bf16.msra.mxu0 0
      %444 = vmatpush.bf16.msra.mxu0 0
      %445 = vmatpush.bf16.msra.mxu0 0
      %446 = vmatpush.bf16.msra.mxu0 %v433
      %447 = vmatpush.bf16.msra.mxu0 %v432
      %448 = vmatmul.bf16.gmra.mxu0 %v438
      %v449 = vpop.f32.mrf.mxu0
      %v450 = vadd.f32 %v422, %v449
      %v451 = vpop.f32.mrf.mxu0
      %452 = vdwg.mxu0
      %v453 = vld [vmem:[%s5] sm:$0xf]
      %v454 = vld [vmem:[%s5 + $0x4] sm:$0xf]
      %v455 = vld [vmem:[%s5 + $0x8] sm:$0xf]
      %v456 = vld [vmem:[%s5 + $0xc] sm:$0xf]
      %v457 = vld [vmem:[%s6] sm:$0x1]
      %v459 = vperm.slane %v457, 0
      %v465 = vunpack.c.l.b16 %v453
      %v466 = vunpack.c.l.b16 %v454
      %v467 = vunpack.c.l.b16 %v455
      %v468 = vunpack.c.l.b16 %v456
      %v469 = vpack.c.b16 %v466, %v465
      %v470 = vpack.c.b16 %v468, %v467
      %v474 = vsel %vm436, %v415, 0
      %476 = vmatpush.bf16.msra.mxu0 0
      %477 = vmatpush.bf16.msra.mxu0 0
      %478 = vmatpush.bf16.msra.mxu0 0
      %479 = vmatpush.bf16.msra.mxu0 0
      %480 = vmatpush.bf16.msra.mxu0 0
      %481 = vmatpush.bf16.msra.mxu0 0
      %482 = vmatpush.bf16.msra.mxu0 %v470
      %483 = vmatpush.bf16.msra.mxu0 %v469
      %484 = vmatmul.bf16.gmra.mxu0 %v474
      %v485 = vpop.f32.mrf.mxu0
      %v486 = vadd.f32 %v459, %v485
      %v487 = vpop.f32.mrf.mxu0
      %488 = vdwg.mxu0
      %v489 = vld [vmem:[%s408] sm:$0x1]
      %vm490 = vcmp.gt.f32.partialorder %v489, 0.0
      %v491 = vld [vmem:[%s7] sm:$0xf]
      %v492 = vld [vmem:[%s7 + $0x4] sm:$0xf]
      %v493 = vld [vmem:[%s7 + $0x8] sm:$0xf]
      %v494 = vld [vmem:[%s7 + $0xc] sm:$0xf]
      %v495 = vld [vmem:[%s8] sm:$0x1]
      %v496 = vunpack.c.l.bf16 %v414
      %v497 = vld [vmem:[%s9] sm:$0x1]
      %v498 = vld [vmem:[%s10] sm:$0x1]
      %v499 = vpack.c.bf16 %v450, %v450
      %v500 = vpack.c.bf16 %v486, %v486
      %vm501 = vcmask 64512
      %v503 = vsel %vm501, %v499, 0
      %v506 = vsel %vm501, %v500, 0
      %508 = vmatpush.bf16.xpose.msra.mxu0 0
      %509 = vmatpush.bf16.xpose.msra.mxu0 0
      %510 = vmatpush.bf16.xpose.msra.mxu0 0
      %511 = vmatpush.bf16.xpose.msra.mxu0 0
      %512 = vmatpush.bf16.xpose.msra.mxu0 0
      %513 = vmatpush.bf16.xpose.msra.mxu0 0
      %514 = vmatpush.bf16.xpose.msra.mxu0 0
      %515 = vmatpush.bf16.xpose.msra.mxu0 %v506
      %516 = vmatmul.bf16.gmra.mxu0 %v503
      %v517 = vpop.f32.mrf.mxu0
      %v518 = vadd.f32 0.0, %v517
      %v519 = vpop.f32.mrf.mxu0
      %520 = vdwg.mxu0
      %v521 = vsel %vm490, 1, 0
      %v522 = vperm.slane %v521, 0
      %vm523 = vcmp.eq.s32.totalorder %v522, 1
      %v524 = vsel %vm523, %v518, -1e+10
      %v525 = vsel %vm501, %v524, -inf
      %526 = vmax.xlane.f32.xlu0 %v525
      %v527 = vpop.xlane.xlu0 %526
      %v528 = vsub.f32 %v524, %v527
      %v529 = vmul.f32 %v528, 1.442695
      %v530 = vpow.pop %v529
      %v531 = vsel %vm501, %v530, 0.0
      %532 = vadd.xlane.f32.xlu0 %v531
      %v533 = vpop.xlane.xlu0 %532
      %v534 = vrcp.pop %v533
      %v535 = vmul.f32 %v530, %v534
      %v536 = vpack.c.bf16 %v535, %v535
      %538 = vrot.lane.b32.xlu0 %v500, 96
      %v539 = vpop.permute.xlu0 %538
      %v541 = vsel %vm501, %v536, 0
      %vm543 = vcmask 1043456
      %v545 = vsel %vm543, %v539, 0
      %547 = vmatpush.bf16.msra.mxu0 0
      %548 = vmatpush.bf16.msra.mxu0 0
      %549 = vmatpush.bf16.msra.mxu0 0
      %550 = vmatpush.bf16.msra.mxu0 0
      %551 = vmatpush.bf16.msra.mxu0 0
      %552 = vmatpush.bf16.msra.mxu0 0
      %553 = vmatpush.bf16.msra.mxu0 0
      %554 = vmatpush.bf16.msra.mxu0 %v545
      %555 = vmatmul.bf16.gmra.mxu0 %v541
      %v556 = vpop.f32.mrf.mxu0
      %v557 = vadd.f32 0.0, %v556
      %v558 = vpop.f32.mrf.mxu0
      %559 = vdwg.mxu0
      %561 = vrot.lane.b32.xlu0 %v499, 120
      %v562 = vpop.permute.xlu0 %561
      %563 = vrot.lane.b32.xlu0 %v500, 120
      %v564 = vpop.permute.xlu0 %563
      %v566 = vsel %vm501, %v562, 0
      %v569 = vsel %vm501, %v564, 0
      %571 = vmatpush.bf16.xpose.msra.mxu0 0
      %572 = vmatpush.bf16.xpose.msra.mxu0 0
      %573 = vmatpush.bf16.xpose.msra.mxu0 0
      %574 = vmatpush.bf16.xpose.msra.mxu0 0
      %575 = vmatpush.bf16.xpose.msra.mxu0 0
      %576 = vmatpush.bf16.xpose.msra.mxu0 0
      %577 = vmatpush.bf16.xpose.msra.mxu0 0
      %578 = vmatpush.bf16.xpose.msra.mxu0 %v569
      %579 = vmatmul.bf16.gmra.mxu0 %v566
      %v580 = vpop.f32.mrf.mxu0
      %v581 = vadd.f32 0.0, %v580
      %v582 = vpop.f32.mrf.mxu0
      %583 = vdwg.mxu0
      %v584 = vsel %vm523, %v581, -1e+10
      %v585 = vsel %vm501, %v584, -inf
      %586 = vmax.xlane.f32.xlu0 %v585
      %v587 = vpop.xlane.xlu0 %586
      %v588 = vsub.f32 %v584, %v587
      %v589 = vmul.f32 %v588, 1.442695
      %v590 = vpow.pop %v589
      %v591 = vsel %vm501, %v590, 0.0
      %592 = vadd.xlane.f32.xlu0 %v591
      %v593 = vpop.xlane.xlu0 %592
      %v594 = vrcp.pop %v593
      %v595 = vmul.f32 %v590, %v594
      %v596 = vpack.c.bf16 %v595, %v595
      %597 = vrot.lane.b32.xlu0 %v500, 88
      %v598 = vpop.permute.xlu0 %597
      %v600 = vsel %vm501, %v596, 0
      %v603 = vsel %vm543, %v598, 0
      %605 = vmatpush.bf16.msra.mxu0 0
      %606 = vmatpush.bf16.msra.mxu0 0
      %607 = vmatpush.bf16.msra.mxu0 0
      %608 = vmatpush.bf16.msra.mxu0 0
      %609 = vmatpush.bf16.msra.mxu0 0
      %610 = vmatpush.bf16.msra.mxu0 0
      %611 = vmatpush.bf16.msra.mxu0 0
      %612 = vmatpush.bf16.msra.mxu0 %v603
      %613 = vmatmul.bf16.gmra.mxu0 %v600
      %v614 = vpop.f32.mrf.mxu0
      %v615 = vadd.f32 0.0, %v614
      %v616 = vpop.f32.mrf.mxu0
      %617 = vdwg.mxu0
      %618 = vrot.lane.b32.xlu0 %v499, 112
      %v619 = vpop.permute.xlu0 %618
      %620 = vrot.lane.b32.xlu0 %v500, 112
      %v621 = vpop.permute.xlu0 %620
      %v623 = vsel %vm501, %v619, 0
      %v626 = vsel %vm501, %v621, 0
      %628 = vmatpush.bf16.xpose.msra.mxu0 0
      %629 = vmatpush.bf16.xpose.msra.mxu0 0
      %630 = vmatpush.bf16.xpose.msra.mxu0 0
      %631 = vmatpush.bf16.xpose.msra.mxu0 0
      %632 = vmatpush.bf16.xpose.msra.mxu0 0
      %633 = vmatpush.bf16.xpose.msra.mxu0 0
      %634 = vmatpush.bf16.xpose.msra.mxu0 0
      %635 = vmatpush.bf16.xpose.msra.mxu0 %v626
      %636 = vmatmul.bf16.gmra.mxu0 %v623
      %v637 = vpop.f32.mrf.mxu0
      %v638 = vadd.f32 0.0, %v637
      %v639 = vpop.f32.mrf.mxu0
      %640 = vdwg.mxu0
      %v641 = vsel %vm523, %v638, -1e+10
      %v642 = vsel %vm501, %v641, -inf
      %643 = vmax.xlane.f32.xlu0 %v642
      %v644 = vpop.xlane.xlu0 %643
      %v645 = vsub.f32 %v641, %v644
      %v646 = vmul.f32 %v645, 1.442695
      %v647 = vpow.pop %v646
      %v648 = vsel %vm501, %v647, 0.0
      %649 = vadd.xlane.f32.xlu0 %v648
      %v650 = vpop.xlane.xlu0 %649
      %v651 = vrcp.pop %v650
      %v652 = vmul.f32 %v647, %v651
      %v653 = vpack.c.bf16 %v652, %v652
      %654 = vrot.lane.b32.xlu0 %v500, 80
      %v655 = vpop.permute.xlu0 %654
      %v657 = vsel %vm501, %v653, 0
      %v660 = vsel %vm543, %v655, 0
      %662 = vmatpush.bf16.msra.mxu0 0
      %663 = vmatpush.bf16.msra.mxu0 0
      %664 = vmatpush.bf16.msra.mxu0 0
      %665 = vmatpush.bf16.msra.mxu0 0
      %666 = vmatpush.bf16.msra.mxu0 0
      %667 = vmatpush.bf16.msra.mxu0 0
      %668 = vmatpush.bf16.msra.mxu0 0
      %669 = vmatpush.bf16.msra.mxu0 %v660
      %670 = vmatmul.bf16.gmra.mxu0 %v657
      %v671 = vpop.f32.mrf.mxu0
      %v672 = vadd.f32 0.0, %v671
      %v673 = vpop.f32.mrf.mxu0
      %674 = vdwg.mxu0
      %675 = vrot.lane.b32.xlu0 %v499, 104
      %v676 = vpop.permute.xlu0 %675
      %677 = vrot.lane.b32.xlu0 %v500, 104
      %v678 = vpop.permute.xlu0 %677
      %v680 = vsel %vm501, %v676, 0
      %v683 = vsel %vm501, %v678, 0
      %685 = vmatpush.bf16.xpose.msra.mxu0 0
      %686 = vmatpush.bf16.xpose.msra.mxu0 0
      %687 = vmatpush.bf16.xpose.msra.mxu0 0
      %688 = vmatpush.bf16.xpose.msra.mxu0 0
      %689 = vmatpush.bf16.xpose.msra.mxu0 0
      %690 = vmatpush.bf16.xpose.msra.mxu0 0
      %691 = vmatpush.bf16.xpose.msra.mxu0 0
      %692 = vmatpush.bf16.xpose.msra.mxu0 %v683
      %693 = vmatmul.bf16.gmra.mxu0 %v680
      %v694 = vpop.f32.mrf.mxu0
      %v695 = vadd.f32 0.0, %v694
      %v696 = vpop.f32.mrf.mxu0
      %697 = vdwg.mxu0
      %v698 = vsel %vm523, %v695, -1e+10
      %v699 = vsel %vm501, %v698, -inf
      %700 = vmax.xlane.f32.xlu0 %v699
      %v701 = vpop.xlane.xlu0 %700
      %v702 = vsub.f32 %v698, %v701
      %v703 = vmul.f32 %v702, 1.442695
      %v704 = vpow.pop %v703
      %v705 = vsel %vm501, %v704, 0.0
      %706 = vadd.xlane.f32.xlu0 %v705
      %v707 = vpop.xlane.xlu0 %706
      %v708 = vrcp.pop %v707
      %v709 = vmul.f32 %v704, %v708
      %v710 = vpack.c.bf16 %v709, %v709
      %711 = vrot.lane.b32.xlu0 %v500, 72
      %v712 = vpop.permute.xlu0 %711
      %v714 = vsel %vm501, %v710, 0
      %v717 = vsel %vm543, %v712, 0
      %719 = vmatpush.bf16.msra.mxu0 0
      %720 = vmatpush.bf16.msra.mxu0 0
      %721 = vmatpush.bf16.msra.mxu0 0
      %722 = vmatpush.bf16.msra.mxu0 0
      %723 = vmatpush.bf16.msra.mxu0 0
      %724 = vmatpush.bf16.msra.mxu0 0
      %725 = vmatpush.bf16.msra.mxu0 0
      %726 = vmatpush.bf16.msra.mxu0 %v717
      %727 = vmatmul.bf16.gmra.mxu0 %v714
      %v728 = vpop.f32.mrf.mxu0
      %v729 = vadd.f32 0.0, %v728
      %v730 = vpop.f32.mrf.mxu0
      %731 = vdwg.mxu0
      %733 = vrot.lane.b32.xlu0 %v615, 8
      %v734 = vpop.permute.xlu0 %733
      %737 = vrot.lane.b32.xlu0 %v672, 16
      %v738 = vpop.permute.xlu0 %737
      %741 = vrot.lane.b32.xlu0 %v729, 24
      %v742 = vpop.permute.xlu0 %741
      %v744 = vsel %vm501, %v557, %v734
      %vm745 = vcmask 130048
      %v746 = vsel %vm745, %v744, %v738
      %vm747 = vcmask 195584
      %v748 = vsel %vm747, %v746, %v742
      %v749 = vpack.c.bf16 %v748, %v748
      %v751 = vperm.slane %v495, 0
      %v757 = vunpack.c.l.b16 %v491
      %v758 = vunpack.c.l.b16 %v492
      %v759 = vunpack.c.l.b16 %v493
      %v760 = vunpack.c.l.b16 %v494
      %v761 = vpack.c.b16 %v758, %v757
      %v762 = vpack.c.b16 %v760, %v759
      %v766 = vsel %vm436, %v749, 0
      %768 = vmatpush.bf16.msra.mxu0 0
      %769 = vmatpush.bf16.msra.mxu0 0
      %770 = vmatpush.bf16.msra.mxu0 0
      %771 = vmatpush.bf16.msra.mxu0 0
      %772 = vmatpush.bf16.msra.mxu0 0
      %773 = vmatpush.bf16.msra.mxu0 0
      %774 = vmatpush.bf16.msra.mxu0 %v762
      %775 = vmatpush.bf16.msra.mxu0 %v761
      %776 = vmatmul.bf16.gmra.mxu0 %v766
      %v777 = vpop.f32.mrf.mxu0
      %v778 = vadd.f32 %v751, %v777
      %v779 = vpop.f32.mrf.mxu0
      %780 = vdwg.mxu0
      %v781 = vadd.f32 %v496, %v778
      %v782 = vsel %vm436, %v781, 0.0
      %783 = vadd.xlane.f32.xlu0 %v782
      %v784 = vpop.xlane.xlu0 %783
      %v785 = vrcp.pop 32.0
      %v786 = vmul.f32 32.0, %v785
      %v787 = vsub.f32 1.0, %v786
      %v788 = vmul.f32 %v785, %v787
      %v789 = vadd.f32 %v785, %v788
      %vm790 = vweird.f32 %v785
      %v791 = vsel %vm790, %v785, %v789
      %v792 = vmul.f32 %v784, %v791
      %v793 = vsub.f32 %v781, %v792
      %v794 = vmul.f32 %v793, %v793
      %v795 = vsel %vm436, %v794, 0.0
      %796 = vadd.xlane.f32.xlu0 %v795
      %v797 = vpop.xlane.xlu0 %796
      %v798 = vmul.f32 %v797, %v791
      %v799 = vadd.f32 %v798, 1e-05
      %v800 = vrsqrt.pop %v799
      %v801 = vmul.f32 %v800, %v799
      %v802 = vmul.f32 %v801, %v800
      %v803 = vmul.f32 0.5, %v802
      %v804 = vsub.f32 1.5, %v803
      %v805 = vmul.f32 %v800, %v804
      %vm806 = vweird.f32 %v799
      %vm807 = vweird.f32 %v800
      %vm808 = vmor %vm806, %vm807
      %v809 = vsel %vm808, %v800, %v805
      %v810 = vmul.f32 %v793, %v809
      %v812 = vperm.slane %v497, 0
      %v814 = vmul.f32 %v810, %v812
      %v816 = vperm.slane %v498, 0
      %v818 = vadd.f32 %v814, %v816
      %v819 = vpack.c.bf16 %v818, %v818
      %vm820 = vcmask 257024
      %821 = vst.msk [vmem:[%s412] sm:$0xf] %vm820, %v819
      %p822 = scmp.lt.s32.totalorder %s22, 1
      %s823 = scalar_select %p822, %s22, 1
      %s824 = smul.addr %s823, 4
      %s825 = scalar_lea.vmem %s11, %s824
      // Predicated region
      $region65: #{decoder_forward.8} parent=63 // pred_check
        %p826 = pneg %p286
      $region66: #{decoder_forward.8} parent=63 // pred_check_branch
        %828 = sbr.rel (%p826) target = $region68
      $region67: #{decoder_forward.8} parent=63 // pred_region
        _
      $region68: #{decoder_forward.8} parent=63 // pred_fallthru
        _
    $region64: #{decoder_forward.8} parent=5 // pred_fallthru
      _
    %p829 = scmp.le.s32.totalorder 2, %s17
    // Predicated region
    $region69: #{decoder_forward.8} parent=5 // pred_check
      %p830 = pneg %p829
    $region70: #{decoder_forward.8} parent=5 // pred_check_branch
      %832 = sbr.rel (%p830) target = $region72
    $region71: #{decoder_forward.8} parent=5 // pred_region
      %s833 = ssub.s32 %s17, 2
      // Predicated region
      $region73: #{decoder_forward.8} parent=71 // pred_check
        %p834 = pneg %p292
      $region74: #{decoder_forward.8} parent=71 // pred_check_branch
        %836 = sbr.rel (%p834) target = $region76
      $region75: #{decoder_forward.8} parent=71 // pred_region
        %p837 = scmp.lt.s32.totalorder %s23, 1
        %s838 = scalar_select %p837, %s23, 1
        %s839 = smul.addr %s838, 4
        %s840 = scalar_lea.vmem %s11, %s839
      $region76: #{decoder_forward.8} parent=71 // pred_fallthru
        _
    $region72: #{decoder_forward.8} parent=5 // pred_fallthru
      _
  $region6: #{decoder_forward.8} parent=0 // loop_footer
    %s21 = sadd.s32 1, %s17
  $region7: #{decoder_forward.8} parent=0 // loop_footer_branch
    %16 = sbr.rel target = $region3
  $region8: #{decoder_forward.8} parent=0 // loop_exit
    _

// kernel: decoder_forward.9
$region0: #{decoder_forward.9}
  #allocation0 [shape = 'u32[]', space=smem, size = 0x4, offset = 0x4, fixed_abs, tag = 'smem constant byte address 0x4 - core index']
  #allocation1 [shape = 'u32[72,128]{1,0:T(1,128)}', space=vmem, size = 0x9000, scoped, tag = 'internal scratch']
  %s0 = inlined_call_operand.vmem [shape: bf16[16,32], index: 0, kind: input, shape index: {}]
  %s1 = inlined_call_operand.vmem [shape: bf16[32,64], index: 1, kind: input, shape index: {}]
  %s2 = inlined_call_operand.vmem [shape: f32[1,64], index: 2, kind: input, shape index: {}]
  %s3 = inlined_call_operand.vmem [shape: bf16[64,32], index: 3, kind: input, shape index: {}]
  %s4 = inlined_call_operand.vmem [shape: f32[1,32], index: 4, kind: input, shape index: {}]
  %s5 = inlined_call_operand.vmem [shape: f32[1,32], index: 5, kind: input, shape index: {}]
  %s6 = inlined_call_operand.vmem [shape: f32[1,32], index: 6, kind: input, shape index: {}]
  %s7 = inlined_call_operand.vmem [shape: bf16[16,32], index: 7, kind: output, shape index: {}]
  %s8 = sld [smem:[#allocation0]]
  $region38: #{decoder_forward.9} parent=0
    _
  %s10 = ssub.s32 1, %s8
  %s11 = scalar_select 0, %s10, %s8
  // Predicated region
  $region2: #{decoder_forward.9} parent=0 // pred_check
    _
  $region3: #{decoder_forward.9} parent=0 // pred_check_branch
    %13 = sbr.rel (0) target = $region5
  $region4: #{decoder_forward.9} parent=0 // pred_region
    _
  $region5: #{decoder_forward.9} parent=0 // pred_fallthru
    _
  // Predicated region
  $region6: #{decoder_forward.9} parent=0 // pred_check
    _
  $region7: #{decoder_forward.9} parent=0 // pred_check_branch
    %15 = sbr.rel (0) target = $region9
  $region8: #{decoder_forward.9} parent=0 // pred_region
    _
  $region9: #{decoder_forward.9} parent=0 // pred_fallthru
    _
  // Predicated region
  $region10: #{decoder_forward.9} parent=0 // pred_check
    _
  $region11: #{decoder_forward.9} parent=0 // pred_check_branch
    %17 = sbr.rel (0) target = $region13
  $region12: #{decoder_forward.9} parent=0 // pred_region
    _
  $region13: #{decoder_forward.9} parent=0 // pred_fallthru
    _
  // Predicated region
  $region14: #{decoder_forward.9} parent=0 // pred_check
    _
  $region15: #{decoder_forward.9} parent=0 // pred_check_branch
    %19 = sbr.rel (0) target = $region17
  $region16: #{decoder_forward.9} parent=0 // pred_region
    _
  $region17: #{decoder_forward.9} parent=0 // pred_fallthru
    _
  // Predicated region
  $region18: #{decoder_forward.9} parent=0 // pred_check
    _
  $region19: #{decoder_forward.9} parent=0 // pred_check_branch
    %21 = sbr.rel (0) target = $region21
  $region20: #{decoder_forward.9} parent=0 // pred_region
    _
  $region21: #{decoder_forward.9} parent=0 // pred_fallthru
    _
  // Predicated region
  $region22: #{decoder_forward.9} parent=0 // pred_check
    _
  $region23: #{decoder_forward.9} parent=0 // pred_check_branch
    %23 = sbr.rel (0) target = $region25
  $region24: #{decoder_forward.9} parent=0 // pred_region
    _
  $region25: #{decoder_forward.9} parent=0 // pred_fallthru
    _
  // Predicated region
  $region26: #{decoder_forward.9} parent=0 // pred_check
    _
  $region27: #{decoder_forward.9} parent=0 // pred_check_branch
    %25 = sbr.rel (0) target = $region29
  $region28: #{decoder_forward.9} parent=0 // pred_region
    _
  $region29: #{decoder_forward.9} parent=0 // pred_fallthru
    _
  %v27 = vld [vmem:[%s0] sm:$0xf]
  %v28 = vld [vmem:[%s0 + $0x4] sm:$0xf]
  %v29 = vld [vmem:[%s1] sm:$0xf]
  %v30 = vld [vmem:[%s1 + $0x4] sm:$0xf]
  %v31 = vld [vmem:[%s1 + $0x8] sm:$0xf]
  %v32 = vld [vmem:[%s1 + $0xc] sm:$0xf]
  %v33 = vld [vmem:[%s2] sm:$0x1]
  %v35 = vperm.slane %v33, 0
  %v39 = vunpack.c.l.b16 %v27
  %v40 = vunpack.c.l.b16 %v28
  %v41 = vpack.c.b16 %v40, %v39
  %v46 = vunpack.c.l.b16 %v29
  %v47 = vunpack.c.l.b16 %v30
  %v48 = vunpack.c.l.b16 %v31
  %v49 = vunpack.c.l.b16 %v32
  %v50 = vpack.c.b16 %v47, %v46
  %v51 = vpack.c.b16 %v49, %v48
  %vm54 = vcmask 261120
  %v56 = vsel %vm54, %v41, 0
  %58 = vmatpush.bf16.msra.mxu0 0
  %59 = vmatpush.bf16.msra.mxu0 0
  %60 = vmatpush.bf16.msra.mxu0 0
  %61 = vmatpush.bf16.msra.mxu0 0
  %62 = vmatpush.bf16.msra.mxu0 0
  %63 = vmatpush.bf16.msra.mxu0 0
  %64 = vmatpush.bf16.msra.mxu0 %v51
  %65 = vmatpush.bf16.msra.mxu0 %v50
  %66 = vmatmul.bf16.gmra.mxu0 %v56
  %v67 = vpop.f32.mrf.mxu0
  %v68 = vadd.f32 %v35, %v67
  %v69 = vpop.f32.mrf.mxu0
  %v70 = vadd.f32 %v35, %v69
  %71 = vdwg.mxu0
  %v72 = vmax.f32 %v68, 0.0
  %v73 = vmax.f32 %v70, 0.0
  %v74 = vpack.c.bf16 %v73, %v72
  %v75 = vld [vmem:[%s3] sm:$0xf]
  %v76 = vld [vmem:[%s3 + $0x4] sm:$0xf]
  %v77 = vld [vmem:[%s3 + $0x8] sm:$0xf]
  %v78 = vld [vmem:[%s3 + $0xc] sm:$0xf]
  %v79 = vld [vmem:[%s3 + $0x10] sm:$0xf]
  %v80 = vld [vmem:[%s3 + $0x14] sm:$0xf]
  %v81 = vld [vmem:[%s3 + $0x18] sm:$0xf]
  %v82 = vld [vmem:[%s3 + $0x1c] sm:$0xf]
  %v83 = vld [vmem:[%s4] sm:$0x1]
  %v85 = vperm.slane %v83, 0
  %v95 = vunpack.c.l.b16 %v75
  %v96 = vunpack.c.l.b16 %v76
  %v97 = vunpack.c.l.b16 %v77
  %v98 = vunpack.c.l.b16 %v78
  %v99 = vunpack.c.l.b16 %v79
  %v100 = vunpack.c.l.b16 %v80
  %v101 = vunpack.c.l.b16 %v81
  %v102 = vunpack.c.l.b16 %v82
  %v103 = vpack.c.b16 %v96, %v95
  %v104 = vpack.c.b16 %v98, %v97
  %v105 = vpack.c.b16 %v100, %v99
  %v106 = vpack.c.b16 %v102, %v101
  %vm111 = vcmask 523264
  %v113 = vsel %vm111, %v74, 0
  %115 = vmatpush.bf16.msra.mxu0 0
  %116 = vmatpush.bf16.msra.mxu0 0
  %117 = vmatpush.bf16.msra.mxu0 0
  %118 = vmatpush.bf16.msra.mxu0 0
  %119 = vmatpush.bf16.msra.mxu0 %v106
  %120 = vmatpush.bf16.msra.mxu0 %v105
  %121 = vmatpush.bf16.msra.mxu0 %v104
  %122 = vmatpush.bf16.msra.mxu0 %v103
  %123 = vmatmul.bf16.gmra.mxu0 %v113
  %v124 = vpop.f32.mrf.mxu0
  %v125 = vadd.f32 %v85, %v124
  %v126 = vpop.f32.mrf.mxu0
  %v127 = vadd.f32 %v85, %v126
  %128 = vdwg.mxu0
  %v129 = vunpack.c.l.bf16 %v27
  %v130 = vunpack.c.l.bf16 %v28
  %v131 = vadd.f32 %v129, %v125
  %v132 = vadd.f32 %v130, %v127
  %v133 = vsel %vm54, %v131, 0.0
  %134 = vadd.xlane.f32.xlu0 %v133
  %v135 = vpop.xlane.xlu0 %134
  %v136 = vsel %vm54, %v132, 0.0
  %137 = vadd.xlane.f32.xlu0 %v136
  %v138 = vpop.xlane.xlu0 %137
  %v139 = vrcp.pop 32.0
  %v140 = vmul.f32 32.0, %v139
  %v141 = vsub.f32 1.0, %v140
  %v142 = vmul.f32 %v139, %v141
  %v143 = vadd.f32 %v139, %v142
  %vm144 = vweird.f32 %v139
  %v145 = vsel %vm144, %v139, %v143
  %v146 = vmul.f32 %v135, %v145
  %v147 = vmul.f32 %v138, %v145
  %v148 = vsub.f32 %v131, %v146
  %v149 = vsub.f32 %v132, %v147
  %v150 = vmul.f32 %v148, %v148
  %v151 = vmul.f32 %v149, %v149
  %v152 = vsel %vm54, %v150, 0.0
  %153 = vadd.xlane.f32.xlu0 %v152
  %v154 = vpop.xlane.xlu0 %153
  %v155 = vsel %vm54, %v151, 0.0
  %156 = vadd.xlane.f32.xlu0 %v155
  %v157 = vpop.xlane.xlu0 %156
  %v158 = vmul.f32 %v154, %v145
  %v159 = vmul.f32 %v157, %v145
  %v160 = vadd.f32 %v158, 1e-05
  %v161 = vadd.f32 %v159, 1e-05
  %v162 = vrsqrt.pop %v160
  %v163 = vmul.f32 %v162, %v160
  %v164 = vmul.f32 %v163, %v162
  %v165 = vmul.f32 0.5, %v164
  %v166 = vsub.f32 1.5, %v165
  %v167 = vmul.f32 %v162, %v166
  %vm168 = vweird.f32 %v160
  %vm169 = vweird.f32 %v162
  %vm170 = vmor %vm168, %vm169
  %v171 = vsel %vm170, %v162, %v167
  %v172 = vrsqrt.pop %v161
  %v173 = vmul.f32 %v172, %v161
  %v174 = vmul.f32 %v173, %v172
  %v175 = vmul.f32 0.5, %v174
  %v176 = vsub.f32 1.5, %v175
  %v177 = vmul.f32 %v172, %v176
  %vm178 = vweird.f32 %v161
  %vm179 = vweird.f32 %v172
  %vm180 = vmor %vm178, %vm179
  %v181 = vsel %vm180, %v172, %v177
  %v182 = vmul.f32 %v148, %v171
  %v183 = vmul.f32 %v149, %v181
  %v184 = vld [vmem:[%s5] sm:$0x1]
  %v186 = vperm.slane %v184, 0
  %v188 = vmul.f32 %v182, %v186
  %v189 = vmul.f32 %v183, %v186
  %v190 = vld [vmem:[%s6] sm:$0x1]
  %v192 = vperm.slane %v190, 0
  %v194 = vadd.f32 %v188, %v192
  %v195 = vadd.f32 %v189, %v192
  %v196 = vpack.c.bf16 %v194, %v194
  %v197 = vpack.c.bf16 %v195, %v195
  %vm198 = vcmask 257024
  %199 = vst.msk [vmem:[%s7] sm:$0xf] %vm198, %v196
  %200 = vst.msk [vmem:[%s7 + $0x4] sm:$0xf] %vm198, %v197
  // Predicated region
  $region30: #{decoder_forward.9} parent=0 // pred_check
    _
  $region31: #{decoder_forward.9} parent=0 // pred_check_branch
    %202 = sbr.rel (0) target = $region33
  $region32: #{decoder_forward.9} parent=0 // pred_region
    _
  $region33: #{decoder_forward.9} parent=0 // pred_fallthru
    _
  // Predicated region
  $region34: #{decoder_forward.9} parent=0 // pred_check
    _
  $region35: #{decoder_forward.9} parent=0 // pred_check_branch
    %204 = sbr.rel (0) target = $region37
  $region36: #{decoder_forward.9} parent=0 // pred_region
    _
  $region37: #{decoder_forward.9} parent=0 // pred_fallthru
    _

// kernel: decoder_forward.11
$region0: #{decoder_forward.11}
  #allocation0 [shape = 'u32[]', space=smem, size = 0x4, offset = 0x4, fixed_abs, tag = 'smem constant byte address 0x4 - core index']
  #allocation1 [shape = 'u32[72,128]{1,0:T(1,128)}', space=vmem, size = 0x9000, scoped, tag = 'internal scratch']
  %s0 = inlined_call_operand.vmem [shape: bf16[2,8,32], index: 0, kind: input, shape index: {}]
  %s1 = inlined_call_operand.vmem [shape: bf16[2,8,32], index: 1, kind: input, shape index: {}]
  %s2 = inlined_call_operand.vmem [shape: f32[2,1,8], index: 2, kind: input, shape index: {}]
  %s3 = inlined_call_operand.vmem [shape: bf16[32,32], index: 3, kind: input, shape index: {}]
  %s4 = inlined_call_operand.vmem [shape: f32[1,32], index: 4, kind: input, shape index: {}]
  %s5 = inlined_call_operand.vmem [shape: bf16[32,64], index: 5, kind: input, shape index: {}]
  %s6 = inlined_call_operand.vmem [shape: f32[1,64], index: 6, kind: input, shape index: {}]
  %s7 = inlined_call_operand.vmem [shape: bf16[32,32], index: 7, kind: input, shape index: {}]
  %s8 = inlined_call_operand.vmem [shape: f32[1,32], index: 8, kind: input, shape index: {}]
  %s9 = inlined_call_operand.vmem [shape: f32[1,32], index: 9, kind: input, shape index: {}]
  %s10 = inlined_call_operand.vmem [shape: f32[1,32], index: 10, kind: input, shape index: {}]
  %s11 = inlined_call_operand.vmem [shape: bf16[2,8,32], index: 11, kind: output, shape index: {0}]
  %s12 = inlined_call_operand.hbm [shape: f32[2,4,8,8], index: 12, kind: output, shape index: {1}]
  %13 = xla_tuple %s11, %s12
  %s14 = sld [smem:[#allocation0]]
  $region85: #{decoder_forward.11} parent=0
    _
  %s16 = ssub.s32 1, %s14
  %s17 = scalar_select 0, %s16, %s14
  $region1: #{decoder_forward.11} parent=0
    #allocation2 [shape = 'u8[32768]{0}', space=vmem, size = 0x8000, scoped, tag = 'output window, operand 1']
    #allocation3 [shape = 's32[2]{0}', space=sflag, size = 0x8, scoped, tag = 'scoped memory for decoder_forward.11']
    %18 = vsyncpa [#allocation3], 0
    %s19 = scalar_lea.sflag [#allocation3], 1
    %20 = vsyncpa %s19, 0
    loop: start=0, step=1, limit=4
    $region2: #{decoder_forward.11} parent=1 // loop_pre_header
      _
    $region3: #{decoder_forward.11} parent=1 // loop_header
      %s22 = sphi 0, %s26
      %p23 = scmp.ge.s32.totalorder %s22, 4
      %s32 = sphi 0, %s34
      %s35 = sphi 0, %s32
      %s36 = sphi 0, %s35
      %s52 = sphi 0, %s36
      %s58 = sphi 0, %s60
      %s61 = sphi 0, %s58
      %s62 = sphi 0, %s61
      %s78 = sphi 0, %s62
      %s84 = sphi 0, %s86
      %s87 = sphi 0, %s84
      %s88 = sphi 0, %s87
      %s104 = sphi 0, %s88
      %s108 = sphi 0, %s108
      %s110 = sphi 0, %s108
      %s111 = sphi 0, %s110
      %s125 = sphi 0, %s111
      %s129 = sphi 0, %s129
      %s131 = sphi 0, %s129
      %s132 = sphi 0, %s131
      %s146 = sphi 0, %s132
      %s150 = sphi 0, %s150
      %s152 = sphi 0, %s150
      %s153 = sphi 0, %s152
      %s167 = sphi 0, %s153
      %s171 = sphi 0, %s171
      %s173 = sphi 0, %s171
      %s174 = sphi 0, %s173
      %s188 = sphi 0, %s174
      %s192 = sphi 0, %s192
      %s194 = sphi 0, %s192
      %s195 = sphi 0, %s194
      %s209 = sphi 0, %s195
      %s213 = sphi 0, %s213
      %s215 = sphi 0, %s213
      %s216 = sphi 0, %s215
      %s230 = sphi 0, %s216
      %s234 = sphi 0, %s234
      %s236 = sphi 0, %s234
      %s237 = sphi 0, %s236
      %s251 = sphi 0, %s237
      %s255 = sphi 0, %s255
      %s257 = sphi 0, %s255
      %s258 = sphi 0, %s257
      %s272 = sphi 0, %s258
      %s278 = sphi 0, %s280
      %s281 = sphi 0, %s278
      %s282 = sphi 0, %s281
      %s298 = sphi 0, %s282
      %s304 = sphi 0, %s306
      %s307 = sphi 0, %s304
      %s308 = sphi 0, %s307
      %s324 = sphi 0, %s308
    $region4: #{decoder_forward.11} parent=1 // loop_header_branch
      %25 = sbr.rel (%p23) target = $region8
    $region5: #{decoder_forward.11} parent=1 // loop_body
      %s27 = ssub.s32 %s22, 1
      %s28 = ssub.s32 %s22, 2
      %s29 = sadd.s32 %s22, 1
      %s30 = ssub.s32 %s22, %s29
      %p31 = scmp.eq.s32.totalorder %s30, 0
      %s33 = sadd.s32 %s32, 1
      %s34 = scalar_select %p31, %s32, %s33
      %p37 = pneg %p31
      %p38 = scmp.eq.s32.totalorder %s22, 1
      %p39 = por %p37, %p38
      %p40 = scmp.ne.s32.totalorder %s32, %s35
      %p41 = scmp.eq.s32.totalorder %s22, 0
      %p42 = por %p40, %p41
      %p43 = scmp.ne.s32.totalorder %s32, %s35
      %p44 = scmp.eq.s32.totalorder %s27, 1
      %p45 = por %p43, %p44
      %p46 = scmp.ne.s32.totalorder %s35, %s36
      %p47 = scmp.eq.s32.totalorder %s27, 0
      %p48 = por %p46, %p47
      %p49 = scmp.ne.s32.totalorder %s35, %s36
      %p50 = scmp.eq.s32.totalorder %s28, 1
      %p51 = por %p49, %p50
      %p53 = scmp.ne.s32.totalorder %s36, %s52
      %p54 = scmp.eq.s32.totalorder %s28, 0
      %p55 = por %p53, %p54
      %s56 = ssub.s32 %s22, %s29
      %p57 = scmp.eq.s32.totalorder %s56, 0
      %s59 = sadd.s32 %s58, 1
      %s60 = scalar_select %p57, %s58, %s59
      %p63 = pneg %p57
      %p64 = scmp.eq.s32.totalorder %s22, 1
      %p65 = por %p63, %p64
      %p66 = scmp.ne.s32.totalorder %s58, %s61
      %p67 = scmp.eq.s32.totalorder %s22, 0
      %p68 = por %p66, %p67
      %p69 = scmp.ne.s32.totalorder %s58, %s61
      %p70 = scmp.eq.s32.totalorder %s27, 1
      %p71 = por %p69, %p70
      %p72 = scmp.ne.s32.totalorder %s61, %s62
      %p73 = scmp.eq.s32.totalorder %s27, 0
      %p74 = por %p72, %p73
      %p75 = scmp.ne.s32.totalorder %s61, %s62
      %p76 = scmp.eq.s32.totalorder %s28, 1
      %p77 = por %p75, %p76
      %p79 = scmp.ne.s32.totalorder %s62, %s78
      %p80 = scmp.eq.s32.totalorder %s28, 0
      %p81 = por %p79, %p80
      %s82 = ssub.s32 %s22, %s29
      %p83 = scmp.eq.s32.totalorder %s82, 0
      %s85 = sadd.s32 %s84, 1
      %s86 = scalar_select %p83, %s84, %s85
      %p89 = pneg %p83
      %p90 = scmp.eq.s32.totalorder %s22, 1
      %p91 = por %p89, %p90
      %p92 = scmp.ne.s32.totalorder %s84, %s87
      %p93 = scmp.eq.s32.totalorder %s22, 0
      %p94 = por %p92, %p93
      %p95 = scmp.ne.s32.totalorder %s84, %s87
      %p96 = scmp.eq.s32.totalorder %s27, 1
      %p97 = por %p95, %p96
      %p98 = scmp.ne.s32.totalorder %s87, %s88
      %p99 = scmp.eq.s32.totalorder %s27, 0
      %p100 = por %p98, %p99
      %p101 = scmp.ne.s32.totalorder %s87, %s88
      %p102 = scmp.eq.s32.totalorder %s28, 1
      %p103 = por %p101, %p102
      %p105 = scmp.ne.s32.totalorder %s88, %s104
      %p106 = scmp.eq.s32.totalorder %s28, 0
      %p107 = por %p105, %p106
      %s109 = sadd.s32 %s108, 1
      %p112 = scmp.eq.s32.totalorder %s22, 1
      %p113 = scmp.ne.s32.totalorder %s108, %s110
      %p114 = scmp.eq.s32.totalorder %s22, 0
      %p115 = por %p113, %p114
      %p116 = scmp.ne.s32.totalorder %s108, %s110
      %p117 = scmp.eq.s32.totalorder %s27, 1
      %p118 = por %p116, %p117
      %p119 = scmp.ne.s32.totalorder %s110, %s111
      %p120 = scmp.eq.s32.totalorder %s27, 0
      %p121 = por %p119, %p120
      %p122 = scmp.ne.s32.totalorder %s110, %s111
      %p123 = scmp.eq.s32.totalorder %s28, 1
      %p124 = por %p122, %p123
      %p126 = scmp.ne.s32.totalorder %s111, %s125
      %p127 = scmp.eq.s32.totalorder %s28, 0
      %p128 = por %p126, %p127
      %s130 = sadd.s32 %s129, 1
      %p133 = scmp.eq.s32.totalorder %s22, 1
      %p134 = scmp.ne.s32.totalorder %s129, %s131
      %p135 = scmp.eq.s32.totalorder %s22, 0
      %p136 = por %p134, %p135
      %p137 = scmp.ne.s32.totalorder %s129, %s131
      %p138 = scmp.eq.s32.totalorder %s27, 1
      %p139 = por %p137, %p138
      %p140 = scmp.ne.s32.totalorder %s131, %s132
      %p141 = scmp.eq.s32.totalorder %s27, 0
      %p142 = por %p140, %p141
      %p143 = scmp.ne.s32.totalorder %s131, %s132
      %p144 = scmp.eq.s32.totalorder %s28, 1
      %p145 = por %p143, %p144
      %p147 = scmp.ne.s32.totalorder %s132, %s146
      %p148 = scmp.eq.s32.totalorder %s28, 0
      %p149 = por %p147, %p148
      %s151 = sadd.s32 %s150, 1
      %p154 = scmp.eq.s32.totalorder %s22, 1
      %p155 = scmp.ne.s32.totalorder %s150, %s152
      %p156 = scmp.eq.s32.totalorder %s22, 0
      %p157 = por %p155, %p156
      %p158 = scmp.ne.s32.totalorder %s150, %s152
      %p159 = scmp.eq.s32.totalorder %s27, 1
      %p160 = por %p158, %p159
      %p161 = scmp.ne.s32.totalorder %s152, %s153
      %p162 = scmp.eq.s32.totalorder %s27, 0
      %p163 = por %p161, %p162
      %p164 = scmp.ne.s32.totalorder %s152, %s153
      %p165 = scmp.eq.s32.totalorder %s28, 1
      %p166 = por %p164, %p165
      %p168 = scmp.ne.s32.totalorder %s153, %s167
      %p169 = scmp.eq.s32.totalorder %s28, 0
      %p170 = por %p168, %p169
      %s172 = sadd.s32 %s171, 1
      %p175 = scmp.eq.s32.totalorder %s22, 1
      %p176 = scmp.ne.s32.totalorder %s171, %s173
      %p177 = scmp.eq.s32.totalorder %s22, 0
      %p178 = por %p176, %p177
      %p179 = scmp.ne.s32.totalorder %s171, %s173
      %p180 = scmp.eq.s32.totalorder %s27, 1
      %p181 = por %p179, %p180
      %p182 = scmp.ne.s32.totalorder %s173, %s174
      %p183 = scmp.eq.s32.totalorder %s27, 0
      %p184 = por %p182, %p183
      %p185 = scmp.ne.s32.totalorder %s173, %s174
      %p186 = scmp.eq.s32.totalorder %s28, 1
      %p187 = por %p185, %p186
      %p189 = scmp.ne.s32.totalorder %s174, %s188
      %p190 = scmp.eq.s32.totalorder %s28, 0
      %p191 = por %p189, %p190
      %s193 = sadd.s32 %s192, 1
      %p196 = scmp.eq.s32.totalorder %s22, 1
      %p197 = scmp.ne.s32.totalorder %s192, %s194
      %p198 = scmp.eq.s32.totalorder %s22, 0
      %p199 = por %p197, %p198
      %p200 = scmp.ne.s32.totalorder %s192, %s194
      %p201 = scmp.eq.s32.totalorder %s27, 1
      %p202 = por %p200, %p201
      %p203 = scmp.ne.s32.totalorder %s194, %s195
      %p204 = scmp.eq.s32.totalorder %s27, 0
      %p205 = por %p203, %p204
      %p206 = scmp.ne.s32.totalorder %s194, %s195
      %p207 = scmp.eq.s32.totalorder %s28, 1
      %p208 = por %p206, %p207
      %p210 = scmp.ne.s32.totalorder %s195, %s209
      %p211 = scmp.eq.s32.totalorder %s28, 0
      %p212 = por %p210, %p211
      %s214 = sadd.s32 %s213, 1
      %p217 = scmp.eq.s32.totalorder %s22, 1
      %p218 = scmp.ne.s32.totalorder %s213, %s215
      %p219 = scmp.eq.s32.totalorder %s22, 0
      %p220 = por %p218, %p219
      %p221 = scmp.ne.s32.totalorder %s213, %s215
      %p222 = scmp.eq.s32.totalorder %s27, 1
      %p223 = por %p221, %p222
      %p224 = scmp.ne.s32.totalorder %s215, %s216
      %p225 = scmp.eq.s32.totalorder %s27, 0
      %p226 = por %p224, %p225
      %p227 = scmp.ne.s32.totalorder %s215, %s216
      %p228 = scmp.eq.s32.totalorder %s28, 1
      %p229 = por %p227, %p228
      %p231 = scmp.ne.s32.totalorder %s216, %s230
      %p232 = scmp.eq.s32.totalorder %s28, 0
      %p233 = por %p231, %p232
      %s235 = sadd.s32 %s234, 1
      %p238 = scmp.eq.s32.totalorder %s22, 1
      %p239 = scmp.ne.s32.totalorder %s234, %s236
      %p240 = scmp.eq.s32.totalorder %s22, 0
      %p241 = por %p239, %p240
      %p242 = scmp.ne.s32.totalorder %s234, %s236
      %p243 = scmp.eq.s32.totalorder %s27, 1
      %p244 = por %p242, %p243
      %p245 = scmp.ne.s32.totalorder %s236, %s237
      %p246 = scmp.eq.s32.totalorder %s27, 0
      %p247 = por %p245, %p246
      %p248 = scmp.ne.s32.totalorder %s236, %s237
      %p249 = scmp.eq.s32.totalorder %s28, 1
      %p250 = por %p248, %p249
      %p252 = scmp.ne.s32.totalorder %s237, %s251
      %p253 = scmp.eq.s32.totalorder %s28, 0
      %p254 = por %p252, %p253
      %s256 = sadd.s32 %s255, 1
      %p259 = scmp.eq.s32.totalorder %s22, 1
      %p260 = scmp.ne.s32.totalorder %s255, %s257
      %p261 = scmp.eq.s32.totalorder %s22, 0
      %p262 = por %p260, %p261
      %p263 = scmp.ne.s32.totalorder %s255, %s257
      %p264 = scmp.eq.s32.totalorder %s27, 1
      %p265 = por %p263, %p264
      %p266 = scmp.ne.s32.totalorder %s257, %s258
      %p267 = scmp.eq.s32.totalorder %s27, 0
      %p268 = por %p266, %p267
      %p269 = scmp.ne.s32.totalorder %s257, %s258
      %p270 = scmp.eq.s32.totalorder %s28, 1
      %p271 = por %p269, %p270
      %p273 = scmp.ne.s32.totalorder %s258, %s272
      %p274 = scmp.eq.s32.totalorder %s28, 0
      %p275 = por %p273, %p274
      %s276 = ssub.s32 %s22, %s29
      %p277 = scmp.eq.s32.totalorder %s276, 0
      %s279 = sadd.s32 %s278, 1
      %s280 = scalar_select %p277, %s278, %s279
      %p283 = pneg %p277
      %p284 = scmp.eq.s32.totalorder %s22, 1
      %p285 = por %p283, %p284
      %p286 = scmp.ne.s32.totalorder %s278, %s281
      %p287 = scmp.eq.s32.totalorder %s22, 0
      %p288 = por %p286, %p287
      %p289 = scmp.ne.s32.totalorder %s278, %s281
      %p290 = scmp.eq.s32.totalorder %s27, 1
      %p291 = por %p289, %p290
      %p292 = scmp.ne.s32.totalorder %s281, %s282
      %p293 = scmp.eq.s32.totalorder %s27, 0
      %p294 = por %p292, %p293
      %p295 = scmp.ne.s32.totalorder %s281, %s282
      %p296 = scmp.eq.s32.totalorder %s28, 1
      %p297 = por %p295, %p296
      %p299 = scmp.ne.s32.totalorder %s282, %s298
      %p300 = scmp.eq.s32.totalorder %s28, 0
      %p301 = por %p299, %p300
      %s302 = ssub.s32 %s22, %s29
      %p303 = scmp.eq.s32.totalorder %s302, 0
      %s305 = sadd.s32 %s304, 1
      %s306 = scalar_select %p303, %s304, %s305
      %p309 = pneg %p303
      %p310 = scmp.eq.s32.totalorder %s22, 1
      %p311 = por %p309, %p310
      %p312 = scmp.ne.s32.totalorder %s304, %s307
      %p313 = scmp.eq.s32.totalorder %s22, 0
      %p314 = por %p312, %p313
      %p315 = scmp.ne.s32.totalorder %s304, %s307
      %p316 = scmp.eq.s32.totalorder %s27, 1
      %p317 = por %p315, %p316
      %p318 = scmp.ne.s32.totalorder %s307, %s308
      %p319 = scmp.eq.s32.totalorder %s27, 0
      %p320 = por %p318, %p319
      %p321 = scmp.ne.s32.totalorder %s307, %s308
      %p322 = scmp.eq.s32.totalorder %s28, 1
      %p323 = por %p321, %p322
      %p325 = scmp.ne.s32.totalorder %s308, %s324
      %p326 = scmp.eq.s32.totalorder %s28, 0
      %p327 = por %p325, %p326
      %p328 = scmp.le.s32.totalorder 1, %s22
      %p329 = scmp.lt.s32.totalorder %s22, 3
      %p330 = pnand %p328, %p329
      %p331 = pneg %p330
      // Predicated region
      $region9: #{decoder_forward.11} parent=5 // pred_check
        _
      $region10: #{decoder_forward.11} parent=5 // pred_check_branch
        %333 = sbr.rel (%p330) target = $region12
      $region11: #{decoder_forward.11} parent=5 // pred_region
        %s334 = ssub.s32 %s22, 1
        // Predicated region
        $region13: #{decoder_forward.11} parent=11 // pred_check
          %p335 = pneg %p121
        $region14: #{decoder_forward.11} parent=11 // pred_check_branch
          %337 = sbr.rel (%p335) target = $region16
        $region15: #{decoder_forward.11} parent=11 // pred_region
          _
        $region16: #{decoder_forward.11} parent=11 // pred_fallthru
          _
        // Predicated region
        $region17: #{decoder_forward.11} parent=11 // pred_check
          %p338 = pneg %p142
        $region18: #{decoder_forward.11} parent=11 // pred_check_branch
          %340 = sbr.rel (%p338) target = $region20
        $region19: #{decoder_forward.11} parent=11 // pred_region
          _
        $region20: #{decoder_forward.11} parent=11 // pred_fallthru
          _
        // Predicated region
        $region21: #{decoder_forward.11} parent=11 // pred_check
          %p341 = pneg %p163
        $region22: #{decoder_forward.11} parent=11 // pred_check_branch
          %343 = sbr.rel (%p341) target = $region24
        $region23: #{decoder_forward.11} parent=11 // pred_region
          _
        $region24: #{decoder_forward.11} parent=11 // pred_fallthru
          _
        // Predicated region
        $region25: #{decoder_forward.11} parent=11 // pred_check
          %p344 = pneg %p184
        $region26: #{decoder_forward.11} parent=11 // pred_check_branch
          %346 = sbr.rel (%p344) target = $region28
        $region27: #{decoder_forward.11} parent=11 // pred_region
          _
        $region28: #{decoder_forward.11} parent=11 // pred_fallthru
          _
        // Predicated region
        $region29: #{decoder_forward.11} parent=11 // pred_check
          %p347 = pneg %p205
        $region30: #{decoder_forward.11} parent=11 // pred_check_branch
          %349 = sbr.rel (%p347) target = $region32
        $region31: #{decoder_forward.11} parent=11 // pred_region
          _
        $region32: #{decoder_forward.11} parent=11 // pred_fallthru
          _
        // Predicated region
        $region33: #{decoder_forward.11} parent=11 // pred_check
          %p350 = pneg %p226
        $region34: #{decoder_forward.11} parent=11 // pred_check_branch
          %352 = sbr.rel (%p350) target = $region36
        $region35: #{decoder_forward.11} parent=11 // pred_region
          _
        $region36: #{decoder_forward.11} parent=11 // pred_fallthru
          _
        // Predicated region
        $region37: #{decoder_forward.11} parent=11 // pred_check
          %p353 = pneg %p247
        $region38: #{decoder_forward.11} parent=11 // pred_check_branch
          %355 = sbr.rel (%p353) target = $region40
        $region39: #{decoder_forward.11} parent=11 // pred_region
          _
        $region40: #{decoder_forward.11} parent=11 // pred_fallthru
          _
        // Predicated region
        $region41: #{decoder_forward.11} parent=11 // pred_check
          %p356 = pneg %p268
        $region42: #{decoder_forward.11} parent=11 // pred_check_branch
          %358 = sbr.rel (%p356) target = $region44
        $region43: #{decoder_forward.11} parent=11 // pred_region
          _
        $region44: #{decoder_forward.11} parent=11 // pred_fallthru
          _
      $region12: #{decoder_forward.11} parent=5 // pred_fallthru
        _
      %p359 = scmp.lt.s32.totalorder %s22, 2
      // Predicated region
      $region45: #{decoder_forward.11} parent=5 // pred_check
        %p360 = pneg %p359
      $region46: #{decoder_forward.11} parent=5 // pred_check_branch
        %362 = sbr.rel (%p360) target = $region48
      $region47: #{decoder_forward.11} parent=5 // pred_region
        // Predicated region
        $region49: #{decoder_forward.11} parent=47 // pred_check
          %p363 = pneg %p42
        $region50: #{decoder_forward.11} parent=47 // pred_check_branch
          %365 = sbr.rel (%p363) target = $region52
        $region51: #{decoder_forward.11} parent=47 // pred_region
          %p366 = scmp.lt.s32.totalorder %s22, 1
          %s367 = scalar_select %p366, %s22, 1
          %s368 = smul.addr %s367, 4
          %s369 = scalar_lea.vmem %s0, %s368
        $region52: #{decoder_forward.11} parent=47 // pred_fallthru
          _
        // Predicated region
        $region53: #{decoder_forward.11} parent=47 // pred_check
          %p370 = pneg %p68
        $region54: #{decoder_forward.11} parent=47 // pred_check_branch
          %372 = sbr.rel (%p370) target = $region56
        $region55: #{decoder_forward.11} parent=47 // pred_region
          %p373 = scmp.lt.s32.totalorder %s22, 1
          %s374 = scalar_select %p373, %s22, 1
          %s375 = smul.addr %s374, 4
          %s376 = scalar_lea.vmem %s1, %s375
        $region56: #{decoder_forward.11} parent=47 // pred_fallthru
          _
        // Predicated region
        $region57: #{decoder_forward.11} parent=47 // pred_check
          %p377 = pneg %p94
        $region58: #{decoder_forward.11} parent=47 // pred_check_branch
          %379 = sbr.rel (%p377) target = $region60
        $region59: #{decoder_forward.11} parent=47 // pred_region
          %p380 = scmp.lt.s32.totalorder %s22, 1
          %s381 = scalar_select %p380, %s22, 1
          %s382 = scalar_lea.vmem %s2, %s381
        $region60: #{decoder_forward.11} parent=47 // pred_fallthru
          _
      $region48: #{decoder_forward.11} parent=5 // pred_fallthru
        _
      %p383 = scmp.le.s32.totalorder 1, %s22
      %p384 = scmp.lt.s32.totalorder %s22, 3
      %p385 = pnand %p383, %p384
      %p386 = pneg %p385
      // Predicated region
      $region61: #{decoder_forward.11} parent=5 // pred_check
        _
      $region62: #{decoder_forward.11} parent=5 // pred_check_branch
        %388 = sbr.rel (%p385) target = $region64
      $region63: #{decoder_forward.11} parent=5 // pred_region
        %s389 = ssub.s32 %s22, 1
        %p390 = scmp.lt.s32.totalorder %s27, 1
        %s391 = scalar_select %p390, %s27, 1
        %s392 = smul.addr %s391, 4
        %s393 = scalar_lea.vmem %s0, %s392
        %p394 = pneg %p48
        %p395 = pneg %p45
        %p396 = scmp.lt.s32.totalorder %s27, 1
        %s397 = scalar_select %p396, %s27, 1
        %s398 = smul.addr %s397, 4
        %s399 = scalar_lea.vmem %s1, %s398
        %p400 = pneg %p74
        %p401 = pneg %p71
        %p402 = scmp.lt.s32.totalorder %s27, 1
        %s403 = scalar_select %p402, %s27, 1
        %s404 = scalar_lea.vmem %s2, %s403
        %p405 = pneg %p100
        %p406 = pneg %p97
        %p407 = pneg %p121
        %p408 = pneg %p118
        %p409 = pneg %p142
        %p410 = pneg %p139
        %p411 = pneg %p163
        %p412 = pneg %p160
        %p413 = pneg %p184
        %p414 = pneg %p181
        %p415 = pneg %p205
        %p416 = pneg %p202
        %p417 = pneg %p226
        %p418 = pneg %p223
        %p419 = pneg %p247
        %p420 = pneg %p244
        %p421 = pneg %p268
        %p422 = pneg %p265
        %p423 = pneg %p294
        %p424 = pneg %p291
        %p425 = scmp.lt.s32.totalorder %s27, 1
        %s426 = scalar_select %p425, %s27, 1
        %s427 = smul.addr %s426, 4
        %s428 = scalar_lea.vmem %s11, %s427
        %p429 = pneg %p320
        %p430 = pneg %p317
        %s431 = sand.u32 %s307, 1
        %s432 = scalar_lea.sflag [#allocation3], %s431
        %s433 = sand.u32 %s307, 1
        %s434 = smul.addr %s433, 32
        %s435 = scalar_lea.vmem [#allocation2], %s434
        %p436 = scmp.lt.s32.totalorder %s27, 1
        %s437 = scalar_select %p436, %s27, 1
        %s438 = smul.addr %s437, 4
        %s439 = scalar_lea.vmem %s0, %s438
        %p440 = scmp.lt.s32.totalorder %s27, 1
        %s441 = scalar_select %p440, %s27, 1
        %s442 = smul.addr %s441, 4
        %s443 = scalar_lea.vmem %s1, %s442
        %p444 = scmp.lt.s32.totalorder %s27, 1
        %s445 = scalar_select %p444, %s27, 1
        %s446 = scalar_lea.vmem %s2, %s445
        %p447 = scmp.lt.s32.totalorder %s27, 1
        %s448 = scalar_select %p447, %s27, 1
        %s449 = smul.addr %s448, 4
        %s450 = scalar_lea.vmem %s11, %s449
        %v452 = vld [vmem:[%s439] sm:$0xf]
        %v453 = vld [vmem:[%s443] sm:$0xf]
        %v454 = vld [vmem:[%s3] sm:$0xf]
        %v455 = vld [vmem:[%s3 + $0x4] sm:$0xf]
        %v456 = vld [vmem:[%s3 + $0x8] sm:$0xf]
        %v457 = vld [vmem:[%s3 + $0xc] sm:$0xf]
        %v458 = vld [vmem:[%s4] sm:$0x1]
        %v460 = vperm.slane %v458, 0
        %v466 = vunpack.c.l.b16 %v454
        %v467 = vunpack.c.l.b16 %v455
        %v468 = vunpack.c.l.b16 %v456
        %v469 = vunpack.c.l.b16 %v457
        %v470 = vpack.c.b16 %v467, %v466
        %v471 = vpack.c.b16 %v469, %v468
        %vm474 = vcmask 261120
        %v476 = vsel %vm474, %v452, 0
        %478 = vmatpush.bf16.msra.mxu0 0
        %479 = vmatpush.bf16.msra.mxu0 0
        %480 = vmatpush.bf16.msra.mxu0 0
        %481 = vmatpush.bf16.msra.mxu0 0
        %482 = vmatpush.bf16.msra.mxu0 0
        %483 = vmatpush.bf16.msra.mxu0 0
        %484 = vmatpush.bf16.msra.mxu0 %v471
        %485 = vmatpush.bf16.msra.mxu0 %v470
        %486 = vmatmul.bf16.gmra.mxu0 %v476
        %v487 = vpop.f32.mrf.mxu0
        %v488 = vadd.f32 %v460, %v487
        %v489 = vpop.f32.mrf.mxu0
        %490 = vdwg.mxu0
        %v491 = vld [vmem:[%s5] sm:$0xf]
        %v492 = vld [vmem:[%s5 + $0x4] sm:$0xf]
        %v493 = vld [vmem:[%s5 + $0x8] sm:$0xf]
        %v494 = vld [vmem:[%s5 + $0xc] sm:$0xf]
        %v495 = vld [vmem:[%s6] sm:$0x1]
        %v497 = vperm.slane %v495, 0
        %v503 = vunpack.c.l.b16 %v491
        %v504 = vunpack.c.l.b16 %v492
        %v505 = vunpack.c.l.b16 %v493
        %v506 = vunpack.c.l.b16 %v494
        %v507 = vpack.c.b16 %v504, %v503
        %v508 = vpack.c.b16 %v506, %v505
        %v512 = vsel %vm474, %v453, 0
        %514 = vmatpush.bf16.msra.mxu0 0
        %515 = vmatpush.bf16.msra.mxu0 0
        %516 = vmatpush.bf16.msra.mxu0 0
        %517 = vmatpush.bf16.msra.mxu0 0
        %518 = vmatpush.bf16.msra.mxu0 0
        %519 = vmatpush.bf16.msra.mxu0 0
        %520 = vmatpush.bf16.msra.mxu0 %v508
        %521 = vmatpush.bf16.msra.mxu0 %v507
        %522 = vmatmul.bf16.gmra.mxu0 %v512
        %v523 = vpop.f32.mrf.mxu0
        %v524 = vadd.f32 %v497, %v523
        %v525 = vpop.f32.mrf.mxu0
        %526 = vdwg.mxu0
        %v527 = vld [vmem:[%s446] sm:$0x1]
        %vm528 = vcmp.gt.f32.partialorder %v527, 0.0
        %v529 = vld [vmem:[%s7] sm:$0xf]
        %v530 = vld [vmem:[%s7 + $0x4] sm:$0xf]
        %v531 = vld [vmem:[%s7 + $0x8] sm:$0xf]
        %v532 = vld [vmem:[%s7 + $0xc] sm:$0xf]
        %v533 = vld [vmem:[%s8] sm:$0x1]
        %v534 = vunpack.c.l.bf16 %v452
        %v535 = vld [vmem:[%s9] sm:$0x1]
        %v536 = vld [vmem:[%s10] sm:$0x1]
        %v537 = vpack.c.bf16 %v488, %v488
        %v538 = vpack.c.bf16 %v524, %v524
        %vm539 = vcmask 64512
        %v541 = vsel %vm539, %v537, 0
        %v544 = vsel %vm539, %v538, 0
        %546 = vmatpush.bf16.xpose.msra.mxu0 0
        %547 = vmatpush.bf16.xpose.msra.mxu0 0
        %548 = vmatpush.bf16.xpose.msra.mxu0 0
        %549 = vmatpush.bf16.xpose.msra.mxu0 0
        %550 = vmatpush.bf16.xpose.msra.mxu0 0
        %551 = vmatpush.bf16.xpose.msra.mxu0 0
        %552 = vmatpush.bf16.xpose.msra.mxu0 0
        %553 = vmatpush.bf16.xpose.msra.mxu0 %v544
        %554 = vmatmul.bf16.gmra.mxu0 %v541
        %v555 = vpop.f32.mrf.mxu0
        %v556 = vadd.f32 0.0, %v555
        %v557 = vpop.f32.mrf.mxu0
        %558 = vdwg.mxu0
        %v559 = vsel %vm528, 1, 0
        %v560 = vperm.slane %v559, 0
        %vm561 = vcmp.eq.s32.totalorder %v560, 1
        %v562 = vsel %vm561, %v556, -1e+10
        %v563 = vsel %vm539, %v562, -inf
        %564 = vmax.xlane.f32.xlu0 %v563
        %v565 = vpop.xlane.xlu0 %564
        %v566 = vsub.f32 %v562, %v565
        %v567 = vmul.f32 %v566, 1.442695
        %v568 = vpow.pop %v567
        %v569 = vsel %vm539, %v568, 0.0
        %570 = vadd.xlane.f32.xlu0 %v569
        %v571 = vpop.xlane.xlu0 %570
        %v572 = vrcp.pop %v571
        %v573 = vmul.f32 %v571, %v572
        %v574 = vsub.f32 1.0, %v573
        %v575 = vmul.f32 %v572, %v574
        %v576 = vadd.f32 %v572, %v575
        %vm577 = vweird.f32 %v571
        %vm578 = vweird.f32 %v572
        %vm579 = vmor %vm577, %vm578
        %v580 = vsel %vm579, %v572, %v576
        %v581 = vand.u32 2147483647, %v571
        %vm582 = vcmp.eq.f32.partialorder %v581, 8.507059e+37
        %v583 = vand.u32 %v571, 2147483648
        %v584 = vor.u32 1.1754944e-38, %v583
        %v585 = vsel %vm582, %v584, %v580
        %v586 = vmul.f32 %v568, %v585
        %v587 = vpack.c.bf16 %v586, %v586
        %589 = vrot.lane.b32.xlu0 %v538, 96
        %v590 = vpop.permute.xlu0 %589
        %v592 = vsel %vm539, %v587, 0
        %vm594 = vcmask 1043456
        %v596 = vsel %vm594, %v590, 0
        %598 = vmatpush.bf16.msra.mxu0 0
        %599 = vmatpush.bf16.msra.mxu0 0
        %600 = vmatpush.bf16.msra.mxu0 0
        %601 = vmatpush.bf16.msra.mxu0 0
        %602 = vmatpush.bf16.msra.mxu0 0
        %603 = vmatpush.bf16.msra.mxu0 0
        %604 = vmatpush.bf16.msra.mxu0 0
        %605 = vmatpush.bf16.msra.mxu0 %v596
        %606 = vmatmul.bf16.gmra.mxu0 %v592
        %v607 = vpop.f32.mrf.mxu0
        %v608 = vadd.f32 0.0, %v607
        %v609 = vpop.f32.mrf.mxu0
        %610 = vdwg.mxu0
        %612 = vrot.lane.b32.xlu0 %v537, 120
        %v613 = vpop.permute.xlu0 %612
        %614 = vrot.lane.b32.xlu0 %v538, 120
        %v615 = vpop.permute.xlu0 %614
        %v617 = vsel %vm539, %v613, 0
        %v620 = vsel %vm539, %v615, 0
        %622 = vmatpush.bf16.xpose.msra.mxu0 0
        %623 = vmatpush.bf16.xpose.msra.mxu0 0
        %624 = vmatpush.bf16.xpose.msra.mxu0 0
        %625 = vmatpush.bf16.xpose.msra.mxu0 0
        %626 = vmatpush.bf16.xpose.msra.mxu0 0
        %627 = vmatpush.bf16.xpose.msra.mxu0 0
        %628 = vmatpush.bf16.xpose.msra.mxu0 0
        %629 = vmatpush.bf16.xpose.msra.mxu0 %v620
        %630 = vmatmul.bf16.gmra.mxu0 %v617
        %v631 = vpop.f32.mrf.mxu0
        %v632 = vadd.f32 0.0, %v631
        %v633 = vpop.f32.mrf.mxu0
        %634 = vdwg.mxu0
        %v635 = vsel %vm561, %v632, -1e+10
        %v636 = vsel %vm539, %v635, -inf
        %637 = vmax.xlane.f32.xlu0 %v636
        %v638 = vpop.xlane.xlu0 %637
        %v639 = vsub.f32 %v635, %v638
        %v640 = vmul.f32 %v639, 1.442695
        %v641 = vpow.pop %v640
        %v642 = vsel %vm539, %v641, 0.0
        %643 = vadd.xlane.f32.xlu0 %v642
        %v644 = vpop.xlane.xlu0 %643
        %v645 = vrcp.pop %v644
        %v646 = vmul.f32 %v644, %v645
        %v647 = vsub.f32 1.0, %v646
        %v648 = vmul.f32 %v645, %v647
        %v649 = vadd.f32 %v645, %v648
        %vm650 = vweird.f32 %v644
        %vm651 = vweird.f32 %v645
        %vm652 = vmor %vm650, %vm651
        %v653 = vsel %vm652, %v645, %v649
        %v654 = vand.u32 2147483647, %v644
        %vm655 = vcmp.eq.f32.partialorder %v654, 8.507059e+37
        %v656 = vand.u32 %v644, 2147483648
        %v657 = vor.u32 1.1754944e-38, %v656
        %v658 = vsel %vm655, %v657, %v653
        %v659 = vmul.f32 %v641, %v658
        %v660 = vpack.c.bf16 %v659, %v659
        %661 = vrot.lane.b32.xlu0 %v538, 88
        %v662 = vpop.permute.xlu0 %661
        %v664 = vsel %vm539, %v660, 0
        %v667 = vsel %vm594, %v662, 0
        %669 = vmatpush.bf16.msra.mxu0 0
        %670 = vmatpush.bf16.msra.mxu0 0
        %671 = vmatpush.bf16.msra.mxu0 0
        %672 = vmatpush.bf16.msra.mxu0 0
        %673 = vmatpush.bf16.msra.mxu0 0
        %674 = vmatpush.bf16.msra.mxu0 0
        %675 = vmatpush.bf16.msra.mxu0 0
        %676 = vmatpush.bf16.msra.mxu0 %v667
        %677 = vmatmul.bf16.gmra.mxu0 %v664
        %v678 = vpop.f32.mrf.mxu0
        %v679 = vadd.f32 0.0, %v678
        %v680 = vpop.f32.mrf.mxu0
        %681 = vdwg.mxu0
        %682 = vrot.lane.b32.xlu0 %v537, 112
        %v683 = vpop.permute.xlu0 %682
        %684 = vrot.lane.b32.xlu0 %v538, 112
        %v685 = vpop.permute.xlu0 %684
        %v687 = vsel %vm539, %v683, 0
        %v690 = vsel %vm539, %v685, 0
        %692 = vmatpush.bf16.xpose.msra.mxu0 0
        %693 = vmatpush.bf16.xpose.msra.mxu0 0
        %694 = vmatpush.bf16.xpose.msra.mxu0 0
        %695 = vmatpush.bf16.xpose.msra.mxu0 0
        %696 = vmatpush.bf16.xpose.msra.mxu0 0
        %697 = vmatpush.bf16.xpose.msra.mxu0 0
        %698 = vmatpush.bf16.xpose.msra.mxu0 0
        %699 = vmatpush.bf16.xpose.msra.mxu0 %v690
        %700 = vmatmul.bf16.gmra.mxu0 %v687
        %v701 = vpop.f32.mrf.mxu0
        %v702 = vadd.f32 0.0, %v701
        %v703 = vpop.f32.mrf.mxu0
        %704 = vdwg.mxu0
        %v705 = vsel %vm561, %v702, -1e+10
        %v706 = vsel %vm539, %v705, -inf
        %707 = vmax.xlane.f32.xlu0 %v706
        %v708 = vpop.xlane.xlu0 %707
        %v709 = vsub.f32 %v705, %v708
        %v710 = vmul.f32 %v709, 1.442695
        %v711 = vpow.pop %v710
        %v712 = vsel %vm539, %v711, 0.0
        %713 = vadd.xlane.f32.xlu0 %v712
        %v714 = vpop.xlane.xlu0 %713
        %v715 = vrcp.pop %v714
        %v716 = vmul.f32 %v714, %v715
        %v717 = vsub.f32 1.0, %v716
        %v718 = vmul.f32 %v715, %v717
        %v719 = vadd.f32 %v715, %v718
        %vm720 = vweird.f32 %v714
        %vm721 = vweird.f32 %v715
        %vm722 = vmor %vm720, %vm721
        %v723 = vsel %vm722, %v715, %v719
        %v724 = vand.u32 2147483647, %v714
        %vm725 = vcmp.eq.f32.partialorder %v724, 8.507059e+37
        %v726 = vand.u32 %v714, 2147483648
        %v727 = vor.u32 1.1754944e-38, %v726
        %v728 = vsel %vm725, %v727, %v723
        %v729 = vmul.f32 %v711, %v728
        %v730 = vpack.c.bf16 %v729, %v729
        %731 = vrot.lane.b32.xlu0 %v538, 80
        %v732 = vpop.permute.xlu0 %731
        %v734 = vsel %vm539, %v730, 0
        %v737 = vsel %vm594, %v732, 0
        %739 = vmatpush.bf16.msra.mxu0 0
        %740 = vmatpush.bf16.msra.mxu0 0
        %741 = vmatpush.bf16.msra.mxu0 0
        %742 = vmatpush.bf16.msra.mxu0 0
        %743 = vmatpush.bf16.msra.mxu0 0
        %744 = vmatpush.bf16.msra.mxu0 0
        %745 = vmatpush.bf16.msra.mxu0 0
        %746 = vmatpush.bf16.msra.mxu0 %v737
        %747 = vmatmul.bf16.gmra.mxu0 %v734
        %v748 = vpop.f32.mrf.mxu0
        %v749 = vadd.f32 0.0, %v748
        %v750 = vpop.f32.mrf.mxu0
        %751 = vdwg.mxu0
        %752 = vrot.lane.b32.xlu0 %v537, 104
        %v753 = vpop.permute.xlu0 %752
        %754 = vrot.lane.b32.xlu0 %v538, 104
        %v755 = vpop.permute.xlu0 %754
        %v757 = vsel %vm539, %v753, 0
        %v760 = vsel %vm539, %v755, 0
        %762 = vmatpush.bf16.xpose.msra.mxu0 0
        %763 = vmatpush.bf16.xpose.msra.mxu0 0
        %764 = vmatpush.bf16.xpose.msra.mxu0 0
        %765 = vmatpush.bf16.xpose.msra.mxu0 0
        %766 = vmatpush.bf16.xpose.msra.mxu0 0
        %767 = vmatpush.bf16.xpose.msra.mxu0 0
        %768 = vmatpush.bf16.xpose.msra.mxu0 0
        %769 = vmatpush.bf16.xpose.msra.mxu0 %v760
        %770 = vmatmul.bf16.gmra.mxu0 %v757
        %v771 = vpop.f32.mrf.mxu0
        %v772 = vadd.f32 0.0, %v771
        %v773 = vpop.f32.mrf.mxu0
        %774 = vdwg.mxu0
        %v775 = vsel %vm561, %v772, -1e+10
        %v776 = vsel %vm539, %v775, -inf
        %777 = vmax.xlane.f32.xlu0 %v776
        %v778 = vpop.xlane.xlu0 %777
        %v779 = vsub.f32 %v775, %v778
        %v780 = vmul.f32 %v779, 1.442695
        %v781 = vpow.pop %v780
        %v782 = vsel %vm539, %v781, 0.0
        %783 = vadd.xlane.f32.xlu0 %v782
        %v784 = vpop.xlane.xlu0 %783
        %v785 = vrcp.pop %v784
        %v786 = vmul.f32 %v784, %v785
        %v787 = vsub.f32 1.0, %v786
        %v788 = vmul.f32 %v785, %v787
        %v789 = vadd.f32 %v785, %v788
        %vm790 = vweird.f32 %v784
        %vm791 = vweird.f32 %v785
        %vm792 = vmor %vm790, %vm791
        %v793 = vsel %vm792, %v785, %v789
        %v794 = vand.u32 2147483647, %v784
        %vm795 = vcmp.eq.f32.partialorder %v794, 8.507059e+37
        %v796 = vand.u32 %v784, 2147483648
        %v797 = vor.u32 1.1754944e-38, %v796
        %v798 = vsel %vm795, %v797, %v793
        %v799 = vmul.f32 %v781, %v798
        %v800 = vpack.c.bf16 %v799, %v799
        %801 = vrot.lane.b32.xlu0 %v538, 72
        %v802 = vpop.permute.xlu0 %801
        %v804 = vsel %vm539, %v800, 0
        %v807 = vsel %vm594, %v802, 0
        %809 = vmatpush.bf16.msra.mxu0 0
        %810 = vmatpush.bf16.msra.mxu0 0
        %811 = vmatpush.bf16.msra.mxu0 0
        %812 = vmatpush.bf16.msra.mxu0 0
        %813 = vmatpush.bf16.msra.mxu0 0
        %814 = vmatpush.bf16.msra.mxu0 0
        %815 = vmatpush.bf16.msra.mxu0 0
        %816 = vmatpush.bf16.msra.mxu0 %v807
        %817 = vmatmul.bf16.gmra.mxu0 %v804
        %v818 = vpop.f32.mrf.mxu0
        %v819 = vadd.f32 0.0, %v818
        %v820 = vpop.f32.mrf.mxu0
        %821 = vdwg.mxu0
        %823 = vrot.lane.b32.xlu0 %v679, 8
        %v824 = vpop.permute.xlu0 %823
        %827 = vrot.lane.b32.xlu0 %v749, 16
        %v828 = vpop.permute.xlu0 %827
        %831 = vrot.lane.b32.xlu0 %v819, 24
        %v832 = vpop.permute.xlu0 %831
        %v834 = vsel %vm539, %v608, %v824
        %vm835 = vcmask 130048
        %v836 = vsel %vm835, %v834, %v828
        %vm837 = vcmask 195584
        %v838 = vsel %vm837, %v836, %v832
        %v839 = vpack.c.bf16 %v838, %v838
        %v841 = vperm.slane %v533, 0
        %v847 = vunpack.c.l.b16 %v529
        %v848 = vunpack.c.l.b16 %v530
        %v849 = vunpack.c.l.b16 %v531
        %v850 = vunpack.c.l.b16 %v532
        %v851 = vpack.c.b16 %v848, %v847
        %v852 = vpack.c.b16 %v850, %v849
        %v856 = vsel %vm474, %v839, 0
        %858 = vmatpush.bf16.msra.mxu0 0
        %859 = vmatpush.bf16.msra.mxu0 0
        %860 = vmatpush.bf16.msra.mxu0 0
        %861 = vmatpush.bf16.msra.mxu0 0
        %862 = vmatpush.bf16.msra.mxu0 0
        %863 = vmatpush.bf16.msra.mxu0 0
        %864 = vmatpush.bf16.msra.mxu0 %v852
        %865 = vmatpush.bf16.msra.mxu0 %v851
        %866 = vmatmul.bf16.gmra.mxu0 %v856
        %v867 = vpop.f32.mrf.mxu0
        %v868 = vadd.f32 %v841, %v867
        %v869 = vpop.f32.mrf.mxu0
        %870 = vdwg.mxu0
        %v871 = vadd.f32 %v534, %v868
        %v872 = vsel %vm474, %v871, 0.0
        %873 = vadd.xlane.f32.xlu0 %v872
        %v874 = vpop.xlane.xlu0 %873
        %v875 = vrcp.pop 32.0
        %v876 = vmul.f32 32.0, %v875
        %v877 = vsub.f32 1.0, %v876
        %v878 = vmul.f32 %v875, %v877
        %v879 = vadd.f32 %v875, %v878
        %vm880 = vweird.f32 %v875
        %v881 = vsel %vm880, %v875, %v879
        %v882 = vmul.f32 %v874, %v881
        %v883 = vsub.f32 %v871, %v882
        %v884 = vmul.f32 %v883, %v883
        %v885 = vsel %vm474, %v884, 0.0
        %886 = vadd.xlane.f32.xlu0 %v885
        %v887 = vpop.xlane.xlu0 %886
        %v888 = vmul.f32 %v887, %v881
        %v889 = vadd.f32 %v888, 1e-05
        %v890 = vrsqrt.pop %v889
        %v891 = vmul.f32 %v890, %v889
        %v892 = vmul.f32 %v891, %v890
        %v893 = vmul.f32 0.5, %v892
        %v894 = vsub.f32 1.5, %v893
        %v895 = vmul.f32 %v890, %v894
        %vm896 = vweird.f32 %v889
        %vm897 = vweird.f32 %v890
        %vm898 = vmor %vm896, %vm897
        %v899 = vsel %vm898, %v890, %v895
        %v900 = vmul.f32 %v883, %v899
        %v902 = vperm.slane %v535, 0
        %v904 = vmul.f32 %v900, %v902
        %v906 = vperm.slane %v536, 0
        %v908 = vadd.f32 %v904, %v906
        %v909 = vpack.c.bf16 %v908, %v908
        %vm910 = vcmask 257024
        %911 = vst.msk [vmem:[%s450] sm:$0xf] %vm910, %v909
        %912 = vst.msk [vmem:[%s435] sm:$0xff] %vm539, %v586
        %s913 = scalar_lea.vmem %s435, 8 [#allocation2]
        %914 = vst.msk [vmem:[%s913] sm:$0xff] %vm539, %v659
        %s915 = scalar_lea.vmem %s435, 16 [#allocation2]
        %916 = vst.msk [vmem:[%s915] sm:$0xff] %vm539, %v729
        %s917 = scalar_lea.vmem %s435, 24 [#allocation2]
        %918 = vst.msk [vmem:[%s917] sm:$0xff] %vm539, %v799
        %p919 = scmp.lt.s32.totalorder %s27, 1
        %s920 = scalar_select %p919, %s27, 1
        %s921 = smul.addr %s920, 4
        %s922 = scalar_lea.vmem %s11, %s921
        %s923 = sand.u32 %s307, 1
        %s924 = scalar_lea.sflag [#allocation3], %s923
        %s925 = sand.u32 %s307, 1
        %s926 = smul.addr %s925, 32
        %s927 = scalar_lea.vmem [#allocation2], %s926
        // Predicated region
        $region65: #{decoder_forward.11} parent=63 // pred_check
          %p928 = pneg %p291
        $region66: #{decoder_forward.11} parent=63 // pred_check_branch
          %930 = sbr.rel (%p928) target = $region68
        $region67: #{decoder_forward.11} parent=63 // pred_region
          _
        $region68: #{decoder_forward.11} parent=63 // pred_fallthru
          _
        // Predicated region
        $region69: #{decoder_forward.11} parent=63 // pred_check
          %p931 = pneg %p317
        $region70: #{decoder_forward.11} parent=63 // pred_check_branch
          %933 = sbr.rel (%p931) target = $region72
        $region71: #{decoder_forward.11} parent=63 // pred_region
          %935 = vsyncadd %s924, 0
          %s936 = smul.addr %s27, 4
          %s937 = smul.addr %s936, 8
          %s938 = scalar_lea.hbm %s12, %s937
          %s939 = sshll.u32 %s927, 4
          %s940 = int_to_ptr.vmem [resolvable:$true] %s939
          %s941 = sshll.u32 %s938, 4
          %s942 = int_to_ptr.hbm [resolvable:$true] %s941
          %947 = dma.vmem_to_hbm [thread:$0]  %s940, 512, %s942, %s924, 128, 128, 8
        $region72: #{decoder_forward.11} parent=63 // pred_fallthru
          _
      $region64: #{decoder_forward.11} parent=5 // pred_fallthru
        _
      %p948 = scmp.le.s32.totalorder 2, %s22
      // Predicated region
      $region73: #{decoder_forward.11} parent=5 // pred_check
        %p949 = pneg %p948
      $region74: #{decoder_forward.11} parent=5 // pred_check_branch
        %951 = sbr.rel (%p949) target = $region76
      $region75: #{decoder_forward.11} parent=5 // pred_region
        %s952 = ssub.s32 %s22, 2
        // Predicated region
        $region77: #{decoder_forward.11} parent=75 // pred_check
          %p953 = pneg %p297
        $region78: #{decoder_forward.11} parent=75 // pred_check_branch
          %955 = sbr.rel (%p953) target = $region80
        $region79: #{decoder_forward.11} parent=75 // pred_region
          %p956 = scmp.lt.s32.totalorder %s28, 1
          %s957 = scalar_select %p956, %s28, 1
          %s958 = smul.addr %s957, 4
          %s959 = scalar_lea.vmem %s11, %s958
        $region80: #{decoder_forward.11} parent=75 // pred_fallthru
          _
        // Predicated region
        $region81: #{decoder_forward.11} parent=75 // pred_check
          %p960 = pneg %p323
        $region82: #{decoder_forward.11} parent=75 // pred_check_branch
          %962 = sbr.rel (%p960) target = $region84
        $region83: #{decoder_forward.11} parent=75 // pred_region
          %s963 = sand.u32 %s308, 1
          %s964 = scalar_lea.sflag [#allocation3], %s963
          %s965 = sand.u32 %s308, 1
          %s966 = smul.addr %s965, 32
          %s967 = scalar_lea.vmem [#allocation2], %s966
          %969 = dma.done %s964, 512
        $region84: #{decoder_forward.11} parent=75 // pred_fallthru
          _
      $region76: #{decoder_forward.11} parent=5 // pred_fallthru
        _
    $region6: #{decoder_forward.11} parent=1 // loop_footer
      %s26 = sadd.s32 1, %s22
    $region7: #{decoder_forward.11} parent=1 // loop_footer_branch
      %21 = sbr.rel target = $region3
    $region8: #{decoder_forward.11} parent=1 // loop_exit
      _
    %970 = vsyncpa [#allocation3], 1
    %s971 = scalar_lea.sflag [#allocation3], 1
    %972 = vsyncpa %s971, 1

// kernel: decoder_forward.13
$region0: #{decoder_forward.13}
  #allocation0 [shape = 'u32[]', space=smem, size = 0x4, offset = 0x4, fixed_abs, tag = 'smem constant byte address 0x4 - core index']
  #allocation1 [shape = 'u32[72,128]{1,0:T(1,128)}', space=vmem, size = 0x9000, scoped, tag = 'internal scratch']
  %s0 = inlined_call_operand.vmem [shape: bf16[16,32], index: 0, kind: input, shape index: {}]
  %s1 = inlined_call_operand.vmem [shape: bf16[32,50], index: 1, kind: input, shape index: {}]
  %s2 = inlined_call_operand.vmem [shape: f32[1,50], index: 2, kind: input, shape index: {}]
  %s3 = inlined_call_operand.hbm [shape: f32[16,50], index: 3, kind: output, shape index: {}]
  %s4 = sld [smem:[#allocation0]]
  $region22: #{decoder_forward.13} parent=0
    _
  %s6 = ssub.s32 1, %s4
  %s7 = scalar_select 0, %s6, %s4
  $region1: #{decoder_forward.13} parent=0
    #allocation2 [shape = 'u8[8192]{0}', space=vmem, size = 0x2000, scoped, tag = 'output window, operand 0, single buffered']
    #allocation3 [shape = 's32[1]{0}', space=sflag, size = 0x4, scoped, tag = 'scoped memory for decoder_forward.13']
    %8 = vsyncpa [#allocation3], 0
    // Predicated region
    $region2: #{decoder_forward.13} parent=1 // pred_check
      _
    $region3: #{decoder_forward.13} parent=1 // pred_check_branch
      %10 = sbr.rel (0) target = $region5
    $region4: #{decoder_forward.13} parent=1 // pred_region
      _
    $region5: #{decoder_forward.13} parent=1 // pred_fallthru
      _
    // Predicated region
    $region6: #{decoder_forward.13} parent=1 // pred_check
      _
    $region7: #{decoder_forward.13} parent=1 // pred_check_branch
      %12 = sbr.rel (0) target = $region9
    $region8: #{decoder_forward.13} parent=1 // pred_region
      _
    $region9: #{decoder_forward.13} parent=1 // pred_fallthru
      _
    // Predicated region
    $region10: #{decoder_forward.13} parent=1 // pred_check
      _
    $region11: #{decoder_forward.13} parent=1 // pred_check_branch
      %14 = sbr.rel (0) target = $region13
    $region12: #{decoder_forward.13} parent=1 // pred_region
      _
    $region13: #{decoder_forward.13} parent=1 // pred_fallthru
      _
    %v16 = vld [vmem:[%s0] sm:$0xf]
    %v17 = vld [vmem:[%s0 + $0x4] sm:$0xf]
    %v18 = vld [vmem:[%s1] sm:$0xf]
    %v19 = vld [vmem:[%s1 + $0x4] sm:$0xf]
    %v20 = vld [vmem:[%s1 + $0x8] sm:$0xf]
    %v21 = vld [vmem:[%s1 + $0xc] sm:$0xf]
    %v22 = vld [vmem:[%s2] sm:$0x1]
    %v24 = vperm.slane %v22, 0
    %v28 = vunpack.c.l.b16 %v16
    %v29 = vunpack.c.l.b16 %v17
    %v30 = vpack.c.b16 %v29, %v28
    %v35 = vunpack.c.l.b16 %v18
    %v36 = vunpack.c.l.b16 %v19
    %v37 = vunpack.c.l.b16 %v20
    %v38 = vunpack.c.l.b16 %v21
    %v39 = vpack.c.b16 %v36, %v35
    %v40 = vpack.c.b16 %v38, %v37
    %vm43 = vcmask 261120
    %v45 = vsel %vm43, %v30, 0
    %47 = vmatpush.bf16.msra.mxu0 0
    %48 = vmatpush.bf16.msra.mxu0 0
    %49 = vmatpush.bf16.msra.mxu0 0
    %50 = vmatpush.bf16.msra.mxu0 0
    %51 = vmatpush.bf16.msra.mxu0 0
    %52 = vmatpush.bf16.msra.mxu0 0
    %53 = vmatpush.bf16.msra.mxu0 %v40
    %54 = vmatpush.bf16.msra.mxu0 %v39
    %55 = vmatmul.bf16.gmra.mxu0 %v45
    %v56 = vpop.f32.mrf.mxu0
    %v57 = vadd.f32 %v24, %v56
    %v58 = vpop.f32.mrf.mxu0
    %v59 = vadd.f32 %v24, %v58
    %60 = vdwg.mxu0
    %vm61 = vcmask 408576
    %62 = vst.msk [vmem:[#allocation2] sm:$0xff] %vm61, %v57
    %63 = vst.msk [vmem:[#allocation2 + $0x8] sm:$0xff] %vm61, %v59
    // Predicated region
    $region14: #{decoder_forward.13} parent=1 // pred_check
      _
    $region15: #{decoder_forward.13} parent=1 // pred_check_branch
      %65 = sbr.rel (0) target = $region17
    $region16: #{decoder_forward.13} parent=1 // pred_region
      %67 = vsyncadd [#allocation3], 0
      %s68 = sshll.u32 [#allocation2], 4
      %s69 = int_to_ptr.vmem [resolvable:$true] %s68
      %s70 = sshll.u32 %s3, 4
      %s71 = int_to_ptr.hbm [resolvable:$true] %s70
      %76 = dma.vmem_to_hbm [thread:$0]  %s69, 256, %s71, [#allocation3], 128, 128, 8
    $region17: #{decoder_forward.13} parent=1 // pred_fallthru
      _
    // Predicated region
    $region18: #{decoder_forward.13} parent=1 // pred_check
      _
    $region19: #{decoder_forward.13} parent=1 // pred_check_branch
      %78 = sbr.rel (0) target = $region21
    $region20: #{decoder_forward.13} parent=1 // pred_region
      %80 = dma.done [#allocation3], 256
    $region21: #{decoder_forward.13} parent=1 // pred_fallthru
      _
    %81 = vsyncpa [#allocation3], 1

</llo_original>
